<compile_context>
chip_gen: v7x
topology: tpu7x:2x2x1
jax: 0.10.0
libtpu: 0.0.40
codegen_flags: <defaults>
</compile_context>

<pallas_src>
import functools

import jax
import jax.numpy as jnp
from jax.experimental import pallas as pl
from jax.experimental.pallas import tpu as pltpu

H1 = 128    # lstm1 hidden size (already a full 128-lane tile)
H2 = 64     # lstm2 logical hidden size
H2P = 128   # lstm2 hidden size padded to a full 128-lane tile (zero-padded weights)


# -----------------------------------------------------------------------------
# Dropout scale (0.0 / 2.0) from a counter-based int32 hash (murmur-style mix).
# Pure jnp/lax integer ops -> lowers on Mosaic and in interpret mode alike.
# Row index encodes (t, batch_row) in time-major order, so one call covers all T.
# -----------------------------------------------------------------------------
def _dropout_scale(seed, shape):
    seed = jnp.asarray(seed, dtype=jnp.int32)
    rows = jax.lax.broadcasted_iota(jnp.int32, shape, 0)
    cols = jax.lax.broadcasted_iota(jnp.int32, shape, 1)
    x = rows * jnp.int32(-1640531535)          # 0x9E3779B1
    x = x ^ (cols * jnp.int32(-2048144789))    # 0x85EBCA6B
    x = x ^ (seed * jnp.int32(668265263))      # 0x27D4EB2F
    x = x ^ jax.lax.shift_right_logical(x, 16)
    x = x * jnp.int32(2146121005)              # 0x7FEB352D
    x = x ^ jax.lax.shift_right_logical(x, 15)
    x = x * jnp.int32(-2073254261)             # 0x846CA68B
    x = x ^ jax.lax.shift_right_logical(x, 16)
    # sign bit uniform -> P(keep)=0.5; keep -> 1/(1-p) = 2.0, drop -> 0.0
    return jnp.where(x >= 0, jnp.float32(2.0), jnp.float32(0.0))


def _lstm_cell(gates, c_prev, h):
    """Gate columns ordered [i | f | o | g] (reordered at init from PyTorch's
    [i,f,g,o]).  The three sigmoids collapse into ONE contiguous (B, 3h) tanh
    via sigmoid(x) = 0.5*tanh(0.5*x) + 0.5 (single EUP slot friendly)."""
    sig = 0.5 * jnp.tanh(0.5 * gates[:, : 3 * h]) + 0.5
    i_g = sig[:, 0 * h:1 * h]
    f_g = sig[:, 1 * h:2 * h]
    o_g = sig[:, 2 * h:3 * h]
    g_g = jnp.tanh(gates[:, 3 * h:4 * h])
    c_new = f_g * c_prev + i_g * g_g
    h_new = o_g * jnp.tanh(c_new)
    return h_new, c_new


# -----------------------------------------------------------------------------
# Fused kernel: hoisted layer-1 input projection + hoisted dropout scales ->
# fully unrolled time loop (lstm1 step, dropout, lstm2 step) -> dense head.
# Single grid step; state lives in loop carries (4 vregs); weights stay in VMEM.
# -----------------------------------------------------------------------------
def _fused_lstm_kernel(
    seed_ref, x_ref,
    wih1_ref, whh1_ref, b1_ref,
    w2_ref, b2_ref,
    wd_ref, bd_ref,
    out_ref,
    gx_scr, scale_scr,
    *, seq_len, batch, n_feat,
):
    bf16 = jnp.bfloat16
    seed = seed_ref[0]

    # ---- prologue 1: layer-1 input projection for all (t, b) rows, one store --
    # n_feat is tiny (1 here): broadcast multiply on the VPU, no K=1 MXU op.
    acc = x_ref[:, 0:1] * wih1_ref[0:1, :]
    for f in range(1, n_feat):                                 # static unroll
        acc = acc + x_ref[:, f:f + 1] * wih1_ref[f:f + 1, :]
    gx_scr[...] = acc + b1_ref[...]

    # ---- prologue 2: dropout scales for ALL timesteps, off the critical path --
    scale_scr[...] = _dropout_scale(seed, (seq_len * batch, H1))

    def step(t, carry):
        h1, c1, h2, c2 = carry
        start = pl.multiple_of(t * batch, batch)

        # ----- layer 1 recurrence: only h_{t-1} @ W_hh1 left inside the loop --
        gates1 = gx_scr[pl.ds(start, batch), :] + jnp.dot(
            h1.astype(bf16), whh1_ref[...], preferred_element_type=jnp.float32)
        h1, c1 = _lstm_cell(gates1, c1, H1)

        # ----- F.dropout(p=0.5, training=True): one vld + one vmul ------------
        h1_d = h1 * scale_scr[pl.ds(start, batch), :]

        # ----- layer 2 recurrence: single K=256 dot against fused [Wih2;Whh2] -
        cat = jnp.concatenate([h1_d.astype(bf16), h2.astype(bf16)], axis=-1)
        gates2 = jnp.dot(cat, w2_ref[...],
                         preferred_element_type=jnp.float32) + b2_ref[...]
        h2, c2 = _lstm_cell(gates2, c2, H2P)
        return h1, c1, h2, c2

    zeros1 = jnp.zeros((batch, H1), jnp.float32)
    zeros2 = jnp.zeros((batch, H2P), jnp.float32)
    _, _, h2_fin, _ = jax.lax.fori_loop(
        0, seq_len, step, (zeros1, zeros1, zeros2, zeros2), unroll=True)

    # ---- dense head on the final layer-2 hidden state (padded lanes are 0) ---
    out_ref[...] = (
        jnp.dot(h2_fin.astype(bf16), wd_ref[...],
                preferred_element_type=jnp.float32)
        + bd_ref[...]
    )


def lstm_forward_fused(x_btf, params, seed):
    (wih1, whh1, b1), (w2, b2), (wd, bd) = params
    B, T, F = x_btf.shape
    out_dim = wd.shape[1]

    # Time-major flatten of the raw input (only B*T*F floats, F == 1) so the
    # hoisted input projection yields contiguous per-step (B, 4*H1) rows.
    x_tb = jnp.transpose(x_btf, (1, 0, 2)).reshape(T * B, F)
    seed_arr = jnp.asarray(seed, dtype=jnp.int32).reshape(1)

    kernel = functools.partial(_fused_lstm_kernel, seq_len=T, batch=B, n_feat=F)
    vmem = pl.BlockSpec(memory_space=pltpu.MemorySpace.VMEM)

    # Scratch footprint is the only term that scales with the problem size; only
    # raise the scoped VMEM limit if it actually needs it (keeps v7x happy).
    scratch_bytes = 4 * T * B * (4 * H1 + H1)
    vmem_limit = None
    if scratch_bytes > 24 * 1024 * 1024:
        # TODO(synk): for very large T*B, chunk the hoisted projection instead.
        vmem_limit = min(2 * scratch_bytes + (8 << 20), 128 * 1024 * 1024)

    flops = int(2 * T * B * (H1 * 4 * H1 + (H1 + H2P) * 4 * H2P)
                + 2 * B * H2P * out_dim)
    transcendentals = int(T * B * (5 * H1 + 5 * H2P))
    bytes_accessed = int(4 * (x_tb.size + b1.size + b2.size + bd.size
                              + B * out_dim + wih1.size)
                         + 2 * (whh1.size + w2.size + wd.size))

    return pl.pallas_call(
        kernel,
        out_shape=jax.ShapeDtypeStruct((B, out_dim), jnp.float32),
        in_specs=[
            pl.BlockSpec(memory_space=pltpu.MemorySpace.SMEM),   # dropout seed
            vmem,                                                # x (T*B, F)
            vmem, vmem, vmem,                                    # wih1(f32), whh1(bf16), b1
            vmem, vmem,                                          # W2 (bf16, fused), b2
            vmem, vmem,                                          # wd (bf16, padded rows), bd
        ],
        out_specs=pl.BlockSpec(memory_space=pltpu.MemorySpace.VMEM),
        scratch_shapes=[
            pltpu.VMEM((T * B, 4 * H1), jnp.float32),            # hoisted gates_x
            pltpu.VMEM((T * B, H1), jnp.float32),                # hoisted dropout scale
        ],
        compiler_params=pltpu.CompilerParams(vmem_limit_bytes=vmem_limit),
        cost_estimate=pl.CostEstimate(
            flops=flops, transcendentals=transcendentals,
            bytes_accessed=bytes_accessed),
    )(seed_arr, x_tb, wih1, whh1, b1, w2, b2, wd, bd)


@jax.jit
def lstm_model_forward(x_btf, params, dropout_seed):
    """x_btf: (B, T, n_features) f32 -> (B, output_length) f32. Seed is runtime."""
    return lstm_forward_fused(x_btf, params, dropout_seed)


# -----------------------------------------------------------------------------
# Parameter init (PyTorch-style U(-1/sqrt(H), 1/sqrt(H))), in kernel layout:
#   * transposed (W^T), combined bias row
#   * gate blocks reordered [i,f,g,o] -> [i,f,o,g]
#   * layer-2 / dense weights zero-padded to H2P lanes
#   * layer-2 input & recurrent weights fused into one (H1+H2P, 4*H2P) matrix
#   * matmul weights stored in bf16 (biases / tiny wih1 stay f32)
# -----------------------------------------------------------------------------
def _reorder_ifgo_to_ifog(w, h):
    return jnp.concatenate(
        [w[..., 0:2 * h], w[..., 3 * h:4 * h], w[..., 2 * h:3 * h]], axis=-1)


def _pad_gate_cols(w, h, hp):
    """Pad last axis from 4*h to 4*hp, zero-filling the tail of each gate block."""
    lead = w.shape[:-1]
    w4 = w.reshape(lead + (4, h))
    pad = [(0, 0)] * len(lead) + [(0, 0), (0, hp - h)]
    return jnp.pad(w4, pad).reshape(lead + (4 * hp,))


def init_lstm1_params(key, input_size):
    k = 1.0 / jnp.sqrt(jnp.float32(H1))
    k1, k2, k3, k4 = jax.random.split(key, 4)
    w_ih = jax.random.uniform(k1, (4 * H1, input_size), jnp.float32, -k, k)
    w_hh = jax.random.uniform(k2, (4 * H1, H1), jnp.float32, -k, k)
    b_ih = jax.random.uniform(k3, (4 * H1,), jnp.float32, -k, k)
    b_hh = jax.random.uniform(k4, (4 * H1,), jnp.float32, -k, k)
    wih_t = _reorder_ifgo_to_ifog(w_ih.T, H1)                  # (F, 4*H1) f32
    whh_t = _reorder_ifgo_to_ifog(w_hh.T, H1)                  # (H1, 4*H1)
    bias = _reorder_ifgo_to_ifog((b_ih + b_hh)[None, :], H1)   # (1, 4*H1)
    return wih_t, whh_t.astype(jnp.bfloat16), bias


def init_lstm2_params(key):
    k = 1.0 / jnp.sqrt(jnp.float32(H2))
    k1, k2, k3, k4 = jax.random.split(key, 4)
    w_ih = jax.random.uniform(k1, (4 * H2, H1), jnp.float32, -k, k)
    w_hh = jax.random.uniform(k2, (4 * H2, H2), jnp.float32, -k, k)
    b_ih = jax.random.uniform(k3, (4 * H2,), jnp.float32, -k, k)
    b_hh = jax.random.uniform(k4, (4 * H2,), jnp.float32, -k, k)
    wih_t = _pad_gate_cols(_reorder_ifgo_to_ifog(w_ih.T, H2), H2, H2P)   # (H1, 4*H2P)
    whh_t = _pad_gate_cols(_reorder_ifgo_to_ifog(w_hh.T, H2), H2, H2P)   # (H2, 4*H2P)
    whh_t = jnp.pad(whh_t, ((0, H2P - H2), (0, 0)))                      # (H2P, 4*H2P)
    bias = _pad_gate_cols(_reorder_ifgo_to_ifog((b_ih + b_hh)[None, :], H2), H2, H2P)
    w2 = jnp.concatenate([wih_t, whh_t], axis=0)                         # (H1+H2P, 4*H2P)
    return w2.astype(jnp.bfloat16), bias


def init_dense_params(key, out_features):
    k = 1.0 / jnp.sqrt(jnp.float32(H2))
    k1, k2 = jax.random.split(key)
    w = jax.random.uniform(k1, (out_features, H2), jnp.float32, -k, k)
    b = jax.random.uniform(k2, (out_features,), jnp.float32, -k, k)
    w_t = jnp.pad(w.T, ((0, H2P - H2), (0, 0)))            # (H2P, out)
    return w_t.astype(jnp.bfloat16), b[None, :]


# -----------------------------------------------------------------------------
# Pure-JAX reference (same layout, same gate math, same bf16 casts, same hash
# mask) for a tight numerical sanity check of the kernel.
# -----------------------------------------------------------------------------
def reference_forward(x_btf, params, seed):
    (wih1, whh1, b1), (w2, b2), (wd, bd) = params
    B, T, F = x_btf.shape
    bf16 = jnp.bfloat16
    scale_all = _dropout_scale(seed, (T * B, H1))
    h1 = jnp.zeros((B, H1), jnp.float32)
    c1 = jnp.zeros((B, H1), jnp.float32)
    h2 = jnp.zeros((B, H2P), jnp.float32)
    c2 = jnp.zeros((B, H2P), jnp.float32)
    for t in range(T):
        x_t = x_btf[:, t, :]
        g1x = b1
        for f in range(F):
            g1x = g1x + x_t[:, f:f + 1] * wih1[f:f + 1, :]
        g1 = g1x + jnp.dot(h1.astype(bf16), whh1,
                           preferred_element_type=jnp.float32)
        h1, c1 = _lstm_cell(g1, c1, H1)
        h1_d = h1 * scale_all[t * B:(t + 1) * B]
        cat = jnp.concatenate([h1_d.astype(bf16), h2.astype(bf16)], axis=-1)
        g2 = jnp.dot(cat, w2, preferred_element_type=jnp.float32) + b2
        h2, c2 = _lstm_cell(g2, c2, H2P)
    return jnp.dot(h2.astype(bf16), wd, preferred_element_type=jnp.float32) + bd


if __name__ == "__main__":
    # Small shapes consistent with the module: n_features=1, output_length=1.
    B, T, F = 8, 8, 1
    OUT = 1

    root = jax.random.PRNGKey(0)
    k_x, k_l1, k_l2, k_d = jax.random.split(root, 4)

    x = jax.random.normal(k_x, (B, T, F), dtype=jnp.float32)
    params = (
        init_lstm1_params(k_l1, F),
        init_lstm2_params(k_l2),
        init_dense_params(k_d, OUT),
    )

    out = lstm_model_forward(x, params, 0)
    out = jax.block_until_ready(out)

    assert out.shape == (B, OUT) and out.dtype == jnp.float32
    assert bool(jnp.all(jnp.isfinite(out)))

    ref = reference_forward(x, params, 0)
    assert bool(jnp.allclose(out, ref, rtol=5e-3, atol=5e-3)), float(
        jnp.max(jnp.abs(out - ref)))

    print("KERNEL_OK")
</pallas_src>

<mosaic_0001>
module attributes {stable_mosaic.version = 11 : i64} {
  func.func @_fused_lstm_kernel(%arg0: memref<1xi32, #tpu.memory_space<smem>>, %arg1: memref<64x1xf32, #tpu.memory_space<vmem>>, %arg2: memref<1x512xf32, #tpu.memory_space<vmem>>, %arg3: memref<128x512xbf16, #tpu.memory_space<vmem>>, %arg4: memref<1x512xf32, #tpu.memory_space<vmem>>, %arg5: memref<256x512xbf16, #tpu.memory_space<vmem>>, %arg6: memref<1x512xf32, #tpu.memory_space<vmem>>, %arg7: memref<128x1xbf16, #tpu.memory_space<vmem>>, %arg8: memref<1x1xf32, #tpu.memory_space<vmem>>, %arg9: memref<8x1xf32, #tpu.memory_space<vmem>>, %arg10: memref<64x512xf32, #tpu.memory_space<vmem>>, %arg11: memref<64x128xf32, #tpu.memory_space<vmem>>) attributes {dimension_semantics = [], scalar_prefetch = 0 : i64, scratch_operands = 2 : i64, tpu.core_type = #tpu.core_type<tc>} {
    %c0 = arith.constant 0 : index
    %0 = memref.load %arg0[%c0] : memref<1xi32, #tpu.memory_space<smem>>
    %c0_0 = arith.constant 0 : index
    %c0_1 = arith.constant 0 : index
    %1 = vector.load %arg1[%c0_0, %c0_1] : memref<64x1xf32, #tpu.memory_space<vmem>>, vector<64x1xf32>
    %c0_2 = arith.constant 0 : index
    %c0_3 = arith.constant 0 : index
    %2 = vector.load %arg2[%c0_2, %c0_3] : memref<1x512xf32, #tpu.memory_space<vmem>>, vector<1x512xf32>
    %3 = vector.broadcast %1 : vector<64x1xf32> to vector<64x512xf32>
    %4 = vector.broadcast %2 : vector<1x512xf32> to vector<64x512xf32>
    %5 = arith.mulf %3, %4 : vector<64x512xf32>
    %c0_4 = arith.constant 0 : index
    %c0_5 = arith.constant 0 : index
    %6 = vector.load %arg4[%c0_4, %c0_5] : memref<1x512xf32, #tpu.memory_space<vmem>>, vector<1x512xf32>
    %7 = vector.broadcast %6 : vector<1x512xf32> to vector<64x512xf32>
    %8 = arith.addf %5, %7 : vector<64x512xf32>
    %c0_6 = arith.constant 0 : index
    %c0_7 = arith.constant 0 : index
    %9 = vector.load %arg10[%c0_6, %c0_7] : memref<64x512xf32, #tpu.memory_space<vmem>>, vector<64x512xf32>
    tpu.vector_store %arg10[%c0_6, %c0_7], %8 {strides = array<i32>} : memref<64x512xf32, #tpu.memory_space<vmem>>, vector<64x512xf32>,
    %10 = tpu.iota {dimensions = array<i32: 0>} : vector<64x128xi32>
    %11 = tpu.iota {dimensions = array<i32: 1>} : vector<64x128xi32>
    %c-1640531535_i32 = arith.constant -1640531535 : i32
    %12 = vector.broadcast %c-1640531535_i32 : i32 to vector<64x128xi32>
    %13 = arith.muli %10, %12 : vector<64x128xi32>
    %c-2048144789_i32 = arith.constant -2048144789 : i32
    %14 = vector.broadcast %c-2048144789_i32 : i32 to vector<64x128xi32>
    %15 = arith.muli %11, %14 : vector<64x128xi32>
    %16 = arith.xori %13, %15 : vector<64x128xi32>
    %c668265263_i32 = arith.constant 668265263 : i32
    %17 = arith.muli %0, %c668265263_i32 : i32
    %18 = vector.broadcast %17 : i32 to vector<64x128xi32>
    %19 = arith.xori %16, %18 : vector<64x128xi32>
    %c16_i32 = arith.constant 16 : i32
    %20 = vector.broadcast %c16_i32 : i32 to vector<64x128xi32>
    %21 = arith.shrui %19, %20 : vector<64x128xi32>
    %22 = arith.xori %19, %21 : vector<64x128xi32>
    %c2146121005_i32 = arith.constant 2146121005 : i32
    %23 = vector.broadcast %c2146121005_i32 : i32 to vector<64x128xi32>
    %24 = arith.muli %22, %23 : vector<64x128xi32>
    %c15_i32 = arith.constant 15 : i32
    %25 = vector.broadcast %c15_i32 : i32 to vector<64x128xi32>
    %26 = arith.shrui %24, %25 : vector<64x128xi32>
    %27 = arith.xori %24, %26 : vector<64x128xi32>
    %c-2073254261_i32 = arith.constant -2073254261 : i32
    %28 = vector.broadcast %c-2073254261_i32 : i32 to vector<64x128xi32>
    %29 = arith.muli %27, %28 : vector<64x128xi32>
    %c16_i32_8 = arith.constant 16 : i32
    %30 = vector.broadcast %c16_i32_8 : i32 to vector<64x128xi32>
    %31 = arith.shrui %29, %30 : vector<64x128xi32>
    %32 = arith.xori %29, %31 : vector<64x128xi32>
    %c0_i32 = arith.constant 0 : i32
    %33 = vector.broadcast %c0_i32 : i32 to vector<64x128xi32>
    %34 = arith.cmpi sge, %32, %33 : vector<64x128xi32>
    %cst = arith.constant 2.000000e+00 : f32
    %cst_9 = arith.constant 0.000000e+00 : f32
    %35 = vector.broadcast %cst : f32 to vector<64x128xf32>
    %36 = vector.broadcast %cst_9 : f32 to vector<64x128xf32>
    %37 = arith.select %34, %35, %36 : vector<64x128xi1>, vector<64x128xf32>
    %c0_10 = arith.constant 0 : index
    %c0_11 = arith.constant 0 : index
    %38 = vector.load %arg11[%c0_10, %c0_11] : memref<64x128xf32, #tpu.memory_space<vmem>>, vector<64x128xf32>
    tpu.vector_store %arg11[%c0_10, %c0_11], %37 {strides = array<i32>} : memref<64x128xf32, #tpu.memory_space<vmem>>, vector<64x128xf32>,
    %cst_12 = arith.constant 0.000000e+00 : f32
    %39 = vector.broadcast %cst_12 : f32 to vector<8x128xf32>
    %cst_13 = arith.constant 0.000000e+00 : f32
    %40 = vector.broadcast %cst_13 : f32 to vector<8x128xf32>
    %c0_i32_14 = arith.constant 0 : i32
    %c8_i32 = arith.constant 8 : i32
    %41 = arith.muli %c0_i32_14, %c8_i32 : i32
    %42 = tpu.assume_multiple %41, 8 : i32
    %43 = arith.index_cast %42 : i32 to index
    %c0_15 = arith.constant 0 : index
    %44 = vector.load %arg10[%43, %c0_15] : memref<64x512xf32, #tpu.memory_space<vmem>>, vector<8x512xf32>
    %45 = arith.truncf %39 : vector<8x128xf32> to vector<8x128xbf16>
    %c0_16 = arith.constant 0 : index
    %c0_17 = arith.constant 0 : index
    %46 = vector.load %arg3[%c0_16, %c0_17] : memref<128x512xbf16, #tpu.memory_space<vmem>>, vector<128x512xbf16>
    %cst_18 = arith.constant dense<0.000000e+00> : vector<8x512xf32>
    %47 = tpu.matmul %45, %46, %cst_18 {dimension_numbers = #tpu.dot_dimension_numbers<[1], [0], [0], [1], [0, 0, 1, 1], [], []>} : vector<8x128xbf16>, vector<128x512xbf16>, vector<8x512xf32> -> vector<8x512xf32>
    %48 = arith.addf %44, %47 : vector<8x512xf32>
    %49 = vector.extract_strided_slice %48 {offsets = [0, 0], sizes = [8, 384], strides = [1, 1]} : vector<8x512xf32> to vector<8x384xf32>
    %cst_19 = arith.constant 5.000000e-01 : f32
    %50 = vector.broadcast %cst_19 : f32 to vector<8x384xf32>
    %51 = arith.mulf %50, %49 : vector<8x384xf32>
    %52 = math.tanh %51 : vector<8x384xf32>
    %cst_20 = arith.constant 5.000000e-01 : f32
    %53 = vector.broadcast %cst_20 : f32 to vector<8x384xf32>
    %54 = arith.mulf %53, %52 : vector<8x384xf32>
    %cst_21 = arith.constant 5.000000e-01 : f32
    %55 = vector.broadcast %cst_21 : f32 to vector<8x384xf32>
    %56 = arith.addf %54, %55 : vector<8x384xf32>
    %57 = vector.extract_strided_slice %56 {offsets = [0, 0], sizes = [8, 128], strides = [1, 1]} : vector<8x384xf32> to vector<8x128xf32>
    %58 = vector.extract_strided_slice %56 {offsets = [0, 128], sizes = [8, 128], strides = [1, 1]} : vector<8x384xf32> to vector<8x128xf32>
    %59 = vector.extract_strided_slice %56 {offsets = [0, 256], sizes = [8, 128], strides = [1, 1]} : vector<8x384xf32> to vector<8x128xf32>
    %60 = vector.extract_strided_slice %48 {offsets = [0, 384], sizes = [8, 128], strides = [1, 1]} : vector<8x512xf32> to vector<8x128xf32>
    %61 = math.tanh %60 : vector<8x128xf32>
    %62 = arith.mulf %58, %39 : vector<8x128xf32>
    %63 = arith.mulf %57, %61 : vector<8x128xf32>
    %64 = arith.addf %62, %63 : vector<8x128xf32>
    %65 = math.tanh %64 : vector<8x128xf32>
    %66 = arith.mulf %59, %65 : vector<8x128xf32>
    %67 = arith.index_cast %42 : i32 to index
    %c0_22 = arith.constant 0 : index
    %68 = vector.load %arg11[%67, %c0_22] : memref<64x128xf32, #tpu.memory_space<vmem>>, vector<8x128xf32>
    %69 = arith.mulf %66, %68 : vector<8x128xf32>
    %70 = arith.truncf %69 : vector<8x128xf32> to vector<8x128xbf16>
    %71 = arith.truncf %40 : vector<8x128xf32> to vector<8x128xbf16>
    %72 = tpu.concatenate %70, %71 in 1 : vector<8x128xbf16>, vector<8x128xbf16> -> vector<8x256xbf16>
    %c0_23 = arith.constant 0 : index
    %c0_24 = arith.constant 0 : index
    %73 = vector.load %arg5[%c0_23, %c0_24] : memref<256x512xbf16, #tpu.memory_space<vmem>>, vector<256x512xbf16>
    %cst_25 = arith.constant dense<0.000000e+00> : vector<8x512xf32>
    %74 = tpu.matmul %72, %73, %cst_25 {dimension_numbers = #tpu.dot_dimension_numbers<[1], [0], [0], [1], [0, 0, 1, 1], [], []>} : vector<8x256xbf16>, vector<256x512xbf16>, vector<8x512xf32> -> vector<8x512xf32>
    %c0_26 = arith.constant 0 : index
    %c0_27 = arith.constant 0 : index
    %75 = vector.load %arg6[%c0_26, %c0_27] : memref<1x512xf32, #tpu.memory_space<vmem>>, vector<1x512xf32>
    %76 = vector.broadcast %75 : vector<1x512xf32> to vector<8x512xf32>
    %77 = arith.addf %74, %76 : vector<8x512xf32>
    %78 = vector.extract_strided_slice %77 {offsets = [0, 0], sizes = [8, 384], strides = [1, 1]} : vector<8x512xf32> to vector<8x384xf32>
    %cst_28 = arith.constant 5.000000e-01 : f32
    %79 = vector.broadcast %cst_28 : f32 to vector<8x384xf32>
    %80 = arith.mulf %79, %78 : vector<8x384xf32>
    %81 = math.tanh %80 : vector<8x384xf32>
    %cst_29 = arith.constant 5.000000e-01 : f32
    %82 = vector.broadcast %cst_29 : f32 to vector<8x384xf32>
    %83 = arith.mulf %82, %81 : vector<8x384xf32>
    %cst_30 = arith.constant 5.000000e-01 : f32
    %84 = vector.broadcast %cst_30 : f32 to vector<8x384xf32>
    %85 = arith.addf %83, %84 : vector<8x384xf32>
    %86 = vector.extract_strided_slice %85 {offsets = [0, 0], sizes = [8, 128], strides = [1, 1]} : vector<8x384xf32> to vector<8x128xf32>
    %87 = vector.extract_strided_slice %85 {offsets = [0, 128], sizes = [8, 128], strides = [1, 1]} : vector<8x384xf32> to vector<8x128xf32>
    %88 = vector.extract_strided_slice %85 {offsets = [0, 256], sizes = [8, 128], strides = [1, 1]} : vector<8x384xf32> to vector<8x128xf32>
    %89 = vector.extract_strided_slice %77 {offsets = [0, 384], sizes = [8, 128], strides = [1, 1]} : vector<8x512xf32> to vector<8x128xf32>
    %90 = math.tanh %89 : vector<8x128xf32>
    %91 = arith.mulf %87, %40 : vector<8x128xf32>
    %92 = arith.mulf %86, %90 : vector<8x128xf32>
    %93 = arith.addf %91, %92 : vector<8x128xf32>
    %94 = math.tanh %93 : vector<8x128xf32>
    %95 = arith.mulf %88, %94 : vector<8x128xf32>
    %c1_i32 = arith.constant 1 : i32
    %c8_i32_31 = arith.constant 8 : i32
    %96 = arith.muli %c1_i32, %c8_i32_31 : i32
    %97 = tpu.assume_multiple %96, 8 : i32
    %98 = arith.index_cast %97 : i32 to index
    %c0_32 = arith.constant 0 : index
    %99 = vector.load %arg10[%98, %c0_32] : memref<64x512xf32, #tpu.memory_space<vmem>>, vector<8x512xf32>
    %100 = arith.truncf %66 : vector<8x128xf32> to vector<8x128xbf16>
    %c0_33 = arith.constant 0 : index
    %c0_34 = arith.constant 0 : index
    %101 = vector.load %arg3[%c0_33, %c0_34] : memref<128x512xbf16, #tpu.memory_space<vmem>>, vector<128x512xbf16>
    %cst_35 = arith.constant dense<0.000000e+00> : vector<8x512xf32>
    %102 = tpu.matmul %100, %101, %cst_35 {dimension_numbers = #tpu.dot_dimension_numbers<[1], [0], [0], [1], [0, 0, 1, 1], [], []>} : vector<8x128xbf16>, vector<128x512xbf16>, vector<8x512xf32> -> vector<8x512xf32>
    %103 = arith.addf %99, %102 : vector<8x512xf32>
    %104 = vector.extract_strided_slice %103 {offsets = [0, 0], sizes = [8, 384], strides = [1, 1]} : vector<8x512xf32> to vector<8x384xf32>
    %cst_36 = arith.constant 5.000000e-01 : f32
    %105 = vector.broadcast %cst_36 : f32 to vector<8x384xf32>
    %106 = arith.mulf %105, %104 : vector<8x384xf32>
    %107 = math.tanh %106 : vector<8x384xf32>
    %cst_37 = arith.constant 5.000000e-01 : f32
    %108 = vector.broadcast %cst_37 : f32 to vector<8x384xf32>
    %109 = arith.mulf %108, %107 : vector<8x384xf32>
    %cst_38 = arith.constant 5.000000e-01 : f32
    %110 = vector.broadcast %cst_38 : f32 to vector<8x384xf32>
    %111 = arith.addf %109, %110 : vector<8x384xf32>
    %112 = vector.extract_strided_slice %111 {offsets = [0, 0], sizes = [8, 128], strides = [1, 1]} : vector<8x384xf32> to vector<8x128xf32>
    %113 = vector.extract_strided_slice %111 {offsets = [0, 128], sizes = [8, 128], strides = [1, 1]} : vector<8x384xf32> to vector<8x128xf32>
    %114 = vector.extract_strided_slice %111 {offsets = [0, 256], sizes = [8, 128], strides = [1, 1]} : vector<8x384xf32> to vector<8x128xf32>
    %115 = vector.extract_strided_slice %103 {offsets = [0, 384], sizes = [8, 128], strides = [1, 1]} : vector<8x512xf32> to vector<8x128xf32>
    %116 = math.tanh %115 : vector<8x128xf32>
    %117 = arith.mulf %113, %64 : vector<8x128xf32>
    %118 = arith.mulf %112, %116 : vector<8x128xf32>
    %119 = arith.addf %117, %118 : vector<8x128xf32>
    %120 = math.tanh %119 : vector<8x128xf32>
    %121 = arith.mulf %114, %120 : vector<8x128xf32>
    %122 = arith.index_cast %97 : i32 to index
    %c0_39 = arith.constant 0 : index
    %123 = vector.load %arg11[%122, %c0_39] : memref<64x128xf32, #tpu.memory_space<vmem>>, vector<8x128xf32>
    %124 = arith.mulf %121, %123 : vector<8x128xf32>
    %125 = arith.truncf %124 : vector<8x128xf32> to vector<8x128xbf16>
    %126 = arith.truncf %95 : vector<8x128xf32> to vector<8x128xbf16>
    %127 = tpu.concatenate %125, %126 in 1 : vector<8x128xbf16>, vector<8x128xbf16> -> vector<8x256xbf16>
    %c0_40 = arith.constant 0 : index
    %c0_41 = arith.constant 0 : index
    %128 = vector.load %arg5[%c0_40, %c0_41] : memref<256x512xbf16, #tpu.memory_space<vmem>>, vector<256x512xbf16>
    %cst_42 = arith.constant dense<0.000000e+00> : vector<8x512xf32>
    %129 = tpu.matmul %127, %128, %cst_42 {dimension_numbers = #tpu.dot_dimension_numbers<[1], [0], [0], [1], [0, 0, 1, 1], [], []>} : vector<8x256xbf16>, vector<256x512xbf16>, vector<8x512xf32> -> vector<8x512xf32>
    %c0_43 = arith.constant 0 : index
    %c0_44 = arith.constant 0 : index
    %130 = vector.load %arg6[%c0_43, %c0_44] : memref<1x512xf32, #tpu.memory_space<vmem>>, vector<1x512xf32>
    %131 = vector.broadcast %130 : vector<1x512xf32> to vector<8x512xf32>
    %132 = arith.addf %129, %131 : vector<8x512xf32>
    %133 = vector.extract_strided_slice %132 {offsets = [0, 0], sizes = [8, 384], strides = [1, 1]} : vector<8x512xf32> to vector<8x384xf32>
    %cst_45 = arith.constant 5.000000e-01 : f32
    %134 = vector.broadcast %cst_45 : f32 to vector<8x384xf32>
    %135 = arith.mulf %134, %133 : vector<8x384xf32>
    %136 = math.tanh %135 : vector<8x384xf32>
    %cst_46 = arith.constant 5.000000e-01 : f32
    %137 = vector.broadcast %cst_46 : f32 to vector<8x384xf32>
    %138 = arith.mulf %137, %136 : vector<8x384xf32>
    %cst_47 = arith.constant 5.000000e-01 : f32
    %139 = vector.broadcast %cst_47 : f32 to vector<8x384xf32>
    %140 = arith.addf %138, %139 : vector<8x384xf32>
    %141 = vector.extract_strided_slice %140 {offsets = [0, 0], sizes = [8, 128], strides = [1, 1]} : vector<8x384xf32> to vector<8x128xf32>
    %142 = vector.extract_strided_slice %140 {offsets = [0, 128], sizes = [8, 128], strides = [1, 1]} : vector<8x384xf32> to vector<8x128xf32>
    %143 = vector.extract_strided_slice %140 {offsets = [0, 256], sizes = [8, 128], strides = [1, 1]} : vector<8x384xf32> to vector<8x128xf32>
    %144 = vector.extract_strided_slice %132 {offsets = [0, 384], sizes = [8, 128], strides = [1, 1]} : vector<8x512xf32> to vector<8x128xf32>
    %145 = math.tanh %144 : vector<8x128xf32>
    %146 = arith.mulf %142, %93 : vector<8x128xf32>
    %147 = arith.mulf %141, %145 : vector<8x128xf32>
    %148 = arith.addf %146, %147 : vector<8x128xf32>
    %149 = math.tanh %148 : vector<8x128xf32>
    %150 = arith.mulf %143, %149 : vector<8x128xf32>
    %c2_i32 = arith.constant 2 : i32
    %c8_i32_48 = arith.constant 8 : i32
    %151 = arith.muli %c2_i32, %c8_i32_48 : i32
    %152 = tpu.assume_multiple %151, 8 : i32
    %153 = arith.index_cast %152 : i32 to index
    %c0_49 = arith.constant 0 : index
    %154 = vector.load %arg10[%153, %c0_49] : memref<64x512xf32, #tpu.memory_space<vmem>>, vector<8x512xf32>
    %155 = arith.truncf %121 : vector<8x128xf32> to vector<8x128xbf16>
    %c0_50 = arith.constant 0 : index
    %c0_51 = arith.constant 0 : index
    %156 = vector.load %arg3[%c0_50, %c0_51] : memref<128x512xbf16, #tpu.memory_space<vmem>>, vector<128x512xbf16>
    %cst_52 = arith.constant dense<0.000000e+00> : vector<8x512xf32>
    %157 = tpu.matmul %155, %156, %cst_52 {dimension_numbers = #tpu.dot_dimension_numbers<[1], [0], [0], [1], [0, 0, 1, 1], [], []>} : vector<8x128xbf16>, vector<128x512xbf16>, vector<8x512xf32> -> vector<8x512xf32>
    %158 = arith.addf %154, %157 : vector<8x512xf32>
    %159 = vector.extract_strided_slice %158 {offsets = [0, 0], sizes = [8, 384], strides = [1, 1]} : vector<8x512xf32> to vector<8x384xf32>
    %cst_53 = arith.constant 5.000000e-01 : f32
    %160 = vector.broadcast %cst_53 : f32 to vector<8x384xf32>
    %161 = arith.mulf %160, %159 : vector<8x384xf32>
    %162 = math.tanh %161 : vector<8x384xf32>
    %cst_54 = arith.constant 5.000000e-01 : f32
    %163 = vector.broadcast %cst_54 : f32 to vector<8x384xf32>
    %164 = arith.mulf %163, %162 : vector<8x384xf32>
    %cst_55 = arith.constant 5.000000e-01 : f32
    %165 = vector.broadcast %cst_55 : f32 to vector<8x384xf32>
    %166 = arith.addf %164, %165 : vector<8x384xf32>
    %167 = vector.extract_strided_slice %166 {offsets = [0, 0], sizes = [8, 128], strides = [1, 1]} : vector<8x384xf32> to vector<8x128xf32>
    %168 = vector.extract_strided_slice %166 {offsets = [0, 128], sizes = [8, 128], strides = [1, 1]} : vector<8x384xf32> to vector<8x128xf32>
    %169 = vector.extract_strided_slice %166 {offsets = [0, 256], sizes = [8, 128], strides = [1, 1]} : vector<8x384xf32> to vector<8x128xf32>
    %170 = vector.extract_strided_slice %158 {offsets = [0, 384], sizes = [8, 128], strides = [1, 1]} : vector<8x512xf32> to vector<8x128xf32>
    %171 = math.tanh %170 : vector<8x128xf32>
    %172 = arith.mulf %168, %119 : vector<8x128xf32>
    %173 = arith.mulf %167, %171 : vector<8x128xf32>
    %174 = arith.addf %172, %173 : vector<8x128xf32>
    %175 = math.tanh %174 : vector<8x128xf32>
    %176 = arith.mulf %169, %175 : vector<8x128xf32>
    %177 = arith.index_cast %152 : i32 to index
    %c0_56 = arith.constant 0 : index
    %178 = vector.load %arg11[%177, %c0_56] : memref<64x128xf32, #tpu.memory_space<vmem>>, vector<8x128xf32>
    %179 = arith.mulf %176, %178 : vector<8x128xf32>
    %180 = arith.truncf %179 : vector<8x128xf32> to vector<8x128xbf16>
    %181 = arith.truncf %150 : vector<8x128xf32> to vector<8x128xbf16>
    %182 = tpu.concatenate %180, %181 in 1 : vector<8x128xbf16>, vector<8x128xbf16> -> vector<8x256xbf16>
    %c0_57 = arith.constant 0 : index
    %c0_58 = arith.constant 0 : index
    %183 = vector.load %arg5[%c0_57, %c0_58] : memref<256x512xbf16, #tpu.memory_space<vmem>>, vector<256x512xbf16>
    %cst_59 = arith.constant dense<0.000000e+00> : vector<8x512xf32>
    %184 = tpu.matmul %182, %183, %cst_59 {dimension_numbers = #tpu.dot_dimension_numbers<[1], [0], [0], [1], [0, 0, 1, 1], [], []>} : vector<8x256xbf16>, vector<256x512xbf16>, vector<8x512xf32> -> vector<8x512xf32>
    %c0_60 = arith.constant 0 : index
    %c0_61 = arith.constant 0 : index
    %185 = vector.load %arg6[%c0_60, %c0_61] : memref<1x512xf32, #tpu.memory_space<vmem>>, vector<1x512xf32>
    %186 = vector.broadcast %185 : vector<1x512xf32> to vector<8x512xf32>
    %187 = arith.addf %184, %186 : vector<8x512xf32>
    %188 = vector.extract_strided_slice %187 {offsets = [0, 0], sizes = [8, 384], strides = [1, 1]} : vector<8x512xf32> to vector<8x384xf32>
    %cst_62 = arith.constant 5.000000e-01 : f32
    %189 = vector.broadcast %cst_62 : f32 to vector<8x384xf32>
    %190 = arith.mulf %189, %188 : vector<8x384xf32>
    %191 = math.tanh %190 : vector<8x384xf32>
    %cst_63 = arith.constant 5.000000e-01 : f32
    %192 = vector.broadcast %cst_63 : f32 to vector<8x384xf32>
    %193 = arith.mulf %192, %191 : vector<8x384xf32>
    %cst_64 = arith.constant 5.000000e-01 : f32
    %194 = vector.broadcast %cst_64 : f32 to vector<8x384xf32>
    %195 = arith.addf %193, %194 : vector<8x384xf32>
    %196 = vector.extract_strided_slice %195 {offsets = [0, 0], sizes = [8, 128], strides = [1, 1]} : vector<8x384xf32> to vector<8x128xf32>
    %197 = vector.extract_strided_slice %195 {offsets = [0, 128], sizes = [8, 128], strides = [1, 1]} : vector<8x384xf32> to vector<8x128xf32>
    %198 = vector.extract_strided_slice %195 {offsets = [0, 256], sizes = [8, 128], strides = [1, 1]} : vector<8x384xf32> to vector<8x128xf32>
    %199 = vector.extract_strided_slice %187 {offsets = [0, 384], sizes = [8, 128], strides = [1, 1]} : vector<8x512xf32> to vector<8x128xf32>
    %200 = math.tanh %199 : vector<8x128xf32>
    %201 = arith.mulf %197, %148 : vector<8x128xf32>
    %202 = arith.mulf %196, %200 : vector<8x128xf32>
    %203 = arith.addf %201, %202 : vector<8x128xf32>
    %204 = math.tanh %203 : vector<8x128xf32>
    %205 = arith.mulf %198, %204 : vector<8x128xf32>
    %c3_i32 = arith.constant 3 : i32
    %c8_i32_65 = arith.constant 8 : i32
    %206 = arith.muli %c3_i32, %c8_i32_65 : i32
    %207 = tpu.assume_multiple %206, 8 : i32
    %208 = arith.index_cast %207 : i32 to index
    %c0_66 = arith.constant 0 : index
    %209 = vector.load %arg10[%208, %c0_66] : memref<64x512xf32, #tpu.memory_space<vmem>>, vector<8x512xf32>
    %210 = arith.truncf %176 : vector<8x128xf32> to vector<8x128xbf16>
    %c0_67 = arith.constant 0 : index
    %c0_68 = arith.constant 0 : index
    %211 = vector.load %arg3[%c0_67, %c0_68] : memref<128x512xbf16, #tpu.memory_space<vmem>>, vector<128x512xbf16>
    %cst_69 = arith.constant dense<0.000000e+00> : vector<8x512xf32>
    %212 = tpu.matmul %210, %211, %cst_69 {dimension_numbers = #tpu.dot_dimension_numbers<[1], [0], [0], [1], [0, 0, 1, 1], [], []>} : vector<8x128xbf16>, vector<128x512xbf16>, vector<8x512xf32> -> vector<8x512xf32>
    %213 = arith.addf %209, %212 : vector<8x512xf32>
    %214 = vector.extract_strided_slice %213 {offsets = [0, 0], sizes = [8, 384], strides = [1, 1]} : vector<8x512xf32> to vector<8x384xf32>
    %cst_70 = arith.constant 5.000000e-01 : f32
    %215 = vector.broadcast %cst_70 : f32 to vector<8x384xf32>
    %216 = arith.mulf %215, %214 : vector<8x384xf32>
    %217 = math.tanh %216 : vector<8x384xf32>
    %cst_71 = arith.constant 5.000000e-01 : f32
    %218 = vector.broadcast %cst_71 : f32 to vector<8x384xf32>
    %219 = arith.mulf %218, %217 : vector<8x384xf32>
    %cst_72 = arith.constant 5.000000e-01 : f32
    %220 = vector.broadcast %cst_72 : f32 to vector<8x384xf32>
    %221 = arith.addf %219, %220 : vector<8x384xf32>
    %222 = vector.extract_strided_slice %221 {offsets = [0, 0], sizes = [8, 128], strides = [1, 1]} : vector<8x384xf32> to vector<8x128xf32>
    %223 = vector.extract_strided_slice %221 {offsets = [0, 128], sizes = [8, 128], strides = [1, 1]} : vector<8x384xf32> to vector<8x128xf32>
    %224 = vector.extract_strided_slice %221 {offsets = [0, 256], sizes = [8, 128], strides = [1, 1]} : vector<8x384xf32> to vector<8x128xf32>
    %225 = vector.extract_strided_slice %213 {offsets = [0, 384], sizes = [8, 128], strides = [1, 1]} : vector<8x512xf32> to vector<8x128xf32>
    %226 = math.tanh %225 : vector<8x128xf32>
    %227 = arith.mulf %223, %174 : vector<8x128xf32>
    %228 = arith.mulf %222, %226 : vector<8x128xf32>
    %229 = arith.addf %227, %228 : vector<8x128xf32>
    %230 = math.tanh %229 : vector<8x128xf32>
    %231 = arith.mulf %224, %230 : vector<8x128xf32>
    %232 = arith.index_cast %207 : i32 to index
    %c0_73 = arith.constant 0 : index
    %233 = vector.load %arg11[%232, %c0_73] : memref<64x128xf32, #tpu.memory_space<vmem>>, vector<8x128xf32>
    %234 = arith.mulf %231, %233 : vector<8x128xf32>
    %235 = arith.truncf %234 : vector<8x128xf32> to vector<8x128xbf16>
    %236 = arith.truncf %205 : vector<8x128xf32> to vector<8x128xbf16>
    %237 = tpu.concatenate %235, %236 in 1 : vector<8x128xbf16>, vector<8x128xbf16> -> vector<8x256xbf16>
    %c0_74 = arith.constant 0 : index
    %c0_75 = arith.constant 0 : index
    %238 = vector.load %arg5[%c0_74, %c0_75] : memref<256x512xbf16, #tpu.memory_space<vmem>>, vector<256x512xbf16>
    %cst_76 = arith.constant dense<0.000000e+00> : vector<8x512xf32>
    %239 = tpu.matmul %237, %238, %cst_76 {dimension_numbers = #tpu.dot_dimension_numbers<[1], [0], [0], [1], [0, 0, 1, 1], [], []>} : vector<8x256xbf16>, vector<256x512xbf16>, vector<8x512xf32> -> vector<8x512xf32>
    %c0_77 = arith.constant 0 : index
    %c0_78 = arith.constant 0 : index
    %240 = vector.load %arg6[%c0_77, %c0_78] : memref<1x512xf32, #tpu.memory_space<vmem>>, vector<1x512xf32>
    %241 = vector.broadcast %240 : vector<1x512xf32> to vector<8x512xf32>
    %242 = arith.addf %239, %241 : vector<8x512xf32>
    %243 = vector.extract_strided_slice %242 {offsets = [0, 0], sizes = [8, 384], strides = [1, 1]} : vector<8x512xf32> to vector<8x384xf32>
    %cst_79 = arith.constant 5.000000e-01 : f32
    %244 = vector.broadcast %cst_79 : f32 to vector<8x384xf32>
    %245 = arith.mulf %244, %243 : vector<8x384xf32>
    %246 = math.tanh %245 : vector<8x384xf32>
    %cst_80 = arith.constant 5.000000e-01 : f32
    %247 = vector.broadcast %cst_80 : f32 to vector<8x384xf32>
    %248 = arith.mulf %247, %246 : vector<8x384xf32>
    %cst_81 = arith.constant 5.000000e-01 : f32
    %249 = vector.broadcast %cst_81 : f32 to vector<8x384xf32>
    %250 = arith.addf %248, %249 : vector<8x384xf32>
    %251 = vector.extract_strided_slice %250 {offsets = [0, 0], sizes = [8, 128], strides = [1, 1]} : vector<8x384xf32> to vector<8x128xf32>
    %252 = vector.extract_strided_slice %250 {offsets = [0, 128], sizes = [8, 128], strides = [1, 1]} : vector<8x384xf32> to vector<8x128xf32>
    %253 = vector.extract_strided_slice %250 {offsets = [0, 256], sizes = [8, 128], strides = [1, 1]} : vector<8x384xf32> to vector<8x128xf32>
    %254 = vector.extract_strided_slice %242 {offsets = [0, 384], sizes = [8, 128], strides = [1, 1]} : vector<8x512xf32> to vector<8x128xf32>
    %255 = math.tanh %254 : vector<8x128xf32>
    %256 = arith.mulf %252, %203 : vector<8x128xf32>
    %257 = arith.mulf %251, %255 : vector<8x128xf32>
    %258 = arith.addf %256, %257 : vector<8x128xf32>
    %259 = math.tanh %258 : vector<8x128xf32>
    %260 = arith.mulf %253, %259 : vector<8x128xf32>
    %c4_i32 = arith.constant 4 : i32
    %c8_i32_82 = arith.constant 8 : i32
    %261 = arith.muli %c4_i32, %c8_i32_82 : i32
    %262 = tpu.assume_multiple %261, 8 : i32
    %263 = arith.index_cast %262 : i32 to index
    %c0_83 = arith.constant 0 : index
    %264 = vector.load %arg10[%263, %c0_83] : memref<64x512xf32, #tpu.memory_space<vmem>>, vector<8x512xf32>
    %265 = arith.truncf %231 : vector<8x128xf32> to vector<8x128xbf16>
    %c0_84 = arith.constant 0 : index
    %c0_85 = arith.constant 0 : index
    %266 = vector.load %arg3[%c0_84, %c0_85] : memref<128x512xbf16, #tpu.memory_space<vmem>>, vector<128x512xbf16>
    %cst_86 = arith.constant dense<0.000000e+00> : vector<8x512xf32>
    %267 = tpu.matmul %265, %266, %cst_86 {dimension_numbers = #tpu.dot_dimension_numbers<[1], [0], [0], [1], [0, 0, 1, 1], [], []>} : vector<8x128xbf16>, vector<128x512xbf16>, vector<8x512xf32> -> vector<8x512xf32>
    %268 = arith.addf %264, %267 : vector<8x512xf32>
    %269 = vector.extract_strided_slice %268 {offsets = [0, 0], sizes = [8, 384], strides = [1, 1]} : vector<8x512xf32> to vector<8x384xf32>
    %cst_87 = arith.constant 5.000000e-01 : f32
    %270 = vector.broadcast %cst_87 : f32 to vector<8x384xf32>
    %271 = arith.mulf %270, %269 : vector<8x384xf32>
    %272 = math.tanh %271 : vector<8x384xf32>
    %cst_88 = arith.constant 5.000000e-01 : f32
    %273 = vector.broadcast %cst_88 : f32 to vector<8x384xf32>
    %274 = arith.mulf %273, %272 : vector<8x384xf32>
    %cst_89 = arith.constant 5.000000e-01 : f32
    %275 = vector.broadcast %cst_89 : f32 to vector<8x384xf32>
    %276 = arith.addf %274, %275 : vector<8x384xf32>
    %277 = vector.extract_strided_slice %276 {offsets = [0, 0], sizes = [8, 128], strides = [1, 1]} : vector<8x384xf32> to vector<8x128xf32>
    %278 = vector.extract_strided_slice %276 {offsets = [0, 128], sizes = [8, 128], strides = [1, 1]} : vector<8x384xf32> to vector<8x128xf32>
    %279 = vector.extract_strided_slice %276 {offsets = [0, 256], sizes = [8, 128], strides = [1, 1]} : vector<8x384xf32> to vector<8x128xf32>
    %280 = vector.extract_strided_slice %268 {offsets = [0, 384], sizes = [8, 128], strides = [1, 1]} : vector<8x512xf32> to vector<8x128xf32>
    %281 = math.tanh %280 : vector<8x128xf32>
    %282 = arith.mulf %278, %229 : vector<8x128xf32>
    %283 = arith.mulf %277, %281 : vector<8x128xf32>
    %284 = arith.addf %282, %283 : vector<8x128xf32>
    %285 = math.tanh %284 : vector<8x128xf32>
    %286 = arith.mulf %279, %285 : vector<8x128xf32>
    %287 = arith.index_cast %262 : i32 to index
    %c0_90 = arith.constant 0 : index
    %288 = vector.load %arg11[%287, %c0_90] : memref<64x128xf32, #tpu.memory_space<vmem>>, vector<8x128xf32>
    %289 = arith.mulf %286, %288 : vector<8x128xf32>
    %290 = arith.truncf %289 : vector<8x128xf32> to vector<8x128xbf16>
    %291 = arith.truncf %260 : vector<8x128xf32> to vector<8x128xbf16>
    %292 = tpu.concatenate %290, %291 in 1 : vector<8x128xbf16>, vector<8x128xbf16> -> vector<8x256xbf16>
    %c0_91 = arith.constant 0 : index
    %c0_92 = arith.constant 0 : index
    %293 = vector.load %arg5[%c0_91, %c0_92] : memref<256x512xbf16, #tpu.memory_space<vmem>>, vector<256x512xbf16>
    %cst_93 = arith.constant dense<0.000000e+00> : vector<8x512xf32>
    %294 = tpu.matmul %292, %293, %cst_93 {dimension_numbers = #tpu.dot_dimension_numbers<[1], [0], [0], [1], [0, 0, 1, 1], [], []>} : vector<8x256xbf16>, vector<256x512xbf16>, vector<8x512xf32> -> vector<8x512xf32>
    %c0_94 = arith.constant 0 : index
    %c0_95 = arith.constant 0 : index
    %295 = vector.load %arg6[%c0_94, %c0_95] : memref<1x512xf32, #tpu.memory_space<vmem>>, vector<1x512xf32>
    %296 = vector.broadcast %295 : vector<1x512xf32> to vector<8x512xf32>
    %297 = arith.addf %294, %296 : vector<8x512xf32>
    %298 = vector.extract_strided_slice %297 {offsets = [0, 0], sizes = [8, 384], strides = [1, 1]} : vector<8x512xf32> to vector<8x384xf32>
    %cst_96 = arith.constant 5.000000e-01 : f32
    %299 = vector.broadcast %cst_96 : f32 to vector<8x384xf32>
    %300 = arith.mulf %299, %298 : vector<8x384xf32>
    %301 = math.tanh %300 : vector<8x384xf32>
    %cst_97 = arith.constant 5.000000e-01 : f32
    %302 = vector.broadcast %cst_97 : f32 to vector<8x384xf32>
    %303 = arith.mulf %302, %301 : vector<8x384xf32>
    %cst_98 = arith.constant 5.000000e-01 : f32
    %304 = vector.broadcast %cst_98 : f32 to vector<8x384xf32>
    %305 = arith.addf %303, %304 : vector<8x384xf32>
    %306 = vector.extract_strided_slice %305 {offsets = [0, 0], sizes = [8, 128], strides = [1, 1]} : vector<8x384xf32> to vector<8x128xf32>
    %307 = vector.extract_strided_slice %305 {offsets = [0, 128], sizes = [8, 128], strides = [1, 1]} : vector<8x384xf32> to vector<8x128xf32>
    %308 = vector.extract_strided_slice %305 {offsets = [0, 256], sizes = [8, 128], strides = [1, 1]} : vector<8x384xf32> to vector<8x128xf32>
    %309 = vector.extract_strided_slice %297 {offsets = [0, 384], sizes = [8, 128], strides = [1, 1]} : vector<8x512xf32> to vector<8x128xf32>
    %310 = math.tanh %309 : vector<8x128xf32>
    %311 = arith.mulf %307, %258 : vector<8x128xf32>
    %312 = arith.mulf %306, %310 : vector<8x128xf32>
    %313 = arith.addf %311, %312 : vector<8x128xf32>
    %314 = math.tanh %313 : vector<8x128xf32>
    %315 = arith.mulf %308, %314 : vector<8x128xf32>
    %c5_i32 = arith.constant 5 : i32
    %c8_i32_99 = arith.constant 8 : i32
    %316 = arith.muli %c5_i32, %c8_i32_99 : i32
    %317 = tpu.assume_multiple %316, 8 : i32
    %318 = arith.index_cast %317 : i32 to index
    %c0_100 = arith.constant 0 : index
    %319 = vector.load %arg10[%318, %c0_100] : memref<64x512xf32, #tpu.memory_space<vmem>>, vector<8x512xf32>
    %320 = arith.truncf %286 : vector<8x128xf32> to vector<8x128xbf16>
    %c0_101 = arith.constant 0 : index
    %c0_102 = arith.constant 0 : index
    %321 = vector.load %arg3[%c0_101, %c0_102] : memref<128x512xbf16, #tpu.memory_space<vmem>>, vector<128x512xbf16>
    %cst_103 = arith.constant dense<0.000000e+00> : vector<8x512xf32>
    %322 = tpu.matmul %320, %321, %cst_103 {dimension_numbers = #tpu.dot_dimension_numbers<[1], [0], [0], [1], [0, 0, 1, 1], [], []>} : vector<8x128xbf16>, vector<128x512xbf16>, vector<8x512xf32> -> vector<8x512xf32>
    %323 = arith.addf %319, %322 : vector<8x512xf32>
    %324 = vector.extract_strided_slice %323 {offsets = [0, 0], sizes = [8, 384], strides = [1, 1]} : vector<8x512xf32> to vector<8x384xf32>
    %cst_104 = arith.constant 5.000000e-01 : f32
    %325 = vector.broadcast %cst_104 : f32 to vector<8x384xf32>
    %326 = arith.mulf %325, %324 : vector<8x384xf32>
    %327 = math.tanh %326 : vector<8x384xf32>
    %cst_105 = arith.constant 5.000000e-01 : f32
    %328 = vector.broadcast %cst_105 : f32 to vector<8x384xf32>
    %329 = arith.mulf %328, %327 : vector<8x384xf32>
    %cst_106 = arith.constant 5.000000e-01 : f32
    %330 = vector.broadcast %cst_106 : f32 to vector<8x384xf32>
    %331 = arith.addf %329, %330 : vector<8x384xf32>
    %332 = vector.extract_strided_slice %331 {offsets = [0, 0], sizes = [8, 128], strides = [1, 1]} : vector<8x384xf32> to vector<8x128xf32>
    %333 = vector.extract_strided_slice %331 {offsets = [0, 128], sizes = [8, 128], strides = [1, 1]} : vector<8x384xf32> to vector<8x128xf32>
    %334 = vector.extract_strided_slice %331 {offsets = [0, 256], sizes = [8, 128], strides = [1, 1]} : vector<8x384xf32> to vector<8x128xf32>
    %335 = vector.extract_strided_slice %323 {offsets = [0, 384], sizes = [8, 128], strides = [1, 1]} : vector<8x512xf32> to vector<8x128xf32>
    %336 = math.tanh %335 : vector<8x128xf32>
    %337 = arith.mulf %333, %284 : vector<8x128xf32>
    %338 = arith.mulf %332, %336 : vector<8x128xf32>
    %339 = arith.addf %337, %338 : vector<8x128xf32>
    %340 = math.tanh %339 : vector<8x128xf32>
    %341 = arith.mulf %334, %340 : vector<8x128xf32>
    %342 = arith.index_cast %317 : i32 to index
    %c0_107 = arith.constant 0 : index
    %343 = vector.load %arg11[%342, %c0_107] : memref<64x128xf32, #tpu.memory_space<vmem>>, vector<8x128xf32>
    %344 = arith.mulf %341, %343 : vector<8x128xf32>
    %345 = arith.truncf %344 : vector<8x128xf32> to vector<8x128xbf16>
    %346 = arith.truncf %315 : vector<8x128xf32> to vector<8x128xbf16>
    %347 = tpu.concatenate %345, %346 in 1 : vector<8x128xbf16>, vector<8x128xbf16> -> vector<8x256xbf16>
    %c0_108 = arith.constant 0 : index
    %c0_109 = arith.constant 0 : index
    %348 = vector.load %arg5[%c0_108, %c0_109] : memref<256x512xbf16, #tpu.memory_space<vmem>>, vector<256x512xbf16>
    %cst_110 = arith.constant dense<0.000000e+00> : vector<8x512xf32>
    %349 = tpu.matmul %347, %348, %cst_110 {dimension_numbers = #tpu.dot_dimension_numbers<[1], [0], [0], [1], [0, 0, 1, 1], [], []>} : vector<8x256xbf16>, vector<256x512xbf16>, vector<8x512xf32> -> vector<8x512xf32>
    %c0_111 = arith.constant 0 : index
    %c0_112 = arith.constant 0 : index
    %350 = vector.load %arg6[%c0_111, %c0_112] : memref<1x512xf32, #tpu.memory_space<vmem>>, vector<1x512xf32>
    %351 = vector.broadcast %350 : vector<1x512xf32> to vector<8x512xf32>
    %352 = arith.addf %349, %351 : vector<8x512xf32>
    %353 = vector.extract_strided_slice %352 {offsets = [0, 0], sizes = [8, 384], strides = [1, 1]} : vector<8x512xf32> to vector<8x384xf32>
    %cst_113 = arith.constant 5.000000e-01 : f32
    %354 = vector.broadcast %cst_113 : f32 to vector<8x384xf32>
    %355 = arith.mulf %354, %353 : vector<8x384xf32>
    %356 = math.tanh %355 : vector<8x384xf32>
    %cst_114 = arith.constant 5.000000e-01 : f32
    %357 = vector.broadcast %cst_114 : f32 to vector<8x384xf32>
    %358 = arith.mulf %357, %356 : vector<8x384xf32>
    %cst_115 = arith.constant 5.000000e-01 : f32
    %359 = vector.broadcast %cst_115 : f32 to vector<8x384xf32>
    %360 = arith.addf %358, %359 : vector<8x384xf32>
    %361 = vector.extract_strided_slice %360 {offsets = [0, 0], sizes = [8, 128], strides = [1, 1]} : vector<8x384xf32> to vector<8x128xf32>
    %362 = vector.extract_strided_slice %360 {offsets = [0, 128], sizes = [8, 128], strides = [1, 1]} : vector<8x384xf32> to vector<8x128xf32>
    %363 = vector.extract_strided_slice %360 {offsets = [0, 256], sizes = [8, 128], strides = [1, 1]} : vector<8x384xf32> to vector<8x128xf32>
    %364 = vector.extract_strided_slice %352 {offsets = [0, 384], sizes = [8, 128], strides = [1, 1]} : vector<8x512xf32> to vector<8x128xf32>
    %365 = math.tanh %364 : vector<8x128xf32>
    %366 = arith.mulf %362, %313 : vector<8x128xf32>
    %367 = arith.mulf %361, %365 : vector<8x128xf32>
    %368 = arith.addf %366, %367 : vector<8x128xf32>
    %369 = math.tanh %368 : vector<8x128xf32>
    %370 = arith.mulf %363, %369 : vector<8x128xf32>
    %c6_i32 = arith.constant 6 : i32
    %c8_i32_116 = arith.constant 8 : i32
    %371 = arith.muli %c6_i32, %c8_i32_116 : i32
    %372 = tpu.assume_multiple %371, 8 : i32
    %373 = arith.index_cast %372 : i32 to index
    %c0_117 = arith.constant 0 : index
    %374 = vector.load %arg10[%373, %c0_117] : memref<64x512xf32, #tpu.memory_space<vmem>>, vector<8x512xf32>
    %375 = arith.truncf %341 : vector<8x128xf32> to vector<8x128xbf16>
    %c0_118 = arith.constant 0 : index
    %c0_119 = arith.constant 0 : index
    %376 = vector.load %arg3[%c0_118, %c0_119] : memref<128x512xbf16, #tpu.memory_space<vmem>>, vector<128x512xbf16>
    %cst_120 = arith.constant dense<0.000000e+00> : vector<8x512xf32>
    %377 = tpu.matmul %375, %376, %cst_120 {dimension_numbers = #tpu.dot_dimension_numbers<[1], [0], [0], [1], [0, 0, 1, 1], [], []>} : vector<8x128xbf16>, vector<128x512xbf16>, vector<8x512xf32> -> vector<8x512xf32>
    %378 = arith.addf %374, %377 : vector<8x512xf32>
    %379 = vector.extract_strided_slice %378 {offsets = [0, 0], sizes = [8, 384], strides = [1, 1]} : vector<8x512xf32> to vector<8x384xf32>
    %cst_121 = arith.constant 5.000000e-01 : f32
    %380 = vector.broadcast %cst_121 : f32 to vector<8x384xf32>
    %381 = arith.mulf %380, %379 : vector<8x384xf32>
    %382 = math.tanh %381 : vector<8x384xf32>
    %cst_122 = arith.constant 5.000000e-01 : f32
    %383 = vector.broadcast %cst_122 : f32 to vector<8x384xf32>
    %384 = arith.mulf %383, %382 : vector<8x384xf32>
    %cst_123 = arith.constant 5.000000e-01 : f32
    %385 = vector.broadcast %cst_123 : f32 to vector<8x384xf32>
    %386 = arith.addf %384, %385 : vector<8x384xf32>
    %387 = vector.extract_strided_slice %386 {offsets = [0, 0], sizes = [8, 128], strides = [1, 1]} : vector<8x384xf32> to vector<8x128xf32>
    %388 = vector.extract_strided_slice %386 {offsets = [0, 128], sizes = [8, 128], strides = [1, 1]} : vector<8x384xf32> to vector<8x128xf32>
    %389 = vector.extract_strided_slice %386 {offsets = [0, 256], sizes = [8, 128], strides = [1, 1]} : vector<8x384xf32> to vector<8x128xf32>
    %390 = vector.extract_strided_slice %378 {offsets = [0, 384], sizes = [8, 128], strides = [1, 1]} : vector<8x512xf32> to vector<8x128xf32>
    %391 = math.tanh %390 : vector<8x128xf32>
    %392 = arith.mulf %388, %339 : vector<8x128xf32>
    %393 = arith.mulf %387, %391 : vector<8x128xf32>
    %394 = arith.addf %392, %393 : vector<8x128xf32>
    %395 = math.tanh %394 : vector<8x128xf32>
    %396 = arith.mulf %389, %395 : vector<8x128xf32>
    %397 = arith.index_cast %372 : i32 to index
    %c0_124 = arith.constant 0 : index
    %398 = vector.load %arg11[%397, %c0_124] : memref<64x128xf32, #tpu.memory_space<vmem>>, vector<8x128xf32>
    %399 = arith.mulf %396, %398 : vector<8x128xf32>
    %400 = arith.truncf %399 : vector<8x128xf32> to vector<8x128xbf16>
    %401 = arith.truncf %370 : vector<8x128xf32> to vector<8x128xbf16>
    %402 = tpu.concatenate %400, %401 in 1 : vector<8x128xbf16>, vector<8x128xbf16> -> vector<8x256xbf16>
    %c0_125 = arith.constant 0 : index
    %c0_126 = arith.constant 0 : index
    %403 = vector.load %arg5[%c0_125, %c0_126] : memref<256x512xbf16, #tpu.memory_space<vmem>>, vector<256x512xbf16>
    %cst_127 = arith.constant dense<0.000000e+00> : vector<8x512xf32>
    %404 = tpu.matmul %402, %403, %cst_127 {dimension_numbers = #tpu.dot_dimension_numbers<[1], [0], [0], [1], [0, 0, 1, 1], [], []>} : vector<8x256xbf16>, vector<256x512xbf16>, vector<8x512xf32> -> vector<8x512xf32>
    %c0_128 = arith.constant 0 : index
    %c0_129 = arith.constant 0 : index
    %405 = vector.load %arg6[%c0_128, %c0_129] : memref<1x512xf32, #tpu.memory_space<vmem>>, vector<1x512xf32>
    %406 = vector.broadcast %405 : vector<1x512xf32> to vector<8x512xf32>
    %407 = arith.addf %404, %406 : vector<8x512xf32>
    %408 = vector.extract_strided_slice %407 {offsets = [0, 0], sizes = [8, 384], strides = [1, 1]} : vector<8x512xf32> to vector<8x384xf32>
    %cst_130 = arith.constant 5.000000e-01 : f32
    %409 = vector.broadcast %cst_130 : f32 to vector<8x384xf32>
    %410 = arith.mulf %409, %408 : vector<8x384xf32>
    %411 = math.tanh %410 : vector<8x384xf32>
    %cst_131 = arith.constant 5.000000e-01 : f32
    %412 = vector.broadcast %cst_131 : f32 to vector<8x384xf32>
    %413 = arith.mulf %412, %411 : vector<8x384xf32>
    %cst_132 = arith.constant 5.000000e-01 : f32
    %414 = vector.broadcast %cst_132 : f32 to vector<8x384xf32>
    %415 = arith.addf %413, %414 : vector<8x384xf32>
    %416 = vector.extract_strided_slice %415 {offsets = [0, 0], sizes = [8, 128], strides = [1, 1]} : vector<8x384xf32> to vector<8x128xf32>
    %417 = vector.extract_strided_slice %415 {offsets = [0, 128], sizes = [8, 128], strides = [1, 1]} : vector<8x384xf32> to vector<8x128xf32>
    %418 = vector.extract_strided_slice %415 {offsets = [0, 256], sizes = [8, 128], strides = [1, 1]} : vector<8x384xf32> to vector<8x128xf32>
    %419 = vector.extract_strided_slice %407 {offsets = [0, 384], sizes = [8, 128], strides = [1, 1]} : vector<8x512xf32> to vector<8x128xf32>
    %420 = math.tanh %419 : vector<8x128xf32>
    %421 = arith.mulf %417, %368 : vector<8x128xf32>
    %422 = arith.mulf %416, %420 : vector<8x128xf32>
    %423 = arith.addf %421, %422 : vector<8x128xf32>
    %424 = math.tanh %423 : vector<8x128xf32>
    %425 = arith.mulf %418, %424 : vector<8x128xf32>
    %c7_i32 = arith.constant 7 : i32
    %c8_i32_133 = arith.constant 8 : i32
    %426 = arith.muli %c7_i32, %c8_i32_133 : i32
    %427 = tpu.assume_multiple %426, 8 : i32
    %428 = arith.index_cast %427 : i32 to index
    %c0_134 = arith.constant 0 : index
    %429 = vector.load %arg10[%428, %c0_134] : memref<64x512xf32, #tpu.memory_space<vmem>>, vector<8x512xf32>
    %430 = arith.truncf %396 : vector<8x128xf32> to vector<8x128xbf16>
    %c0_135 = arith.constant 0 : index
    %c0_136 = arith.constant 0 : index
    %431 = vector.load %arg3[%c0_135, %c0_136] : memref<128x512xbf16, #tpu.memory_space<vmem>>, vector<128x512xbf16>
    %cst_137 = arith.constant dense<0.000000e+00> : vector<8x512xf32>
    %432 = tpu.matmul %430, %431, %cst_137 {dimension_numbers = #tpu.dot_dimension_numbers<[1], [0], [0], [1], [0, 0, 1, 1], [], []>} : vector<8x128xbf16>, vector<128x512xbf16>, vector<8x512xf32> -> vector<8x512xf32>
    %433 = arith.addf %429, %432 : vector<8x512xf32>
    %434 = vector.extract_strided_slice %433 {offsets = [0, 0], sizes = [8, 384], strides = [1, 1]} : vector<8x512xf32> to vector<8x384xf32>
    %cst_138 = arith.constant 5.000000e-01 : f32
    %435 = vector.broadcast %cst_138 : f32 to vector<8x384xf32>
    %436 = arith.mulf %435, %434 : vector<8x384xf32>
    %437 = math.tanh %436 : vector<8x384xf32>
    %cst_139 = arith.constant 5.000000e-01 : f32
    %438 = vector.broadcast %cst_139 : f32 to vector<8x384xf32>
    %439 = arith.mulf %438, %437 : vector<8x384xf32>
    %cst_140 = arith.constant 5.000000e-01 : f32
    %440 = vector.broadcast %cst_140 : f32 to vector<8x384xf32>
    %441 = arith.addf %439, %440 : vector<8x384xf32>
    %442 = vector.extract_strided_slice %441 {offsets = [0, 0], sizes = [8, 128], strides = [1, 1]} : vector<8x384xf32> to vector<8x128xf32>
    %443 = vector.extract_strided_slice %441 {offsets = [0, 128], sizes = [8, 128], strides = [1, 1]} : vector<8x384xf32> to vector<8x128xf32>
    %444 = vector.extract_strided_slice %441 {offsets = [0, 256], sizes = [8, 128], strides = [1, 1]} : vector<8x384xf32> to vector<8x128xf32>
    %445 = vector.extract_strided_slice %433 {offsets = [0, 384], sizes = [8, 128], strides = [1, 1]} : vector<8x512xf32> to vector<8x128xf32>
    %446 = math.tanh %445 : vector<8x128xf32>
    %447 = arith.mulf %443, %394 : vector<8x128xf32>
    %448 = arith.mulf %442, %446 : vector<8x128xf32>
    %449 = arith.addf %447, %448 : vector<8x128xf32>
    %450 = math.tanh %449 : vector<8x128xf32>
    %451 = arith.mulf %444, %450 : vector<8x128xf32>
    %452 = arith.index_cast %427 : i32 to index
    %c0_141 = arith.constant 0 : index
    %453 = vector.load %arg11[%452, %c0_141] : memref<64x128xf32, #tpu.memory_space<vmem>>, vector<8x128xf32>
    %454 = arith.mulf %451, %453 : vector<8x128xf32>
    %455 = arith.truncf %454 : vector<8x128xf32> to vector<8x128xbf16>
    %456 = arith.truncf %425 : vector<8x128xf32> to vector<8x128xbf16>
    %457 = tpu.concatenate %455, %456 in 1 : vector<8x128xbf16>, vector<8x128xbf16> -> vector<8x256xbf16>
    %c0_142 = arith.constant 0 : index
    %c0_143 = arith.constant 0 : index
    %458 = vector.load %arg5[%c0_142, %c0_143] : memref<256x512xbf16, #tpu.memory_space<vmem>>, vector<256x512xbf16>
    %cst_144 = arith.constant dense<0.000000e+00> : vector<8x512xf32>
    %459 = tpu.matmul %457, %458, %cst_144 {dimension_numbers = #tpu.dot_dimension_numbers<[1], [0], [0], [1], [0, 0, 1, 1], [], []>} : vector<8x256xbf16>, vector<256x512xbf16>, vector<8x512xf32> -> vector<8x512xf32>
    %c0_145 = arith.constant 0 : index
    %c0_146 = arith.constant 0 : index
    %460 = vector.load %arg6[%c0_145, %c0_146] : memref<1x512xf32, #tpu.memory_space<vmem>>, vector<1x512xf32>
    %461 = vector.broadcast %460 : vector<1x512xf32> to vector<8x512xf32>
    %462 = arith.addf %459, %461 : vector<8x512xf32>
    %463 = vector.extract_strided_slice %462 {offsets = [0, 0], sizes = [8, 384], strides = [1, 1]} : vector<8x512xf32> to vector<8x384xf32>
    %cst_147 = arith.constant 5.000000e-01 : f32
    %464 = vector.broadcast %cst_147 : f32 to vector<8x384xf32>
    %465 = arith.mulf %464, %463 : vector<8x384xf32>
    %466 = math.tanh %465 : vector<8x384xf32>
    %cst_148 = arith.constant 5.000000e-01 : f32
    %467 = vector.broadcast %cst_148 : f32 to vector<8x384xf32>
    %468 = arith.mulf %467, %466 : vector<8x384xf32>
    %cst_149 = arith.constant 5.000000e-01 : f32
    %469 = vector.broadcast %cst_149 : f32 to vector<8x384xf32>
    %470 = arith.addf %468, %469 : vector<8x384xf32>
    %471 = vector.extract_strided_slice %470 {offsets = [0, 0], sizes = [8, 128], strides = [1, 1]} : vector<8x384xf32> to vector<8x128xf32>
    %472 = vector.extract_strided_slice %470 {offsets = [0, 128], sizes = [8, 128], strides = [1, 1]} : vector<8x384xf32> to vector<8x128xf32>
    %473 = vector.extract_strided_slice %470 {offsets = [0, 256], sizes = [8, 128], strides = [1, 1]} : vector<8x384xf32> to vector<8x128xf32>
    %474 = vector.extract_strided_slice %462 {offsets = [0, 384], sizes = [8, 128], strides = [1, 1]} : vector<8x512xf32> to vector<8x128xf32>
    %475 = math.tanh %474 : vector<8x128xf32>
    %476 = arith.mulf %472, %423 : vector<8x128xf32>
    %477 = arith.mulf %471, %475 : vector<8x128xf32>
    %478 = arith.addf %476, %477 : vector<8x128xf32>
    %479 = math.tanh %478 : vector<8x128xf32>
    %480 = arith.mulf %473, %479 : vector<8x128xf32>
    %c8_i32_150 = arith.constant 8 : i32
    %481 = arith.truncf %480 : vector<8x128xf32> to vector<8x128xbf16>
    %c0_151 = arith.constant 0 : index
    %c0_152 = arith.constant 0 : index
    %482 = vector.load %arg7[%c0_151, %c0_152] : memref<128x1xbf16, #tpu.memory_space<vmem>>, vector<128x1xbf16>
    %cst_153 = arith.constant dense<0.000000e+00> : vector<8x1xf32>
    %483 = tpu.matmul %481, %482, %cst_153 {dimension_numbers = #tpu.dot_dimension_numbers<[1], [0], [0], [1], [0, 0, 1, 1], [], []>} : vector<8x128xbf16>, vector<128x1xbf16>, vector<8x1xf32> -> vector<8x1xf32>
    %c0_154 = arith.constant 0 : index
    %c0_155 = arith.constant 0 : index
    %484 = vector.load %arg8[%c0_154, %c0_155] : memref<1x1xf32, #tpu.memory_space<vmem>>, vector<1x1xf32>
    %485 = vector.broadcast %484 : vector<1x1xf32> to vector<8x1xf32>
    %486 = arith.addf %483, %485 : vector<8x1xf32>
    %c0_156 = arith.constant 0 : index
    %c0_157 = arith.constant 0 : index
    %487 = vector.load %arg9[%c0_156, %c0_157] : memref<8x1xf32, #tpu.memory_space<vmem>>, vector<8x1xf32>
    tpu.vector_store %arg9[%c0_156, %c0_157], %486 {strides = array<i32>} : memref<8x1xf32, #tpu.memory_space<vmem>>, vector<8x1xf32>,
    return
  }
}

</mosaic_0001>

<llo_original>
// kernel: lstm_model_forward.1
$region0: #{lstm_model_forward.1}
  #allocation0 [shape = 'u32[]', space=smem, size = 0x4, offset = 0x4, fixed_abs, tag = 'smem constant byte address 0x4 - core index']
  #allocation1 [shape = 'u32[144,128]{1,0:T(1,128)}', space=vmem, size = 0x12000, scoped, tag = 'internal scratch']
  #allocation2 [shape = 'f32[64,512]{1,0:T(8,128)}', space=vmem, size = 0x20000, scoped, tag = 'scratch operand']
  #allocation3 [shape = 'f32[64,128]{1,0:T(8,128)}', space=vmem, size = 0x8000, scoped, tag = 'scratch operand']
  #allocation4 [shape = 's32[1]{0:T(128)S(6)}', space=smem, size = 0x200, scoped, tag = 'scoped memory for lstm_model_forward.1']
  #allocation5 [shape = 'f32[1,1]{1,0:T(1,128)S(1)}', space=vmem, size = 0x200, scoped, tag = 'scoped memory for lstm_model_forward.1']
  %s0 = inlined_call_operand.<no memory space> [shape: s32[1], index: 0, kind: input, shape index: {}]
  %s1 = inlined_call_operand.vmem [shape: f32[64,1], index: 1, kind: input, shape index: {}]
  %s2 = inlined_call_operand.vmem [shape: f32[1,512], index: 2, kind: input, shape index: {}]
  %s3 = inlined_call_operand.hbm [shape: bf16[128,512], index: 3, kind: input, shape index: {}]
  %s4 = inlined_call_operand.vmem [shape: f32[1,512], index: 4, kind: input, shape index: {}]
  %s5 = inlined_call_operand.hbm [shape: bf16[256,512], index: 5, kind: input, shape index: {}]
  %s6 = inlined_call_operand.vmem [shape: f32[1,512], index: 6, kind: input, shape index: {}]
  %s7 = inlined_call_operand.vmem [shape: bf16[128,1], index: 7, kind: input, shape index: {}]
  %s8 = inlined_call_operand.<no memory space> [shape: f32[1,1], index: 8, kind: input, shape index: {}]
  %s9 = inlined_call_operand.vmem [shape: f32[8,1], index: 9, kind: output, shape index: {}]
  %s10 = sld [smem:[#allocation0]]
  $region54: #{lstm_model_forward.1} parent=0
    _
  %s12 = ssub.s32 1, %s10
  %s13 = scalar_select 0, %s12, %s10
  %14 = sst [smem:[#allocation4]] %s0
  %v15 = vstv %s8
  %16 = vst [vmem:[#allocation5] sm:$0x1] %v15
  $region1: #{lstm_model_forward.1} parent=0
    #allocation6 [shape = 'u8[131072]{0}', space=vmem, size = 0x20000, scoped, tag = 'input window, operand 3, single buffered']
    #allocation7 [shape = 's32[1]{0}', space=sflag, size = 0x4, scoped, tag = 'scoped memory for lstm_model_forward.1']
    #allocation8 [shape = 'u8[262144]{0}', space=vmem, size = 0x40000, scoped, tag = 'input window, operand 5, single buffered']
    #allocation9 [shape = 's32[1]{0}', space=sflag, size = 0x4, scoped, tag = 'scoped memory for lstm_model_forward.1']
    %17 = vsyncpa [#allocation7], 0
    %18 = vsyncpa [#allocation9], 0
    // Predicated region
    $region2: #{lstm_model_forward.1} parent=1 // pred_check
      _
    $region3: #{lstm_model_forward.1} parent=1 // pred_check_branch
      %20 = sbr.rel (0) target = $region5
    $region4: #{lstm_model_forward.1} parent=1 // pred_region
      _
    $region5: #{lstm_model_forward.1} parent=1 // pred_fallthru
      _
    // Predicated region
    $region6: #{lstm_model_forward.1} parent=1 // pred_check
      _
    $region7: #{lstm_model_forward.1} parent=1 // pred_check_branch
      %22 = sbr.rel (0) target = $region9
    $region8: #{lstm_model_forward.1} parent=1 // pred_region
      _
    $region9: #{lstm_model_forward.1} parent=1 // pred_fallthru
      _
    // Predicated region
    $region10: #{lstm_model_forward.1} parent=1 // pred_check
      _
    $region11: #{lstm_model_forward.1} parent=1 // pred_check_branch
      %24 = sbr.rel (0) target = $region13
    $region12: #{lstm_model_forward.1} parent=1 // pred_region
      _
    $region13: #{lstm_model_forward.1} parent=1 // pred_fallthru
      _
    // Predicated region
    $region14: #{lstm_model_forward.1} parent=1 // pred_check
      _
    $region15: #{lstm_model_forward.1} parent=1 // pred_check_branch
      %26 = sbr.rel (0) target = $region17
    $region16: #{lstm_model_forward.1} parent=1 // pred_region
      %s28 = ssub.s32 4096, 4096
      %29 = vsyncadd [#allocation7], %s28
      %s30 = sshll.u32 [#allocation6], 4
      %s31 = int_to_ptr.vmem [resolvable:$true] %s30
      %36 = dma.hbm_to_vmem [thread:$0]  %s3, 4096, %s31, [#allocation7], 256, 256, 16
    $region17: #{lstm_model_forward.1} parent=1 // pred_fallthru
      _
    // Predicated region
    $region18: #{lstm_model_forward.1} parent=1 // pred_check
      _
    $region19: #{lstm_model_forward.1} parent=1 // pred_check_branch
      %38 = sbr.rel (0) target = $region21
    $region20: #{lstm_model_forward.1} parent=1 // pred_region
      _
    $region21: #{lstm_model_forward.1} parent=1 // pred_fallthru
      _
    // Predicated region
    $region22: #{lstm_model_forward.1} parent=1 // pred_check
      _
    $region23: #{lstm_model_forward.1} parent=1 // pred_check_branch
      %40 = sbr.rel (0) target = $region25
    $region24: #{lstm_model_forward.1} parent=1 // pred_region
      %s42 = ssub.s32 8192, 8192
      %43 = vsyncadd [#allocation9], %s42
      %s44 = sshll.u32 [#allocation8], 4
      %s45 = int_to_ptr.vmem [resolvable:$true] %s44
      %50 = dma.hbm_to_vmem [thread:$0]  %s5, 8192, %s45, [#allocation9], 256, 256, 16
    $region25: #{lstm_model_forward.1} parent=1 // pred_fallthru
      _
    // Predicated region
    $region26: #{lstm_model_forward.1} parent=1 // pred_check
      _
    $region27: #{lstm_model_forward.1} parent=1 // pred_check_branch
      %52 = sbr.rel (0) target = $region29
    $region28: #{lstm_model_forward.1} parent=1 // pred_region
      _
    $region29: #{lstm_model_forward.1} parent=1 // pred_fallthru
      _
    // Predicated region
    $region30: #{lstm_model_forward.1} parent=1 // pred_check
      _
    $region31: #{lstm_model_forward.1} parent=1 // pred_check_branch
      %54 = sbr.rel (0) target = $region33
    $region32: #{lstm_model_forward.1} parent=1 // pred_region
      _
    $region33: #{lstm_model_forward.1} parent=1 // pred_fallthru
      _
    // Predicated region
    $region34: #{lstm_model_forward.1} parent=1 // pred_check
      _
    $region35: #{lstm_model_forward.1} parent=1 // pred_check_branch
      %56 = sbr.rel (0) target = $region37
    $region36: #{lstm_model_forward.1} parent=1 // pred_region
      _
    $region37: #{lstm_model_forward.1} parent=1 // pred_fallthru
      _
    // Predicated region
    $region38: #{lstm_model_forward.1} parent=1 // pred_check
      _
    $region39: #{lstm_model_forward.1} parent=1 // pred_check_branch
      %58 = sbr.rel (0) target = $region41
    $region40: #{lstm_model_forward.1} parent=1 // pred_region
      %59 = dma.done [#allocation7], 4096
    $region41: #{lstm_model_forward.1} parent=1 // pred_fallthru
      _
    // Predicated region
    $region42: #{lstm_model_forward.1} parent=1 // pred_check
      _
    $region43: #{lstm_model_forward.1} parent=1 // pred_check_branch
      %61 = sbr.rel (0) target = $region45
    $region44: #{lstm_model_forward.1} parent=1 // pred_region
      %62 = dma.done [#allocation9], 8192
    $region45: #{lstm_model_forward.1} parent=1 // pred_fallthru
      _
    %s64 = sld [smem:[#allocation4]]
    %v65 = vld [vmem:[%s1] sm:$0xff]
    %v66 = vld [vmem:[%s1 + $0x8] sm:$0xff]
    %v67 = vld [vmem:[%s1 + $0x10] sm:$0xff]
    %v68 = vld [vmem:[%s1 + $0x18] sm:$0xff]
    %v69 = vld [vmem:[%s1 + $0x20] sm:$0xff]
    %v70 = vld [vmem:[%s1 + $0x28] sm:$0xff]
    %v71 = vld [vmem:[%s1 + $0x30] sm:$0xff]
    %v72 = vld [vmem:[%s1 + $0x38] sm:$0xff]
    %v73 = vld [vmem:[%s2] sm:$0xf]
    %75 = vset.pattern.permute.xlu0 0
    %76 = vperm.xlu0 %75, %v65
    %v77 = vpop.permute.xlu0 %76
    %80 = vset.pattern.permute.xlu0 0
    %81 = vperm.xlu0 %80, %v66
    %v82 = vpop.permute.xlu0 %81
    %85 = vset.pattern.permute.xlu0 0
    %86 = vperm.xlu0 %85, %v67
    %v87 = vpop.permute.xlu0 %86
    %90 = vset.pattern.permute.xlu0 0
    %91 = vperm.xlu0 %90, %v68
    %v92 = vpop.permute.xlu0 %91
    %95 = vset.pattern.permute.xlu0 0
    %96 = vperm.xlu0 %95, %v69
    %v97 = vpop.permute.xlu0 %96
    %100 = vset.pattern.permute.xlu0 0
    %101 = vperm.xlu0 %100, %v70
    %v102 = vpop.permute.xlu0 %101
    %105 = vset.pattern.permute.xlu0 0
    %106 = vperm.xlu0 %105, %v71
    %v107 = vpop.permute.xlu0 %106
    %110 = vset.pattern.permute.xlu0 0
    %111 = vperm.xlu0 %110, %v72
    %v112 = vpop.permute.xlu0 %111
    %v115 = vlaneseq
    %v116 = vshrl.u32 %v115, 7
    %v117 = vsub.s32 0, %v116
    %v118 = vrot.slane %v73, %v117
    %v119 = vlaneseq
    %v120 = vshrl.u32 %v119, 7
    %v121 = vsub.s32 1, %v120
    %v122 = vrot.slane %v73, %v121
    %v123 = vlaneseq
    %v124 = vshrl.u32 %v123, 7
    %v125 = vsub.s32 2, %v124
    %v126 = vrot.slane %v73, %v125
    %v127 = vlaneseq
    %v128 = vshrl.u32 %v127, 7
    %v129 = vsub.s32 3, %v128
    %v130 = vrot.slane %v73, %v129
    %v135 = vmul.f32 %v77, %v118
    %v136 = vmul.f32 %v77, %v122
    %v137 = vmul.f32 %v77, %v126
    %v138 = vmul.f32 %v77, %v130
    %v139 = vmul.f32 %v82, %v118
    %v140 = vmul.f32 %v82, %v122
    %v141 = vmul.f32 %v82, %v126
    %v142 = vmul.f32 %v82, %v130
    %v143 = vmul.f32 %v87, %v118
    %v144 = vmul.f32 %v87, %v122
    %v145 = vmul.f32 %v87, %v126
    %v146 = vmul.f32 %v87, %v130
    %v147 = vmul.f32 %v92, %v118
    %v148 = vmul.f32 %v92, %v122
    %v149 = vmul.f32 %v92, %v126
    %v150 = vmul.f32 %v92, %v130
    %v151 = vmul.f32 %v97, %v118
    %v152 = vmul.f32 %v97, %v122
    %v153 = vmul.f32 %v97, %v126
    %v154 = vmul.f32 %v97, %v130
    %v155 = vmul.f32 %v102, %v118
    %v156 = vmul.f32 %v102, %v122
    %v157 = vmul.f32 %v102, %v126
    %v158 = vmul.f32 %v102, %v130
    %v159 = vmul.f32 %v107, %v118
    %v160 = vmul.f32 %v107, %v122
    %v161 = vmul.f32 %v107, %v126
    %v162 = vmul.f32 %v107, %v130
    %v163 = vmul.f32 %v112, %v118
    %v164 = vmul.f32 %v112, %v122
    %v165 = vmul.f32 %v112, %v126
    %v166 = vmul.f32 %v112, %v130
    %v167 = vld [vmem:[%s4] sm:$0xf]
    %v169 = vlaneseq
    %v170 = vshrl.u32 %v169, 7
    %v171 = vsub.s32 0, %v170
    %v172 = vrot.slane %v167, %v171
    %v173 = vlaneseq
    %v174 = vshrl.u32 %v173, 7
    %v175 = vsub.s32 1, %v174
    %v176 = vrot.slane %v167, %v175
    %v177 = vlaneseq
    %v178 = vshrl.u32 %v177, 7
    %v179 = vsub.s32 2, %v178
    %v180 = vrot.slane %v167, %v179
    %v181 = vlaneseq
    %v182 = vshrl.u32 %v181, 7
    %v183 = vsub.s32 3, %v182
    %v184 = vrot.slane %v167, %v183
    %v189 = vadd.f32 %v135, %v172
    %v190 = vadd.f32 %v136, %v176
    %v191 = vadd.f32 %v137, %v180
    %v192 = vadd.f32 %v138, %v184
    %v193 = vadd.f32 %v139, %v172
    %v194 = vadd.f32 %v140, %v176
    %v195 = vadd.f32 %v141, %v180
    %v196 = vadd.f32 %v142, %v184
    %v197 = vadd.f32 %v143, %v172
    %v198 = vadd.f32 %v144, %v176
    %v199 = vadd.f32 %v145, %v180
    %v200 = vadd.f32 %v146, %v184
    %v201 = vadd.f32 %v147, %v172
    %v202 = vadd.f32 %v148, %v176
    %v203 = vadd.f32 %v149, %v180
    %v204 = vadd.f32 %v150, %v184
    %v205 = vadd.f32 %v151, %v172
    %v206 = vadd.f32 %v152, %v176
    %v207 = vadd.f32 %v153, %v180
    %v208 = vadd.f32 %v154, %v184
    %v209 = vadd.f32 %v155, %v172
    %v210 = vadd.f32 %v156, %v176
    %v211 = vadd.f32 %v157, %v180
    %v212 = vadd.f32 %v158, %v184
    %v213 = vadd.f32 %v159, %v172
    %v214 = vadd.f32 %v160, %v176
    %v215 = vadd.f32 %v161, %v180
    %v216 = vadd.f32 %v162, %v184
    %v217 = vadd.f32 %v163, %v172
    %v218 = vadd.f32 %v164, %v176
    %v219 = vadd.f32 %v165, %v180
    %v220 = vadd.f32 %v166, %v184
    %221 = vst [vmem:[#allocation2] sm:$0xff] %v189
    %222 = vst [vmem:[#allocation2 + $0x8] sm:$0xff] %v190
    %223 = vst [vmem:[#allocation2 + $0x10] sm:$0xff] %v191
    %224 = vst [vmem:[#allocation2 + $0x18] sm:$0xff] %v192
    %225 = vst [vmem:[#allocation2 + $0x20] sm:$0xff] %v193
    %226 = vst [vmem:[#allocation2 + $0x28] sm:$0xff] %v194
    %227 = vst [vmem:[#allocation2 + $0x30] sm:$0xff] %v195
    %228 = vst [vmem:[#allocation2 + $0x38] sm:$0xff] %v196
    %229 = vst [vmem:[#allocation2 + $0x40] sm:$0xff] %v197
    %230 = vst [vmem:[#allocation2 + $0x48] sm:$0xff] %v198
    %231 = vst [vmem:[#allocation2 + $0x50] sm:$0xff] %v199
    %232 = vst [vmem:[#allocation2 + $0x58] sm:$0xff] %v200
    %233 = vst [vmem:[#allocation2 + $0x60] sm:$0xff] %v201
    %234 = vst [vmem:[#allocation2 + $0x68] sm:$0xff] %v202
    %235 = vst [vmem:[#allocation2 + $0x70] sm:$0xff] %v203
    %236 = vst [vmem:[#allocation2 + $0x78] sm:$0xff] %v204
    %237 = vst [vmem:[#allocation2 + $0x80] sm:$0xff] %v205
    %238 = vst [vmem:[#allocation2 + $0x88] sm:$0xff] %v206
    %239 = vst [vmem:[#allocation2 + $0x90] sm:$0xff] %v207
    %240 = vst [vmem:[#allocation2 + $0x98] sm:$0xff] %v208
    %241 = vst [vmem:[#allocation2 + $0xa0] sm:$0xff] %v209
    %242 = vst [vmem:[#allocation2 + $0xa8] sm:$0xff] %v210
    %243 = vst [vmem:[#allocation2 + $0xb0] sm:$0xff] %v211
    %244 = vst [vmem:[#allocation2 + $0xb8] sm:$0xff] %v212
    %245 = vst [vmem:[#allocation2 + $0xc0] sm:$0xff] %v213
    %246 = vst [vmem:[#allocation2 + $0xc8] sm:$0xff] %v214
    %247 = vst [vmem:[#allocation2 + $0xd0] sm:$0xff] %v215
    %248 = vst [vmem:[#allocation2 + $0xd8] sm:$0xff] %v216
    %249 = vst [vmem:[#allocation2 + $0xe0] sm:$0xff] %v217
    %250 = vst [vmem:[#allocation2 + $0xe8] sm:$0xff] %v218
    %251 = vst [vmem:[#allocation2 + $0xf0] sm:$0xff] %v219
    %252 = vst [vmem:[#allocation2 + $0xf8] sm:$0xff] %v220
    %v253 = vlaneseq
    %v254 = vshrl.u32 %v253, 7
    %v255 = vadd.s32 %v254, 8
    %v256 = vadd.s32 %v254, 16
    %v257 = vadd.s32 %v254, 24
    %v258 = vadd.s32 %v254, 32
    %v259 = vadd.s32 %v254, 40
    %v260 = vadd.s32 %v254, 48
    %v261 = vadd.s32 %v254, 56
    %v262 = vlaneseq
    %v263 = vand.u32 %v262, 127
    %v264 = vmul.u32 %v254, 2654435761
    %v265 = vmul.u32 %v255, 2654435761
    %v266 = vmul.u32 %v256, 2654435761
    %v267 = vmul.u32 %v257, 2654435761
    %v268 = vmul.u32 %v258, 2654435761
    %v269 = vmul.u32 %v259, 2654435761
    %v270 = vmul.u32 %v260, 2654435761
    %v271 = vmul.u32 %v261, 2654435761
    %v272 = vmul.u32 %v263, 2246822507
    %v273 = vxor.u32 %v264, %v272
    %v274 = vxor.u32 %v265, %v272
    %v275 = vxor.u32 %v266, %v272
    %v276 = vxor.u32 %v267, %v272
    %v277 = vxor.u32 %v268, %v272
    %v278 = vxor.u32 %v269, %v272
    %v279 = vxor.u32 %v270, %v272
    %v280 = vxor.u32 %v271, %v272
    %s281 = smul.u32 %s64, 668265263
    %v282 = vstv %s281
    %v283 = vxor.u32 %v273, %v282
    %v284 = vxor.u32 %v274, %v282
    %v285 = vxor.u32 %v275, %v282
    %v286 = vxor.u32 %v276, %v282
    %v287 = vxor.u32 %v277, %v282
    %v288 = vxor.u32 %v278, %v282
    %v289 = vxor.u32 %v279, %v282
    %v290 = vxor.u32 %v280, %v282
    %v291 = vshrl.u32 %v283, 16
    %v292 = vshrl.u32 %v284, 16
    %v293 = vshrl.u32 %v285, 16
    %v294 = vshrl.u32 %v286, 16
    %v295 = vshrl.u32 %v287, 16
    %v296 = vshrl.u32 %v288, 16
    %v297 = vshrl.u32 %v289, 16
    %v298 = vshrl.u32 %v290, 16
    %v299 = vxor.u32 %v283, %v291
    %v300 = vxor.u32 %v284, %v292
    %v301 = vxor.u32 %v285, %v293
    %v302 = vxor.u32 %v286, %v294
    %v303 = vxor.u32 %v287, %v295
    %v304 = vxor.u32 %v288, %v296
    %v305 = vxor.u32 %v289, %v297
    %v306 = vxor.u32 %v290, %v298
    %v307 = vmul.u32 %v299, 2146121005
    %v308 = vmul.u32 %v300, 2146121005
    %v309 = vmul.u32 %v301, 2146121005
    %v310 = vmul.u32 %v302, 2146121005
    %v311 = vmul.u32 %v303, 2146121005
    %v312 = vmul.u32 %v304, 2146121005
    %v313 = vmul.u32 %v305, 2146121005
    %v314 = vmul.u32 %v306, 2146121005
    %v315 = vshrl.u32 %v307, 15
    %v316 = vshrl.u32 %v308, 15
    %v317 = vshrl.u32 %v309, 15
    %v318 = vshrl.u32 %v310, 15
    %v319 = vshrl.u32 %v311, 15
    %v320 = vshrl.u32 %v312, 15
    %v321 = vshrl.u32 %v313, 15
    %v322 = vshrl.u32 %v314, 15
    %v323 = vxor.u32 %v307, %v315
    %v324 = vxor.u32 %v308, %v316
    %v325 = vxor.u32 %v309, %v317
    %v326 = vxor.u32 %v310, %v318
    %v327 = vxor.u32 %v311, %v319
    %v328 = vxor.u32 %v312, %v320
    %v329 = vxor.u32 %v313, %v321
    %v330 = vxor.u32 %v314, %v322
    %v331 = vmul.u32 %v323, 2221713035
    %v332 = vmul.u32 %v324, 2221713035
    %v333 = vmul.u32 %v325, 2221713035
    %v334 = vmul.u32 %v326, 2221713035
    %v335 = vmul.u32 %v327, 2221713035
    %v336 = vmul.u32 %v328, 2221713035
    %v337 = vmul.u32 %v329, 2221713035
    %v338 = vmul.u32 %v330, 2221713035
    %v339 = vshrl.u32 %v331, 16
    %v340 = vshrl.u32 %v332, 16
    %v341 = vshrl.u32 %v333, 16
    %v342 = vshrl.u32 %v334, 16
    %v343 = vshrl.u32 %v335, 16
    %v344 = vshrl.u32 %v336, 16
    %v345 = vshrl.u32 %v337, 16
    %v346 = vshrl.u32 %v338, 16
    %v347 = vxor.u32 %v331, %v339
    %v348 = vxor.u32 %v332, %v340
    %v349 = vxor.u32 %v333, %v341
    %v350 = vxor.u32 %v334, %v342
    %v351 = vxor.u32 %v335, %v343
    %v352 = vxor.u32 %v336, %v344
    %v353 = vxor.u32 %v337, %v345
    %v354 = vxor.u32 %v338, %v346
    %vm355 = vcmp.ge.s32.totalorder %v347, 0
    %vm356 = vcmp.ge.s32.totalorder %v348, 0
    %vm357 = vcmp.ge.s32.totalorder %v349, 0
    %vm358 = vcmp.ge.s32.totalorder %v350, 0
    %vm359 = vcmp.ge.s32.totalorder %v351, 0
    %vm360 = vcmp.ge.s32.totalorder %v352, 0
    %vm361 = vcmp.ge.s32.totalorder %v353, 0
    %vm362 = vcmp.ge.s32.totalorder %v354, 0
    %v363 = vsel %vm355, 2.0, 0.0
    %v364 = vsel %vm356, 2.0, 0.0
    %v365 = vsel %vm357, 2.0, 0.0
    %v366 = vsel %vm358, 2.0, 0.0
    %v367 = vsel %vm359, 2.0, 0.0
    %v368 = vsel %vm360, 2.0, 0.0
    %v369 = vsel %vm361, 2.0, 0.0
    %v370 = vsel %vm362, 2.0, 0.0
    %371 = vst [vmem:[#allocation3] sm:$0xff] %v363
    %372 = vst [vmem:[#allocation3 + $0x8] sm:$0xff] %v364
    %373 = vst [vmem:[#allocation3 + $0x10] sm:$0xff] %v365
    %374 = vst [vmem:[#allocation3 + $0x18] sm:$0xff] %v366
    %375 = vst [vmem:[#allocation3 + $0x20] sm:$0xff] %v367
    %376 = vst [vmem:[#allocation3 + $0x28] sm:$0xff] %v368
    %377 = vst [vmem:[#allocation3 + $0x30] sm:$0xff] %v369
    %378 = vst [vmem:[#allocation3 + $0x38] sm:$0xff] %v370
    %s379 = smul.u32 0, 4
    %s380 = smul.addr %s379, 8
    %s381 = scalar_lea.vmem [#allocation2], %s380
    %v382 = vld [vmem:[%s381] sm:$0xff]
    %v383 = vld [vmem:[%s381 + $0x8] sm:$0xff]
    %v384 = vld [vmem:[%s381 + $0x10] sm:$0xff]
    %v385 = vld [vmem:[%s381 + $0x18] sm:$0xff]
    %v386 = vld [vmem:[#allocation6] sm:$0xff]
    %v387 = vld [vmem:[#allocation6 + $0x8] sm:$0xff]
    %v388 = vld [vmem:[#allocation6 + $0x10] sm:$0xff]
    %v389 = vld [vmem:[#allocation6 + $0x18] sm:$0xff]
    %v390 = vld [vmem:[#allocation6 + $0x20] sm:$0xff]
    %v391 = vld [vmem:[#allocation6 + $0x28] sm:$0xff]
    %v392 = vld [vmem:[#allocation6 + $0x30] sm:$0xff]
    %v393 = vld [vmem:[#allocation6 + $0x38] sm:$0xff]
    %v394 = vld [vmem:[#allocation6 + $0x40] sm:$0xff]
    %v395 = vld [vmem:[#allocation6 + $0x48] sm:$0xff]
    %v396 = vld [vmem:[#allocation6 + $0x50] sm:$0xff]
    %v397 = vld [vmem:[#allocation6 + $0x58] sm:$0xff]
    %v398 = vld [vmem:[#allocation6 + $0x60] sm:$0xff]
    %v399 = vld [vmem:[#allocation6 + $0x68] sm:$0xff]
    %v400 = vld [vmem:[#allocation6 + $0x70] sm:$0xff]
    %v401 = vld [vmem:[#allocation6 + $0x78] sm:$0xff]
    %v402 = vld [vmem:[#allocation6 + $0x80] sm:$0xff]
    %v403 = vld [vmem:[#allocation6 + $0x88] sm:$0xff]
    %v404 = vld [vmem:[#allocation6 + $0x90] sm:$0xff]
    %v405 = vld [vmem:[#allocation6 + $0x98] sm:$0xff]
    %v406 = vld [vmem:[#allocation6 + $0xa0] sm:$0xff]
    %v407 = vld [vmem:[#allocation6 + $0xa8] sm:$0xff]
    %v408 = vld [vmem:[#allocation6 + $0xb0] sm:$0xff]
    %v409 = vld [vmem:[#allocation6 + $0xb8] sm:$0xff]
    %v410 = vld [vmem:[#allocation6 + $0xc0] sm:$0xff]
    %v411 = vld [vmem:[#allocation6 + $0xc8] sm:$0xff]
    %v412 = vld [vmem:[#allocation6 + $0xd0] sm:$0xff]
    %v413 = vld [vmem:[#allocation6 + $0xd8] sm:$0xff]
    %v414 = vld [vmem:[#allocation6 + $0xe0] sm:$0xff]
    %v415 = vld [vmem:[#allocation6 + $0xe8] sm:$0xff]
    %v416 = vld [vmem:[#allocation6 + $0xf0] sm:$0xff]
    %v417 = vld [vmem:[#allocation6 + $0xf8] sm:$0xff]
    %v450 = vunpack.c.l.b16 %v386
    %v451 = vunpack.c.h.b16 %v386
    %v452 = vunpack.c.l.b16 %v387
    %v453 = vunpack.c.h.b16 %v387
    %v454 = vunpack.c.l.b16 %v388
    %v455 = vunpack.c.h.b16 %v388
    %v456 = vunpack.c.l.b16 %v389
    %v457 = vunpack.c.h.b16 %v389
    %v458 = vunpack.c.l.b16 %v390
    %v459 = vunpack.c.h.b16 %v390
    %v460 = vunpack.c.l.b16 %v391
    %v461 = vunpack.c.h.b16 %v391
    %v462 = vunpack.c.l.b16 %v392
    %v463 = vunpack.c.h.b16 %v392
    %v464 = vunpack.c.l.b16 %v393
    %v465 = vunpack.c.h.b16 %v393
    %v466 = vunpack.c.l.b16 %v394
    %v467 = vunpack.c.h.b16 %v394
    %v468 = vunpack.c.l.b16 %v395
    %v469 = vunpack.c.h.b16 %v395
    %v470 = vunpack.c.l.b16 %v396
    %v471 = vunpack.c.h.b16 %v396
    %v472 = vunpack.c.l.b16 %v397
    %v473 = vunpack.c.h.b16 %v397
    %v474 = vunpack.c.l.b16 %v398
    %v475 = vunpack.c.h.b16 %v398
    %v476 = vunpack.c.l.b16 %v399
    %v477 = vunpack.c.h.b16 %v399
    %v478 = vunpack.c.l.b16 %v400
    %v479 = vunpack.c.h.b16 %v400
    %v480 = vunpack.c.l.b16 %v401
    %v481 = vunpack.c.h.b16 %v401
    %v482 = vunpack.c.l.b16 %v402
    %v483 = vunpack.c.h.b16 %v402
    %v484 = vunpack.c.l.b16 %v403
    %v485 = vunpack.c.h.b16 %v403
    %v486 = vunpack.c.l.b16 %v404
    %v487 = vunpack.c.h.b16 %v404
    %v488 = vunpack.c.l.b16 %v405
    %v489 = vunpack.c.h.b16 %v405
    %v490 = vunpack.c.l.b16 %v406
    %v491 = vunpack.c.h.b16 %v406
    %v492 = vunpack.c.l.b16 %v407
    %v493 = vunpack.c.h.b16 %v407
    %v494 = vunpack.c.l.b16 %v408
    %v495 = vunpack.c.h.b16 %v408
    %v496 = vunpack.c.l.b16 %v409
    %v497 = vunpack.c.h.b16 %v409
    %v498 = vunpack.c.l.b16 %v410
    %v499 = vunpack.c.h.b16 %v410
    %v500 = vunpack.c.l.b16 %v411
    %v501 = vunpack.c.h.b16 %v411
    %v502 = vunpack.c.l.b16 %v412
    %v503 = vunpack.c.h.b16 %v412
    %v504 = vunpack.c.l.b16 %v413
    %v505 = vunpack.c.h.b16 %v413
    %v506 = vunpack.c.l.b16 %v414
    %v507 = vunpack.c.h.b16 %v414
    %v508 = vunpack.c.l.b16 %v415
    %v509 = vunpack.c.h.b16 %v415
    %v510 = vunpack.c.l.b16 %v416
    %v511 = vunpack.c.h.b16 %v416
    %v512 = vunpack.c.l.b16 %v417
    %v513 = vunpack.c.h.b16 %v417
    %v514 = vpack.c.b16 %v454, %v450
    %v515 = vpack.c.b16 %v455, %v451
    %v516 = vpack.c.b16 %v456, %v452
    %v517 = vpack.c.b16 %v457, %v453
    %v518 = vpack.c.b16 %v462, %v458
    %v519 = vpack.c.b16 %v463, %v459
    %v520 = vpack.c.b16 %v464, %v460
    %v521 = vpack.c.b16 %v465, %v461
    %v522 = vpack.c.b16 %v470, %v466
    %v523 = vpack.c.b16 %v471, %v467
    %v524 = vpack.c.b16 %v472, %v468
    %v525 = vpack.c.b16 %v473, %v469
    %v526 = vpack.c.b16 %v478, %v474
    %v527 = vpack.c.b16 %v479, %v475
    %v528 = vpack.c.b16 %v480, %v476
    %v529 = vpack.c.b16 %v481, %v477
    %v530 = vpack.c.b16 %v486, %v482
    %v531 = vpack.c.b16 %v487, %v483
    %v532 = vpack.c.b16 %v488, %v484
    %v533 = vpack.c.b16 %v489, %v485
    %v534 = vpack.c.b16 %v494, %v490
    %v535 = vpack.c.b16 %v495, %v491
    %v536 = vpack.c.b16 %v496, %v492
    %v537 = vpack.c.b16 %v497, %v493
    %v538 = vpack.c.b16 %v502, %v498
    %v539 = vpack.c.b16 %v503, %v499
    %v540 = vpack.c.b16 %v504, %v500
    %v541 = vpack.c.b16 %v505, %v501
    %v542 = vpack.c.b16 %v510, %v506
    %v543 = vpack.c.b16 %v511, %v507
    %v544 = vpack.c.b16 %v512, %v508
    %v545 = vpack.c.b16 %v513, %v509
    %578 = vmatprep.subr.bf16.mxu0 %v515
    %579 = vmatpush1.bf16.msra.mxu0 %v514
    %580 = vmatprep.subr.bf16.mxu0 %v519
    %581 = vmatpush1.bf16.msra.mxu0 %v518
    %582 = vmatprep.subr.bf16.mxu0 %v523
    %583 = vmatpush1.bf16.msra.mxu0 %v522
    %584 = vmatprep.subr.bf16.mxu0 %v527
    %585 = vmatpush1.bf16.msra.mxu0 %v526
    %586 = vmatprep.subr.bf16.mxu0 %v531
    %587 = vmatpush1.bf16.msra.mxu0 %v530
    %588 = vmatprep.subr.bf16.mxu0 %v535
    %589 = vmatpush1.bf16.msra.mxu0 %v534
    %590 = vmatprep.subr.bf16.mxu0 %v539
    %591 = vmatpush1.bf16.msra.mxu0 %v538
    %592 = vmatprep.subr.bf16.mxu0 %v543
    %593 = vmatpush1.bf16.msra.mxu0 %v542
    %594 = vmatprep.subr.bf16.mxu0 0
    %595 = vmatpush1.bf16.msra.mxu0 0
    %596 = vmatprep.subr.bf16.mxu0 0
    %597 = vmatpush1.bf16.msra.mxu0 0
    %598 = vmatprep.subr.bf16.mxu0 0
    %599 = vmatpush1.bf16.msra.mxu0 0
    %600 = vmatprep.subr.bf16.mxu0 0
    %601 = vmatpush1.bf16.msra.mxu0 0
    %602 = vmatprep.subr.bf16.mxu0 0
    %603 = vmatpush1.bf16.msra.mxu0 0
    %604 = vmatprep.subr.bf16.mxu0 0
    %605 = vmatpush1.bf16.msra.mxu0 0
    %606 = vmatprep.subr.bf16.mxu0 0
    %607 = vmatpush1.bf16.msra.mxu0 0
    %608 = vmatprep.subr.bf16.mxu0 0
    %609 = vmatpush1.bf16.msra.mxu0 0
    %610 = vmatprep.mubr.bf16.mxu0 0
    %611 = vmatmul.mubr.bf16.gmra.mrb[0].mxu0 0
    %v612 = vpop.f32.mrb[0].mxu0
    %v613 = vadd.f32 0.0, %v612
    %v614 = vpop.f32.mrb[0].mxu0
    %v615 = vadd.f32 0.0, %v614
    %v616 = vpop.f32.mrb[0].mxu0
    %v617 = vpop.f32.mrb[0].mxu0
    %618 = vdwg.mxu0
    %619 = vmatprep.subr.bf16.mxu0 %v517
    %620 = vmatpush1.bf16.msra.mxu0 %v516
    %621 = vmatprep.subr.bf16.mxu0 %v521
    %622 = vmatpush1.bf16.msra.mxu0 %v520
    %623 = vmatprep.subr.bf16.mxu0 %v525
    %624 = vmatpush1.bf16.msra.mxu0 %v524
    %625 = vmatprep.subr.bf16.mxu0 %v529
    %626 = vmatpush1.bf16.msra.mxu0 %v528
    %627 = vmatprep.subr.bf16.mxu0 %v533
    %628 = vmatpush1.bf16.msra.mxu0 %v532
    %629 = vmatprep.subr.bf16.mxu0 %v537
    %630 = vmatpush1.bf16.msra.mxu0 %v536
    %631 = vmatprep.subr.bf16.mxu0 %v541
    %632 = vmatpush1.bf16.msra.mxu0 %v540
    %633 = vmatprep.subr.bf16.mxu0 %v545
    %634 = vmatpush1.bf16.msra.mxu0 %v544
    %635 = vmatprep.subr.bf16.mxu0 0
    %636 = vmatpush1.bf16.msra.mxu0 0
    %637 = vmatprep.subr.bf16.mxu0 0
    %638 = vmatpush1.bf16.msra.mxu0 0
    %639 = vmatprep.subr.bf16.mxu0 0
    %640 = vmatpush1.bf16.msra.mxu0 0
    %641 = vmatprep.subr.bf16.mxu0 0
    %642 = vmatpush1.bf16.msra.mxu0 0
    %643 = vmatprep.subr.bf16.mxu0 0
    %644 = vmatpush1.bf16.msra.mxu0 0
    %645 = vmatprep.subr.bf16.mxu0 0
    %646 = vmatpush1.bf16.msra.mxu0 0
    %647 = vmatprep.subr.bf16.mxu0 0
    %648 = vmatpush1.bf16.msra.mxu0 0
    %649 = vmatprep.subr.bf16.mxu0 0
    %650 = vmatpush1.bf16.msra.mxu0 0
    %651 = vmatprep.mubr.bf16.mxu0 0
    %652 = vmatmul.mubr.bf16.gmra.mrb[0].mxu0 0
    %v653 = vpop.f32.mrb[0].mxu0
    %v654 = vadd.f32 0.0, %v653
    %v655 = vpop.f32.mrb[0].mxu0
    %v656 = vadd.f32 0.0, %v655
    %v657 = vpop.f32.mrb[0].mxu0
    %v658 = vpop.f32.mrb[0].mxu0
    %659 = vdwg.mxu0
    %v660 = vadd.f32 %v382, %v613
    %v661 = vadd.f32 %v383, %v615
    %v662 = vadd.f32 %v384, %v654
    %v663 = vadd.f32 %v385, %v656
    %v664 = vmul.f32 %v660, 0.5
    %v665 = vmul.f32 %v661, 0.5
    %v666 = vmul.f32 %v662, 0.5
    %v667 = vtanh.pop %v664
    %v668 = vtanh.pop %v665
    %v669 = vtanh.pop %v666
    %v670 = vmul.f32 %v667, 0.5
    %v671 = vmul.f32 %v668, 0.5
    %v672 = vmul.f32 %v669, 0.5
    %v673 = vadd.f32 %v670, 0.5
    %v674 = vadd.f32 %v671, 0.5
    %v675 = vadd.f32 %v672, 0.5
    %v676 = vtanh.pop %v663
    %v677 = vmul.f32 %v674, 0.0
    %v678 = vmul.f32 %v673, %v676
    %v679 = vadd.f32 %v677, %v678
    %v680 = vtanh.pop %v679
    %v681 = vmul.f32 %v675, %v680
    %v682 = vld [vmem:[#allocation3] sm:$0xff]
    %v683 = vmul.f32 %v681, %v682
    %v684 = vpack.c.bf16 %v683, %v683
    %v685 = vld [vmem:[#allocation8] sm:$0xff]
    %v686 = vld [vmem:[#allocation8 + $0x8] sm:$0xff]
    %v687 = vld [vmem:[#allocation8 + $0x10] sm:$0xff]
    %v688 = vld [vmem:[#allocation8 + $0x18] sm:$0xff]
    %v689 = vld [vmem:[#allocation8 + $0x20] sm:$0xff]
    %v690 = vld [vmem:[#allocation8 + $0x28] sm:$0xff]
    %v691 = vld [vmem:[#allocation8 + $0x30] sm:$0xff]
    %v692 = vld [vmem:[#allocation8 + $0x38] sm:$0xff]
    %v693 = vld [vmem:[#allocation8 + $0x40] sm:$0xff]
    %v694 = vld [vmem:[#allocation8 + $0x48] sm:$0xff]
    %v695 = vld [vmem:[#allocation8 + $0x50] sm:$0xff]
    %v696 = vld [vmem:[#allocation8 + $0x58] sm:$0xff]
    %v697 = vld [vmem:[#allocation8 + $0x60] sm:$0xff]
    %v698 = vld [vmem:[#allocation8 + $0x68] sm:$0xff]
    %v699 = vld [vmem:[#allocation8 + $0x70] sm:$0xff]
    %v700 = vld [vmem:[#allocation8 + $0x78] sm:$0xff]
    %v701 = vld [vmem:[#allocation8 + $0x80] sm:$0xff]
    %v702 = vld [vmem:[#allocation8 + $0x88] sm:$0xff]
    %v703 = vld [vmem:[#allocation8 + $0x90] sm:$0xff]
    %v704 = vld [vmem:[#allocation8 + $0x98] sm:$0xff]
    %v705 = vld [vmem:[#allocation8 + $0xa0] sm:$0xff]
    %v706 = vld [vmem:[#allocation8 + $0xa8] sm:$0xff]
    %v707 = vld [vmem:[#allocation8 + $0xb0] sm:$0xff]
    %v708 = vld [vmem:[#allocation8 + $0xb8] sm:$0xff]
    %v709 = vld [vmem:[#allocation8 + $0xc0] sm:$0xff]
    %v710 = vld [vmem:[#allocation8 + $0xc8] sm:$0xff]
    %v711 = vld [vmem:[#allocation8 + $0xd0] sm:$0xff]
    %v712 = vld [vmem:[#allocation8 + $0xd8] sm:$0xff]
    %v713 = vld [vmem:[#allocation8 + $0xe0] sm:$0xff]
    %v714 = vld [vmem:[#allocation8 + $0xe8] sm:$0xff]
    %v715 = vld [vmem:[#allocation8 + $0xf0] sm:$0xff]
    %v716 = vld [vmem:[#allocation8 + $0xf8] sm:$0xff]
    %v717 = vld [vmem:[#allocation8 + $0x100] sm:$0xff]
    %v718 = vld [vmem:[#allocation8 + $0x108] sm:$0xff]
    %v719 = vld [vmem:[#allocation8 + $0x110] sm:$0xff]
    %v720 = vld [vmem:[#allocation8 + $0x118] sm:$0xff]
    %v721 = vld [vmem:[#allocation8 + $0x120] sm:$0xff]
    %v722 = vld [vmem:[#allocation8 + $0x128] sm:$0xff]
    %v723 = vld [vmem:[#allocation8 + $0x130] sm:$0xff]
    %v724 = vld [vmem:[#allocation8 + $0x138] sm:$0xff]
    %v725 = vld [vmem:[#allocation8 + $0x140] sm:$0xff]
    %v726 = vld [vmem:[#allocation8 + $0x148] sm:$0xff]
    %v727 = vld [vmem:[#allocation8 + $0x150] sm:$0xff]
    %v728 = vld [vmem:[#allocation8 + $0x158] sm:$0xff]
    %v729 = vld [vmem:[#allocation8 + $0x160] sm:$0xff]
    %v730 = vld [vmem:[#allocation8 + $0x168] sm:$0xff]
    %v731 = vld [vmem:[#allocation8 + $0x170] sm:$0xff]
    %v732 = vld [vmem:[#allocation8 + $0x178] sm:$0xff]
    %v733 = vld [vmem:[#allocation8 + $0x180] sm:$0xff]
    %v734 = vld [vmem:[#allocation8 + $0x188] sm:$0xff]
    %v735 = vld [vmem:[#allocation8 + $0x190] sm:$0xff]
    %v736 = vld [vmem:[#allocation8 + $0x198] sm:$0xff]
    %v737 = vld [vmem:[#allocation8 + $0x1a0] sm:$0xff]
    %v738 = vld [vmem:[#allocation8 + $0x1a8] sm:$0xff]
    %v739 = vld [vmem:[#allocation8 + $0x1b0] sm:$0xff]
    %v740 = vld [vmem:[#allocation8 + $0x1b8] sm:$0xff]
    %v741 = vld [vmem:[#allocation8 + $0x1c0] sm:$0xff]
    %v742 = vld [vmem:[#allocation8 + $0x1c8] sm:$0xff]
    %v743 = vld [vmem:[#allocation8 + $0x1d0] sm:$0xff]
    %v744 = vld [vmem:[#allocation8 + $0x1d8] sm:$0xff]
    %v745 = vld [vmem:[#allocation8 + $0x1e0] sm:$0xff]
    %v746 = vld [vmem:[#allocation8 + $0x1e8] sm:$0xff]
    %v747 = vld [vmem:[#allocation8 + $0x1f0] sm:$0xff]
    %v748 = vld [vmem:[#allocation8 + $0x1f8] sm:$0xff]
    %v749 = vld [vmem:[%s6] sm:$0xf]
    %v751 = vlaneseq
    %v752 = vshrl.u32 %v751, 7
    %v753 = vsub.s32 0, %v752
    %v754 = vrot.slane %v749, %v753
    %v755 = vlaneseq
    %v756 = vshrl.u32 %v755, 7
    %v757 = vsub.s32 1, %v756
    %v758 = vrot.slane %v749, %v757
    %v759 = vlaneseq
    %v760 = vshrl.u32 %v759, 7
    %v761 = vsub.s32 2, %v760
    %v762 = vrot.slane %v749, %v761
    %v763 = vlaneseq
    %v764 = vshrl.u32 %v763, 7
    %v765 = vsub.s32 3, %v764
    %v766 = vrot.slane %v749, %v765
    %v835 = vunpack.c.l.b16 %v685
    %v836 = vunpack.c.h.b16 %v685
    %v837 = vunpack.c.l.b16 %v686
    %v838 = vunpack.c.h.b16 %v686
    %v839 = vunpack.c.l.b16 %v687
    %v840 = vunpack.c.h.b16 %v687
    %v841 = vunpack.c.l.b16 %v688
    %v842 = vunpack.c.h.b16 %v688
    %v843 = vunpack.c.l.b16 %v689
    %v844 = vunpack.c.h.b16 %v689
    %v845 = vunpack.c.l.b16 %v690
    %v846 = vunpack.c.h.b16 %v690
    %v847 = vunpack.c.l.b16 %v691
    %v848 = vunpack.c.h.b16 %v691
    %v849 = vunpack.c.l.b16 %v692
    %v850 = vunpack.c.h.b16 %v692
    %v851 = vunpack.c.l.b16 %v693
    %v852 = vunpack.c.h.b16 %v693
    %v853 = vunpack.c.l.b16 %v694
    %v854 = vunpack.c.h.b16 %v694
    %v855 = vunpack.c.l.b16 %v695
    %v856 = vunpack.c.h.b16 %v695
    %v857 = vunpack.c.l.b16 %v696
    %v858 = vunpack.c.h.b16 %v696
    %v859 = vunpack.c.l.b16 %v697
    %v860 = vunpack.c.h.b16 %v697
    %v861 = vunpack.c.l.b16 %v698
    %v862 = vunpack.c.h.b16 %v698
    %v863 = vunpack.c.l.b16 %v699
    %v864 = vunpack.c.h.b16 %v699
    %v865 = vunpack.c.l.b16 %v700
    %v866 = vunpack.c.h.b16 %v700
    %v867 = vunpack.c.l.b16 %v701
    %v868 = vunpack.c.h.b16 %v701
    %v869 = vunpack.c.l.b16 %v702
    %v870 = vunpack.c.h.b16 %v702
    %v871 = vunpack.c.l.b16 %v703
    %v872 = vunpack.c.h.b16 %v703
    %v873 = vunpack.c.l.b16 %v704
    %v874 = vunpack.c.h.b16 %v704
    %v875 = vunpack.c.l.b16 %v705
    %v876 = vunpack.c.h.b16 %v705
    %v877 = vunpack.c.l.b16 %v706
    %v878 = vunpack.c.h.b16 %v706
    %v879 = vunpack.c.l.b16 %v707
    %v880 = vunpack.c.h.b16 %v707
    %v881 = vunpack.c.l.b16 %v708
    %v882 = vunpack.c.h.b16 %v708
    %v883 = vunpack.c.l.b16 %v709
    %v884 = vunpack.c.h.b16 %v709
    %v885 = vunpack.c.l.b16 %v710
    %v886 = vunpack.c.h.b16 %v710
    %v887 = vunpack.c.l.b16 %v711
    %v888 = vunpack.c.h.b16 %v711
    %v889 = vunpack.c.l.b16 %v712
    %v890 = vunpack.c.h.b16 %v712
    %v891 = vunpack.c.l.b16 %v713
    %v892 = vunpack.c.h.b16 %v713
    %v893 = vunpack.c.l.b16 %v714
    %v894 = vunpack.c.h.b16 %v714
    %v895 = vunpack.c.l.b16 %v715
    %v896 = vunpack.c.h.b16 %v715
    %v897 = vunpack.c.l.b16 %v716
    %v898 = vunpack.c.h.b16 %v716
    %v899 = vunpack.c.l.b16 %v717
    %v900 = vunpack.c.h.b16 %v717
    %v901 = vunpack.c.l.b16 %v718
    %v902 = vunpack.c.h.b16 %v718
    %v903 = vunpack.c.l.b16 %v719
    %v904 = vunpack.c.h.b16 %v719
    %v905 = vunpack.c.l.b16 %v720
    %v906 = vunpack.c.h.b16 %v720
    %v907 = vunpack.c.l.b16 %v721
    %v908 = vunpack.c.h.b16 %v721
    %v909 = vunpack.c.l.b16 %v722
    %v910 = vunpack.c.h.b16 %v722
    %v911 = vunpack.c.l.b16 %v723
    %v912 = vunpack.c.h.b16 %v723
    %v913 = vunpack.c.l.b16 %v724
    %v914 = vunpack.c.h.b16 %v724
    %v915 = vunpack.c.l.b16 %v725
    %v916 = vunpack.c.h.b16 %v725
    %v917 = vunpack.c.l.b16 %v726
    %v918 = vunpack.c.h.b16 %v726
    %v919 = vunpack.c.l.b16 %v727
    %v920 = vunpack.c.h.b16 %v727
    %v921 = vunpack.c.l.b16 %v728
    %v922 = vunpack.c.h.b16 %v728
    %v923 = vunpack.c.l.b16 %v729
    %v924 = vunpack.c.h.b16 %v729
    %v925 = vunpack.c.l.b16 %v730
    %v926 = vunpack.c.h.b16 %v730
    %v927 = vunpack.c.l.b16 %v731
    %v928 = vunpack.c.h.b16 %v731
    %v929 = vunpack.c.l.b16 %v732
    %v930 = vunpack.c.h.b16 %v732
    %v931 = vunpack.c.l.b16 %v733
    %v932 = vunpack.c.h.b16 %v733
    %v933 = vunpack.c.l.b16 %v734
    %v934 = vunpack.c.h.b16 %v734
    %v935 = vunpack.c.l.b16 %v735
    %v936 = vunpack.c.h.b16 %v735
    %v937 = vunpack.c.l.b16 %v736
    %v938 = vunpack.c.h.b16 %v736
    %v939 = vunpack.c.l.b16 %v737
    %v940 = vunpack.c.h.b16 %v737
    %v941 = vunpack.c.l.b16 %v738
    %v942 = vunpack.c.h.b16 %v738
    %v943 = vunpack.c.l.b16 %v739
    %v944 = vunpack.c.h.b16 %v739
    %v945 = vunpack.c.l.b16 %v740
    %v946 = vunpack.c.h.b16 %v740
    %v947 = vunpack.c.l.b16 %v741
    %v948 = vunpack.c.h.b16 %v741
    %v949 = vunpack.c.l.b16 %v742
    %v950 = vunpack.c.h.b16 %v742
    %v951 = vunpack.c.l.b16 %v743
    %v952 = vunpack.c.h.b16 %v743
    %v953 = vunpack.c.l.b16 %v744
    %v954 = vunpack.c.h.b16 %v744
    %v955 = vunpack.c.l.b16 %v745
    %v956 = vunpack.c.h.b16 %v745
    %v957 = vunpack.c.l.b16 %v746
    %v958 = vunpack.c.h.b16 %v746
    %v959 = vunpack.c.l.b16 %v747
    %v960 = vunpack.c.h.b16 %v747
    %v961 = vunpack.c.l.b16 %v748
    %v962 = vunpack.c.h.b16 %v748
    %v963 = vpack.c.b16 %v839, %v835
    %v964 = vpack.c.b16 %v840, %v836
    %v965 = vpack.c.b16 %v841, %v837
    %v966 = vpack.c.b16 %v842, %v838
    %v967 = vpack.c.b16 %v847, %v843
    %v968 = vpack.c.b16 %v848, %v844
    %v969 = vpack.c.b16 %v849, %v845
    %v970 = vpack.c.b16 %v850, %v846
    %v971 = vpack.c.b16 %v855, %v851
    %v972 = vpack.c.b16 %v856, %v852
    %v973 = vpack.c.b16 %v857, %v853
    %v974 = vpack.c.b16 %v858, %v854
    %v975 = vpack.c.b16 %v863, %v859
    %v976 = vpack.c.b16 %v864, %v860
    %v977 = vpack.c.b16 %v865, %v861
    %v978 = vpack.c.b16 %v866, %v862
    %v979 = vpack.c.b16 %v871, %v867
    %v980 = vpack.c.b16 %v872, %v868
    %v981 = vpack.c.b16 %v873, %v869
    %v982 = vpack.c.b16 %v874, %v870
    %v983 = vpack.c.b16 %v879, %v875
    %v984 = vpack.c.b16 %v880, %v876
    %v985 = vpack.c.b16 %v881, %v877
    %v986 = vpack.c.b16 %v882, %v878
    %v987 = vpack.c.b16 %v887, %v883
    %v988 = vpack.c.b16 %v888, %v884
    %v989 = vpack.c.b16 %v889, %v885
    %v990 = vpack.c.b16 %v890, %v886
    %v991 = vpack.c.b16 %v895, %v891
    %v992 = vpack.c.b16 %v896, %v892
    %v993 = vpack.c.b16 %v897, %v893
    %v994 = vpack.c.b16 %v898, %v894
    %v995 = vpack.c.b16 %v903, %v899
    %v996 = vpack.c.b16 %v904, %v900
    %v997 = vpack.c.b16 %v905, %v901
    %v998 = vpack.c.b16 %v906, %v902
    %v999 = vpack.c.b16 %v911, %v907
    %v1000 = vpack.c.b16 %v912, %v908
    %v1001 = vpack.c.b16 %v913, %v909
    %v1002 = vpack.c.b16 %v914, %v910
    %v1003 = vpack.c.b16 %v919, %v915
    %v1004 = vpack.c.b16 %v920, %v916
    %v1005 = vpack.c.b16 %v921, %v917
    %v1006 = vpack.c.b16 %v922, %v918
    %v1007 = vpack.c.b16 %v927, %v923
    %v1008 = vpack.c.b16 %v928, %v924
    %v1009 = vpack.c.b16 %v929, %v925
    %v1010 = vpack.c.b16 %v930, %v926
    %v1011 = vpack.c.b16 %v935, %v931
    %v1012 = vpack.c.b16 %v936, %v932
    %v1013 = vpack.c.b16 %v937, %v933
    %v1014 = vpack.c.b16 %v938, %v934
    %v1015 = vpack.c.b16 %v943, %v939
    %v1016 = vpack.c.b16 %v944, %v940
    %v1017 = vpack.c.b16 %v945, %v941
    %v1018 = vpack.c.b16 %v946, %v942
    %v1019 = vpack.c.b16 %v951, %v947
    %v1020 = vpack.c.b16 %v952, %v948
    %v1021 = vpack.c.b16 %v953, %v949
    %v1022 = vpack.c.b16 %v954, %v950
    %v1023 = vpack.c.b16 %v959, %v955
    %v1024 = vpack.c.b16 %v960, %v956
    %v1025 = vpack.c.b16 %v961, %v957
    %v1026 = vpack.c.b16 %v962, %v958
    %1091 = vmatprep.subr.bf16.mxu0 %v964
    %1092 = vmatpush1.bf16.msra.mxu0 %v963
    %1093 = vmatprep.subr.bf16.mxu0 %v968
    %1094 = vmatpush1.bf16.msra.mxu0 %v967
    %1095 = vmatprep.subr.bf16.mxu0 %v972
    %1096 = vmatpush1.bf16.msra.mxu0 %v971
    %1097 = vmatprep.subr.bf16.mxu0 %v976
    %1098 = vmatpush1.bf16.msra.mxu0 %v975
    %1099 = vmatprep.subr.bf16.mxu0 %v980
    %1100 = vmatpush1.bf16.msra.mxu0 %v979
    %1101 = vmatprep.subr.bf16.mxu0 %v984
    %1102 = vmatpush1.bf16.msra.mxu0 %v983
    %1103 = vmatprep.subr.bf16.mxu0 %v988
    %1104 = vmatpush1.bf16.msra.mxu0 %v987
    %1105 = vmatprep.subr.bf16.mxu0 %v992
    %1106 = vmatpush1.bf16.msra.mxu0 %v991
    %1107 = vmatprep.subr.bf16.mxu0 %v996
    %1108 = vmatpush1.bf16.msra.mxu0 %v995
    %1109 = vmatprep.subr.bf16.mxu0 %v1000
    %1110 = vmatpush1.bf16.msra.mxu0 %v999
    %1111 = vmatprep.subr.bf16.mxu0 %v1004
    %1112 = vmatpush1.bf16.msra.mxu0 %v1003
    %1113 = vmatprep.subr.bf16.mxu0 %v1008
    %1114 = vmatpush1.bf16.msra.mxu0 %v1007
    %1115 = vmatprep.subr.bf16.mxu0 %v1012
    %1116 = vmatpush1.bf16.msra.mxu0 %v1011
    %1117 = vmatprep.subr.bf16.mxu0 %v1016
    %1118 = vmatpush1.bf16.msra.mxu0 %v1015
    %1119 = vmatprep.subr.bf16.mxu0 %v1020
    %1120 = vmatpush1.bf16.msra.mxu0 %v1019
    %1121 = vmatprep.subr.bf16.mxu0 %v1024
    %1122 = vmatpush1.bf16.msra.mxu0 %v1023
    %1123 = vmatprep.mubr.bf16.mxu0 0
    %1124 = vmatmul.mubr.bf16.gmra.mrb[0].mxu0 %v684
    %v1125 = vpop.f32.mrb[0].mxu0
    %v1126 = vadd.f32 %v754, %v1125
    %v1127 = vpop.f32.mrb[0].mxu0
    %v1128 = vadd.f32 %v758, %v1127
    %v1129 = vpop.f32.mrb[0].mxu0
    %v1130 = vpop.f32.mrb[0].mxu0
    %1131 = vdwg.mxu0
    %1132 = vmatprep.subr.bf16.mxu0 %v966
    %1133 = vmatpush1.bf16.msra.mxu0 %v965
    %1134 = vmatprep.subr.bf16.mxu0 %v970
    %1135 = vmatpush1.bf16.msra.mxu0 %v969
    %1136 = vmatprep.subr.bf16.mxu0 %v974
    %1137 = vmatpush1.bf16.msra.mxu0 %v973
    %1138 = vmatprep.subr.bf16.mxu0 %v978
    %1139 = vmatpush1.bf16.msra.mxu0 %v977
    %1140 = vmatprep.subr.bf16.mxu0 %v982
    %1141 = vmatpush1.bf16.msra.mxu0 %v981
    %1142 = vmatprep.subr.bf16.mxu0 %v986
    %1143 = vmatpush1.bf16.msra.mxu0 %v985
    %1144 = vmatprep.subr.bf16.mxu0 %v990
    %1145 = vmatpush1.bf16.msra.mxu0 %v989
    %1146 = vmatprep.subr.bf16.mxu0 %v994
    %1147 = vmatpush1.bf16.msra.mxu0 %v993
    %1148 = vmatprep.subr.bf16.mxu0 %v998
    %1149 = vmatpush1.bf16.msra.mxu0 %v997
    %1150 = vmatprep.subr.bf16.mxu0 %v1002
    %1151 = vmatpush1.bf16.msra.mxu0 %v1001
    %1152 = vmatprep.subr.bf16.mxu0 %v1006
    %1153 = vmatpush1.bf16.msra.mxu0 %v1005
    %1154 = vmatprep.subr.bf16.mxu0 %v1010
    %1155 = vmatpush1.bf16.msra.mxu0 %v1009
    %1156 = vmatprep.subr.bf16.mxu0 %v1014
    %1157 = vmatpush1.bf16.msra.mxu0 %v1013
    %1158 = vmatprep.subr.bf16.mxu0 %v1018
    %1159 = vmatpush1.bf16.msra.mxu0 %v1017
    %1160 = vmatprep.subr.bf16.mxu0 %v1022
    %1161 = vmatpush1.bf16.msra.mxu0 %v1021
    %1162 = vmatprep.subr.bf16.mxu0 %v1026
    %1163 = vmatpush1.bf16.msra.mxu0 %v1025
    %1164 = vmatprep.mubr.bf16.mxu0 0
    %1165 = vmatmul.mubr.bf16.gmra.mrb[0].mxu0 %v684
    %v1166 = vpop.f32.mrb[0].mxu0
    %v1167 = vadd.f32 %v762, %v1166
    %v1168 = vpop.f32.mrb[0].mxu0
    %v1169 = vadd.f32 %v766, %v1168
    %v1170 = vpop.f32.mrb[0].mxu0
    %v1171 = vpop.f32.mrb[0].mxu0
    %1172 = vdwg.mxu0
    %v1173 = vmul.f32 %v1126, 0.5
    %v1174 = vmul.f32 %v1128, 0.5
    %v1175 = vmul.f32 %v1167, 0.5
    %v1176 = vtanh.pop %v1173
    %v1177 = vtanh.pop %v1174
    %v1178 = vtanh.pop %v1175
    %v1179 = vmul.f32 %v1176, 0.5
    %v1180 = vmul.f32 %v1177, 0.5
    %v1181 = vmul.f32 %v1178, 0.5
    %v1182 = vadd.f32 %v1179, 0.5
    %v1183 = vadd.f32 %v1180, 0.5
    %v1184 = vadd.f32 %v1181, 0.5
    %v1185 = vtanh.pop %v1169
    %v1186 = vmul.f32 %v1183, 0.0
    %v1187 = vmul.f32 %v1182, %v1185
    %v1188 = vadd.f32 %v1186, %v1187
    %v1189 = vtanh.pop %v1188
    %v1190 = vmul.f32 %v1184, %v1189
    %s1191 = smul.u32 1, 4
    %s1192 = smul.addr %s1191, 8
    %s1193 = scalar_lea.vmem [#allocation2], %s1192
    %v1194 = vld [vmem:[%s1193] sm:$0xff]
    %v1195 = vld [vmem:[%s1193 + $0x8] sm:$0xff]
    %v1196 = vld [vmem:[%s1193 + $0x10] sm:$0xff]
    %v1197 = vld [vmem:[%s1193 + $0x18] sm:$0xff]
    %v1198 = vpack.c.bf16 %v681, %v681
    %1199 = vmatprep.subr.bf16.mxu0 %v515
    %1200 = vmatpush1.bf16.msra.mxu0 %v514
    %1201 = vmatprep.subr.bf16.mxu0 %v519
    %1202 = vmatpush1.bf16.msra.mxu0 %v518
    %1203 = vmatprep.subr.bf16.mxu0 %v523
    %1204 = vmatpush1.bf16.msra.mxu0 %v522
    %1205 = vmatprep.subr.bf16.mxu0 %v527
    %1206 = vmatpush1.bf16.msra.mxu0 %v526
    %1207 = vmatprep.subr.bf16.mxu0 %v531
    %1208 = vmatpush1.bf16.msra.mxu0 %v530
    %1209 = vmatprep.subr.bf16.mxu0 %v535
    %1210 = vmatpush1.bf16.msra.mxu0 %v534
    %1211 = vmatprep.subr.bf16.mxu0 %v539
    %1212 = vmatpush1.bf16.msra.mxu0 %v538
    %1213 = vmatprep.subr.bf16.mxu0 %v543
    %1214 = vmatpush1.bf16.msra.mxu0 %v542
    %1215 = vmatprep.subr.bf16.mxu0 0
    %1216 = vmatpush1.bf16.msra.mxu0 0
    %1217 = vmatprep.subr.bf16.mxu0 0
    %1218 = vmatpush1.bf16.msra.mxu0 0
    %1219 = vmatprep.subr.bf16.mxu0 0
    %1220 = vmatpush1.bf16.msra.mxu0 0
    %1221 = vmatprep.subr.bf16.mxu0 0
    %1222 = vmatpush1.bf16.msra.mxu0 0
    %1223 = vmatprep.subr.bf16.mxu0 0
    %1224 = vmatpush1.bf16.msra.mxu0 0
    %1225 = vmatprep.subr.bf16.mxu0 0
    %1226 = vmatpush1.bf16.msra.mxu0 0
    %1227 = vmatprep.subr.bf16.mxu0 0
    %1228 = vmatpush1.bf16.msra.mxu0 0
    %1229 = vmatprep.subr.bf16.mxu0 0
    %1230 = vmatpush1.bf16.msra.mxu0 0
    %1231 = vmatprep.mubr.bf16.mxu0 0
    %1232 = vmatmul.mubr.bf16.gmra.mrb[0].mxu0 %v1198
    %v1233 = vpop.f32.mrb[0].mxu0
    %v1234 = vadd.f32 0.0, %v1233
    %v1235 = vpop.f32.mrb[0].mxu0
    %v1236 = vadd.f32 0.0, %v1235
    %v1237 = vpop.f32.mrb[0].mxu0
    %v1238 = vpop.f32.mrb[0].mxu0
    %1239 = vdwg.mxu0
    %1240 = vmatprep.subr.bf16.mxu0 %v517
    %1241 = vmatpush1.bf16.msra.mxu0 %v516
    %1242 = vmatprep.subr.bf16.mxu0 %v521
    %1243 = vmatpush1.bf16.msra.mxu0 %v520
    %1244 = vmatprep.subr.bf16.mxu0 %v525
    %1245 = vmatpush1.bf16.msra.mxu0 %v524
    %1246 = vmatprep.subr.bf16.mxu0 %v529
    %1247 = vmatpush1.bf16.msra.mxu0 %v528
    %1248 = vmatprep.subr.bf16.mxu0 %v533
    %1249 = vmatpush1.bf16.msra.mxu0 %v532
    %1250 = vmatprep.subr.bf16.mxu0 %v537
    %1251 = vmatpush1.bf16.msra.mxu0 %v536
    %1252 = vmatprep.subr.bf16.mxu0 %v541
    %1253 = vmatpush1.bf16.msra.mxu0 %v540
    %1254 = vmatprep.subr.bf16.mxu0 %v545
    %1255 = vmatpush1.bf16.msra.mxu0 %v544
    %1256 = vmatprep.subr.bf16.mxu0 0
    %1257 = vmatpush1.bf16.msra.mxu0 0
    %1258 = vmatprep.subr.bf16.mxu0 0
    %1259 = vmatpush1.bf16.msra.mxu0 0
    %1260 = vmatprep.subr.bf16.mxu0 0
    %1261 = vmatpush1.bf16.msra.mxu0 0
    %1262 = vmatprep.subr.bf16.mxu0 0
    %1263 = vmatpush1.bf16.msra.mxu0 0
    %1264 = vmatprep.subr.bf16.mxu0 0
    %1265 = vmatpush1.bf16.msra.mxu0 0
    %1266 = vmatprep.subr.bf16.mxu0 0
    %1267 = vmatpush1.bf16.msra.mxu0 0
    %1268 = vmatprep.subr.bf16.mxu0 0
    %1269 = vmatpush1.bf16.msra.mxu0 0
    %1270 = vmatprep.subr.bf16.mxu0 0
    %1271 = vmatpush1.bf16.msra.mxu0 0
    %1272 = vmatprep.mubr.bf16.mxu0 0
    %1273 = vmatmul.mubr.bf16.gmra.mrb[0].mxu0 %v1198
    %v1274 = vpop.f32.mrb[0].mxu0
    %v1275 = vadd.f32 0.0, %v1274
    %v1276 = vpop.f32.mrb[0].mxu0
    %v1277 = vadd.f32 0.0, %v1276
    %v1278 = vpop.f32.mrb[0].mxu0
    %v1279 = vpop.f32.mrb[0].mxu0
    %1280 = vdwg.mxu0
    %v1281 = vadd.f32 %v1194, %v1234
    %v1282 = vadd.f32 %v1195, %v1236
    %v1283 = vadd.f32 %v1196, %v1275
    %v1284 = vadd.f32 %v1197, %v1277
    %v1285 = vmul.f32 %v1281, 0.5
    %v1286 = vmul.f32 %v1282, 0.5
    %v1287 = vmul.f32 %v1283, 0.5
    %v1288 = vtanh.pop %v1285
    %v1289 = vtanh.pop %v1286
    %v1290 = vtanh.pop %v1287
    %v1291 = vmul.f32 %v1288, 0.5
    %v1292 = vmul.f32 %v1289, 0.5
    %v1293 = vmul.f32 %v1290, 0.5
    %v1294 = vadd.f32 %v1291, 0.5
    %v1295 = vadd.f32 %v1292, 0.5
    %v1296 = vadd.f32 %v1293, 0.5
    %v1297 = vtanh.pop %v1284
    %v1298 = vmul.f32 %v1295, %v679
    %v1299 = vmul.f32 %v1294, %v1297
    %v1300 = vadd.f32 %v1298, %v1299
    %v1301 = vtanh.pop %v1300
    %v1302 = vmul.f32 %v1296, %v1301
    %s1303 = scalar_lea.vmem [#allocation3], 8
    %v1304 = vld [vmem:[%s1303] sm:$0xff]
    %v1305 = vmul.f32 %v1302, %v1304
    %v1306 = vpack.c.bf16 %v1305, %v1305
    %v1307 = vpack.c.bf16 %v1190, %v1190
    %1308 = vmatprep.subr.bf16.mxu0 %v964
    %1309 = vmatpush1.bf16.msra.mxu0 %v963
    %1310 = vmatprep.subr.bf16.mxu0 %v968
    %1311 = vmatpush1.bf16.msra.mxu0 %v967
    %1312 = vmatprep.subr.bf16.mxu0 %v972
    %1313 = vmatpush1.bf16.msra.mxu0 %v971
    %1314 = vmatprep.subr.bf16.mxu0 %v976
    %1315 = vmatpush1.bf16.msra.mxu0 %v975
    %1316 = vmatprep.subr.bf16.mxu0 %v980
    %1317 = vmatpush1.bf16.msra.mxu0 %v979
    %1318 = vmatprep.subr.bf16.mxu0 %v984
    %1319 = vmatpush1.bf16.msra.mxu0 %v983
    %1320 = vmatprep.subr.bf16.mxu0 %v988
    %1321 = vmatpush1.bf16.msra.mxu0 %v987
    %1322 = vmatprep.subr.bf16.mxu0 %v992
    %1323 = vmatpush1.bf16.msra.mxu0 %v991
    %1324 = vmatprep.subr.bf16.mxu0 %v996
    %1325 = vmatpush1.bf16.msra.mxu0 %v995
    %1326 = vmatprep.subr.bf16.mxu0 %v1000
    %1327 = vmatpush1.bf16.msra.mxu0 %v999
    %1328 = vmatprep.subr.bf16.mxu0 %v1004
    %1329 = vmatpush1.bf16.msra.mxu0 %v1003
    %1330 = vmatprep.subr.bf16.mxu0 %v1008
    %1331 = vmatpush1.bf16.msra.mxu0 %v1007
    %1332 = vmatprep.subr.bf16.mxu0 %v1012
    %1333 = vmatpush1.bf16.msra.mxu0 %v1011
    %1334 = vmatprep.subr.bf16.mxu0 %v1016
    %1335 = vmatpush1.bf16.msra.mxu0 %v1015
    %1336 = vmatprep.subr.bf16.mxu0 %v1020
    %1337 = vmatpush1.bf16.msra.mxu0 %v1019
    %1338 = vmatprep.subr.bf16.mxu0 %v1024
    %1339 = vmatpush1.bf16.msra.mxu0 %v1023
    %1340 = vmatprep.mubr.bf16.mxu0 %v1307
    %1341 = vmatmul.mubr.bf16.gmra.mrb[0].mxu0 %v1306
    %v1342 = vpop.f32.mrb[0].mxu0
    %v1343 = vadd.f32 %v754, %v1342
    %v1344 = vpop.f32.mrb[0].mxu0
    %v1345 = vadd.f32 %v758, %v1344
    %v1346 = vpop.f32.mrb[0].mxu0
    %v1347 = vpop.f32.mrb[0].mxu0
    %1348 = vdwg.mxu0
    %1349 = vmatprep.subr.bf16.mxu0 %v966
    %1350 = vmatpush1.bf16.msra.mxu0 %v965
    %1351 = vmatprep.subr.bf16.mxu0 %v970
    %1352 = vmatpush1.bf16.msra.mxu0 %v969
    %1353 = vmatprep.subr.bf16.mxu0 %v974
    %1354 = vmatpush1.bf16.msra.mxu0 %v973
    %1355 = vmatprep.subr.bf16.mxu0 %v978
    %1356 = vmatpush1.bf16.msra.mxu0 %v977
    %1357 = vmatprep.subr.bf16.mxu0 %v982
    %1358 = vmatpush1.bf16.msra.mxu0 %v981
    %1359 = vmatprep.subr.bf16.mxu0 %v986
    %1360 = vmatpush1.bf16.msra.mxu0 %v985
    %1361 = vmatprep.subr.bf16.mxu0 %v990
    %1362 = vmatpush1.bf16.msra.mxu0 %v989
    %1363 = vmatprep.subr.bf16.mxu0 %v994
    %1364 = vmatpush1.bf16.msra.mxu0 %v993
    %1365 = vmatprep.subr.bf16.mxu0 %v998
    %1366 = vmatpush1.bf16.msra.mxu0 %v997
    %1367 = vmatprep.subr.bf16.mxu0 %v1002
    %1368 = vmatpush1.bf16.msra.mxu0 %v1001
    %1369 = vmatprep.subr.bf16.mxu0 %v1006
    %1370 = vmatpush1.bf16.msra.mxu0 %v1005
    %1371 = vmatprep.subr.bf16.mxu0 %v1010
    %1372 = vmatpush1.bf16.msra.mxu0 %v1009
    %1373 = vmatprep.subr.bf16.mxu0 %v1014
    %1374 = vmatpush1.bf16.msra.mxu0 %v1013
    %1375 = vmatprep.subr.bf16.mxu0 %v1018
    %1376 = vmatpush1.bf16.msra.mxu0 %v1017
    %1377 = vmatprep.subr.bf16.mxu0 %v1022
    %1378 = vmatpush1.bf16.msra.mxu0 %v1021
    %1379 = vmatprep.subr.bf16.mxu0 %v1026
    %1380 = vmatpush1.bf16.msra.mxu0 %v1025
    %1381 = vmatprep.mubr.bf16.mxu0 %v1307
    %1382 = vmatmul.mubr.bf16.gmra.mrb[0].mxu0 %v1306
    %v1383 = vpop.f32.mrb[0].mxu0
    %v1384 = vadd.f32 %v762, %v1383
    %v1385 = vpop.f32.mrb[0].mxu0
    %v1386 = vadd.f32 %v766, %v1385
    %v1387 = vpop.f32.mrb[0].mxu0
    %v1388 = vpop.f32.mrb[0].mxu0
    %1389 = vdwg.mxu0
    %v1390 = vmul.f32 %v1343, 0.5
    %v1391 = vmul.f32 %v1345, 0.5
    %v1392 = vmul.f32 %v1384, 0.5
    %v1393 = vtanh.pop %v1390
    %v1394 = vtanh.pop %v1391
    %v1395 = vtanh.pop %v1392
    %v1396 = vmul.f32 %v1393, 0.5
    %v1397 = vmul.f32 %v1394, 0.5
    %v1398 = vmul.f32 %v1395, 0.5
    %v1399 = vadd.f32 %v1396, 0.5
    %v1400 = vadd.f32 %v1397, 0.5
    %v1401 = vadd.f32 %v1398, 0.5
    %v1402 = vtanh.pop %v1386
    %v1403 = vmul.f32 %v1400, %v1188
    %v1404 = vmul.f32 %v1399, %v1402
    %v1405 = vadd.f32 %v1403, %v1404
    %v1406 = vtanh.pop %v1405
    %v1407 = vmul.f32 %v1401, %v1406
    %s1408 = smul.u32 2, 4
    %s1409 = smul.addr %s1408, 8
    %s1410 = scalar_lea.vmem [#allocation2], %s1409
    %v1411 = vld [vmem:[%s1410] sm:$0xff]
    %v1412 = vld [vmem:[%s1410 + $0x8] sm:$0xff]
    %v1413 = vld [vmem:[%s1410 + $0x10] sm:$0xff]
    %v1414 = vld [vmem:[%s1410 + $0x18] sm:$0xff]
    %v1415 = vpack.c.bf16 %v1302, %v1302
    %1416 = vmatprep.subr.bf16.mxu0 %v515
    %1417 = vmatpush1.bf16.msra.mxu0 %v514
    %1418 = vmatprep.subr.bf16.mxu0 %v519
    %1419 = vmatpush1.bf16.msra.mxu0 %v518
    %1420 = vmatprep.subr.bf16.mxu0 %v523
    %1421 = vmatpush1.bf16.msra.mxu0 %v522
    %1422 = vmatprep.subr.bf16.mxu0 %v527
    %1423 = vmatpush1.bf16.msra.mxu0 %v526
    %1424 = vmatprep.subr.bf16.mxu0 %v531
    %1425 = vmatpush1.bf16.msra.mxu0 %v530
    %1426 = vmatprep.subr.bf16.mxu0 %v535
    %1427 = vmatpush1.bf16.msra.mxu0 %v534
    %1428 = vmatprep.subr.bf16.mxu0 %v539
    %1429 = vmatpush1.bf16.msra.mxu0 %v538
    %1430 = vmatprep.subr.bf16.mxu0 %v543
    %1431 = vmatpush1.bf16.msra.mxu0 %v542
    %1432 = vmatprep.subr.bf16.mxu0 0
    %1433 = vmatpush1.bf16.msra.mxu0 0
    %1434 = vmatprep.subr.bf16.mxu0 0
    %1435 = vmatpush1.bf16.msra.mxu0 0
    %1436 = vmatprep.subr.bf16.mxu0 0
    %1437 = vmatpush1.bf16.msra.mxu0 0
    %1438 = vmatprep.subr.bf16.mxu0 0
    %1439 = vmatpush1.bf16.msra.mxu0 0
    %1440 = vmatprep.subr.bf16.mxu0 0
    %1441 = vmatpush1.bf16.msra.mxu0 0
    %1442 = vmatprep.subr.bf16.mxu0 0
    %1443 = vmatpush1.bf16.msra.mxu0 0
    %1444 = vmatprep.subr.bf16.mxu0 0
    %1445 = vmatpush1.bf16.msra.mxu0 0
    %1446 = vmatprep.subr.bf16.mxu0 0
    %1447 = vmatpush1.bf16.msra.mxu0 0
    %1448 = vmatprep.mubr.bf16.mxu0 0
    %1449 = vmatmul.mubr.bf16.gmra.mrb[0].mxu0 %v1415
    %v1450 = vpop.f32.mrb[0].mxu0
    %v1451 = vadd.f32 0.0, %v1450
    %v1452 = vpop.f32.mrb[0].mxu0
    %v1453 = vadd.f32 0.0, %v1452
    %v1454 = vpop.f32.mrb[0].mxu0
    %v1455 = vpop.f32.mrb[0].mxu0
    %1456 = vdwg.mxu0
    %1457 = vmatprep.subr.bf16.mxu0 %v517
    %1458 = vmatpush1.bf16.msra.mxu0 %v516
    %1459 = vmatprep.subr.bf16.mxu0 %v521
    %1460 = vmatpush1.bf16.msra.mxu0 %v520
    %1461 = vmatprep.subr.bf16.mxu0 %v525
    %1462 = vmatpush1.bf16.msra.mxu0 %v524
    %1463 = vmatprep.subr.bf16.mxu0 %v529
    %1464 = vmatpush1.bf16.msra.mxu0 %v528
    %1465 = vmatprep.subr.bf16.mxu0 %v533
    %1466 = vmatpush1.bf16.msra.mxu0 %v532
    %1467 = vmatprep.subr.bf16.mxu0 %v537
    %1468 = vmatpush1.bf16.msra.mxu0 %v536
    %1469 = vmatprep.subr.bf16.mxu0 %v541
    %1470 = vmatpush1.bf16.msra.mxu0 %v540
    %1471 = vmatprep.subr.bf16.mxu0 %v545
    %1472 = vmatpush1.bf16.msra.mxu0 %v544
    %1473 = vmatprep.subr.bf16.mxu0 0
    %1474 = vmatpush1.bf16.msra.mxu0 0
    %1475 = vmatprep.subr.bf16.mxu0 0
    %1476 = vmatpush1.bf16.msra.mxu0 0
    %1477 = vmatprep.subr.bf16.mxu0 0
    %1478 = vmatpush1.bf16.msra.mxu0 0
    %1479 = vmatprep.subr.bf16.mxu0 0
    %1480 = vmatpush1.bf16.msra.mxu0 0
    %1481 = vmatprep.subr.bf16.mxu0 0
    %1482 = vmatpush1.bf16.msra.mxu0 0
    %1483 = vmatprep.subr.bf16.mxu0 0
    %1484 = vmatpush1.bf16.msra.mxu0 0
    %1485 = vmatprep.subr.bf16.mxu0 0
    %1486 = vmatpush1.bf16.msra.mxu0 0
    %1487 = vmatprep.subr.bf16.mxu0 0
    %1488 = vmatpush1.bf16.msra.mxu0 0
    %1489 = vmatprep.mubr.bf16.mxu0 0
    %1490 = vmatmul.mubr.bf16.gmra.mrb[0].mxu0 %v1415
    %v1491 = vpop.f32.mrb[0].mxu0
    %v1492 = vadd.f32 0.0, %v1491
    %v1493 = vpop.f32.mrb[0].mxu0
    %v1494 = vadd.f32 0.0, %v1493
    %v1495 = vpop.f32.mrb[0].mxu0
    %v1496 = vpop.f32.mrb[0].mxu0
    %1497 = vdwg.mxu0
    %v1498 = vadd.f32 %v1411, %v1451
    %v1499 = vadd.f32 %v1412, %v1453
    %v1500 = vadd.f32 %v1413, %v1492
    %v1501 = vadd.f32 %v1414, %v1494
    %v1502 = vmul.f32 %v1498, 0.5
    %v1503 = vmul.f32 %v1499, 0.5
    %v1504 = vmul.f32 %v1500, 0.5
    %v1505 = vtanh.pop %v1502
    %v1506 = vtanh.pop %v1503
    %v1507 = vtanh.pop %v1504
    %v1508 = vmul.f32 %v1505, 0.5
    %v1509 = vmul.f32 %v1506, 0.5
    %v1510 = vmul.f32 %v1507, 0.5
    %v1511 = vadd.f32 %v1508, 0.5
    %v1512 = vadd.f32 %v1509, 0.5
    %v1513 = vadd.f32 %v1510, 0.5
    %v1514 = vtanh.pop %v1501
    %v1515 = vmul.f32 %v1512, %v1300
    %v1516 = vmul.f32 %v1511, %v1514
    %v1517 = vadd.f32 %v1515, %v1516
    %v1518 = vtanh.pop %v1517
    %v1519 = vmul.f32 %v1513, %v1518
    %s1520 = scalar_lea.vmem [#allocation3], 16
    %v1521 = vld [vmem:[%s1520] sm:$0xff]
    %v1522 = vmul.f32 %v1519, %v1521
    %v1523 = vpack.c.bf16 %v1522, %v1522
    %v1524 = vpack.c.bf16 %v1407, %v1407
    %1525 = vmatprep.subr.bf16.mxu0 %v964
    %1526 = vmatpush1.bf16.msra.mxu0 %v963
    %1527 = vmatprep.subr.bf16.mxu0 %v968
    %1528 = vmatpush1.bf16.msra.mxu0 %v967
    %1529 = vmatprep.subr.bf16.mxu0 %v972
    %1530 = vmatpush1.bf16.msra.mxu0 %v971
    %1531 = vmatprep.subr.bf16.mxu0 %v976
    %1532 = vmatpush1.bf16.msra.mxu0 %v975
    %1533 = vmatprep.subr.bf16.mxu0 %v980
    %1534 = vmatpush1.bf16.msra.mxu0 %v979
    %1535 = vmatprep.subr.bf16.mxu0 %v984
    %1536 = vmatpush1.bf16.msra.mxu0 %v983
    %1537 = vmatprep.subr.bf16.mxu0 %v988
    %1538 = vmatpush1.bf16.msra.mxu0 %v987
    %1539 = vmatprep.subr.bf16.mxu0 %v992
    %1540 = vmatpush1.bf16.msra.mxu0 %v991
    %1541 = vmatprep.subr.bf16.mxu0 %v996
    %1542 = vmatpush1.bf16.msra.mxu0 %v995
    %1543 = vmatprep.subr.bf16.mxu0 %v1000
    %1544 = vmatpush1.bf16.msra.mxu0 %v999
    %1545 = vmatprep.subr.bf16.mxu0 %v1004
    %1546 = vmatpush1.bf16.msra.mxu0 %v1003
    %1547 = vmatprep.subr.bf16.mxu0 %v1008
    %1548 = vmatpush1.bf16.msra.mxu0 %v1007
    %1549 = vmatprep.subr.bf16.mxu0 %v1012
    %1550 = vmatpush1.bf16.msra.mxu0 %v1011
    %1551 = vmatprep.subr.bf16.mxu0 %v1016
    %1552 = vmatpush1.bf16.msra.mxu0 %v1015
    %1553 = vmatprep.subr.bf16.mxu0 %v1020
    %1554 = vmatpush1.bf16.msra.mxu0 %v1019
    %1555 = vmatprep.subr.bf16.mxu0 %v1024
    %1556 = vmatpush1.bf16.msra.mxu0 %v1023
    %1557 = vmatprep.mubr.bf16.mxu0 %v1524
    %1558 = vmatmul.mubr.bf16.gmra.mrb[0].mxu0 %v1523
    %v1559 = vpop.f32.mrb[0].mxu0
    %v1560 = vadd.f32 %v754, %v1559
    %v1561 = vpop.f32.mrb[0].mxu0
    %v1562 = vadd.f32 %v758, %v1561
    %v1563 = vpop.f32.mrb[0].mxu0
    %v1564 = vpop.f32.mrb[0].mxu0
    %1565 = vdwg.mxu0
    %1566 = vmatprep.subr.bf16.mxu0 %v966
    %1567 = vmatpush1.bf16.msra.mxu0 %v965
    %1568 = vmatprep.subr.bf16.mxu0 %v970
    %1569 = vmatpush1.bf16.msra.mxu0 %v969
    %1570 = vmatprep.subr.bf16.mxu0 %v974
    %1571 = vmatpush1.bf16.msra.mxu0 %v973
    %1572 = vmatprep.subr.bf16.mxu0 %v978
    %1573 = vmatpush1.bf16.msra.mxu0 %v977
    %1574 = vmatprep.subr.bf16.mxu0 %v982
    %1575 = vmatpush1.bf16.msra.mxu0 %v981
    %1576 = vmatprep.subr.bf16.mxu0 %v986
    %1577 = vmatpush1.bf16.msra.mxu0 %v985
    %1578 = vmatprep.subr.bf16.mxu0 %v990
    %1579 = vmatpush1.bf16.msra.mxu0 %v989
    %1580 = vmatprep.subr.bf16.mxu0 %v994
    %1581 = vmatpush1.bf16.msra.mxu0 %v993
    %1582 = vmatprep.subr.bf16.mxu0 %v998
    %1583 = vmatpush1.bf16.msra.mxu0 %v997
    %1584 = vmatprep.subr.bf16.mxu0 %v1002
    %1585 = vmatpush1.bf16.msra.mxu0 %v1001
    %1586 = vmatprep.subr.bf16.mxu0 %v1006
    %1587 = vmatpush1.bf16.msra.mxu0 %v1005
    %1588 = vmatprep.subr.bf16.mxu0 %v1010
    %1589 = vmatpush1.bf16.msra.mxu0 %v1009
    %1590 = vmatprep.subr.bf16.mxu0 %v1014
    %1591 = vmatpush1.bf16.msra.mxu0 %v1013
    %1592 = vmatprep.subr.bf16.mxu0 %v1018
    %1593 = vmatpush1.bf16.msra.mxu0 %v1017
    %1594 = vmatprep.subr.bf16.mxu0 %v1022
    %1595 = vmatpush1.bf16.msra.mxu0 %v1021
    %1596 = vmatprep.subr.bf16.mxu0 %v1026
    %1597 = vmatpush1.bf16.msra.mxu0 %v1025
    %1598 = vmatprep.mubr.bf16.mxu0 %v1524
    %1599 = vmatmul.mubr.bf16.gmra.mrb[0].mxu0 %v1523
    %v1600 = vpop.f32.mrb[0].mxu0
    %v1601 = vadd.f32 %v762, %v1600
    %v1602 = vpop.f32.mrb[0].mxu0
    %v1603 = vadd.f32 %v766, %v1602
    %v1604 = vpop.f32.mrb[0].mxu0
    %v1605 = vpop.f32.mrb[0].mxu0
    %1606 = vdwg.mxu0
    %v1607 = vmul.f32 %v1560, 0.5
    %v1608 = vmul.f32 %v1562, 0.5
    %v1609 = vmul.f32 %v1601, 0.5
    %v1610 = vtanh.pop %v1607
    %v1611 = vtanh.pop %v1608
    %v1612 = vtanh.pop %v1609
    %v1613 = vmul.f32 %v1610, 0.5
    %v1614 = vmul.f32 %v1611, 0.5
    %v1615 = vmul.f32 %v1612, 0.5
    %v1616 = vadd.f32 %v1613, 0.5
    %v1617 = vadd.f32 %v1614, 0.5
    %v1618 = vadd.f32 %v1615, 0.5
    %v1619 = vtanh.pop %v1603
    %v1620 = vmul.f32 %v1617, %v1405
    %v1621 = vmul.f32 %v1616, %v1619
    %v1622 = vadd.f32 %v1620, %v1621
    %v1623 = vtanh.pop %v1622
    %v1624 = vmul.f32 %v1618, %v1623
    %s1625 = smul.u32 3, 4
    %s1626 = smul.addr %s1625, 8
    %s1627 = scalar_lea.vmem [#allocation2], %s1626
    %v1628 = vld [vmem:[%s1627] sm:$0xff]
    %v1629 = vld [vmem:[%s1627 + $0x8] sm:$0xff]
    %v1630 = vld [vmem:[%s1627 + $0x10] sm:$0xff]
    %v1631 = vld [vmem:[%s1627 + $0x18] sm:$0xff]
    %v1632 = vpack.c.bf16 %v1519, %v1519
    %1633 = vmatprep.subr.bf16.mxu0 %v515
    %1634 = vmatpush1.bf16.msra.mxu0 %v514
    %1635 = vmatprep.subr.bf16.mxu0 %v519
    %1636 = vmatpush1.bf16.msra.mxu0 %v518
    %1637 = vmatprep.subr.bf16.mxu0 %v523
    %1638 = vmatpush1.bf16.msra.mxu0 %v522
    %1639 = vmatprep.subr.bf16.mxu0 %v527
    %1640 = vmatpush1.bf16.msra.mxu0 %v526
    %1641 = vmatprep.subr.bf16.mxu0 %v531
    %1642 = vmatpush1.bf16.msra.mxu0 %v530
    %1643 = vmatprep.subr.bf16.mxu0 %v535
    %1644 = vmatpush1.bf16.msra.mxu0 %v534
    %1645 = vmatprep.subr.bf16.mxu0 %v539
    %1646 = vmatpush1.bf16.msra.mxu0 %v538
    %1647 = vmatprep.subr.bf16.mxu0 %v543
    %1648 = vmatpush1.bf16.msra.mxu0 %v542
    %1649 = vmatprep.subr.bf16.mxu0 0
    %1650 = vmatpush1.bf16.msra.mxu0 0
    %1651 = vmatprep.subr.bf16.mxu0 0
    %1652 = vmatpush1.bf16.msra.mxu0 0
    %1653 = vmatprep.subr.bf16.mxu0 0
    %1654 = vmatpush1.bf16.msra.mxu0 0
    %1655 = vmatprep.subr.bf16.mxu0 0
    %1656 = vmatpush1.bf16.msra.mxu0 0
    %1657 = vmatprep.subr.bf16.mxu0 0
    %1658 = vmatpush1.bf16.msra.mxu0 0
    %1659 = vmatprep.subr.bf16.mxu0 0
    %1660 = vmatpush1.bf16.msra.mxu0 0
    %1661 = vmatprep.subr.bf16.mxu0 0
    %1662 = vmatpush1.bf16.msra.mxu0 0
    %1663 = vmatprep.subr.bf16.mxu0 0
    %1664 = vmatpush1.bf16.msra.mxu0 0
    %1665 = vmatprep.mubr.bf16.mxu0 0
    %1666 = vmatmul.mubr.bf16.gmra.mrb[0].mxu0 %v1632
    %v1667 = vpop.f32.mrb[0].mxu0
    %v1668 = vadd.f32 0.0, %v1667
    %v1669 = vpop.f32.mrb[0].mxu0
    %v1670 = vadd.f32 0.0, %v1669
    %v1671 = vpop.f32.mrb[0].mxu0
    %v1672 = vpop.f32.mrb[0].mxu0
    %1673 = vdwg.mxu0
    %1674 = vmatprep.subr.bf16.mxu0 %v517
    %1675 = vmatpush1.bf16.msra.mxu0 %v516
    %1676 = vmatprep.subr.bf16.mxu0 %v521
    %1677 = vmatpush1.bf16.msra.mxu0 %v520
    %1678 = vmatprep.subr.bf16.mxu0 %v525
    %1679 = vmatpush1.bf16.msra.mxu0 %v524
    %1680 = vmatprep.subr.bf16.mxu0 %v529
    %1681 = vmatpush1.bf16.msra.mxu0 %v528
    %1682 = vmatprep.subr.bf16.mxu0 %v533
    %1683 = vmatpush1.bf16.msra.mxu0 %v532
    %1684 = vmatprep.subr.bf16.mxu0 %v537
    %1685 = vmatpush1.bf16.msra.mxu0 %v536
    %1686 = vmatprep.subr.bf16.mxu0 %v541
    %1687 = vmatpush1.bf16.msra.mxu0 %v540
    %1688 = vmatprep.subr.bf16.mxu0 %v545
    %1689 = vmatpush1.bf16.msra.mxu0 %v544
    %1690 = vmatprep.subr.bf16.mxu0 0
    %1691 = vmatpush1.bf16.msra.mxu0 0
    %1692 = vmatprep.subr.bf16.mxu0 0
    %1693 = vmatpush1.bf16.msra.mxu0 0
    %1694 = vmatprep.subr.bf16.mxu0 0
    %1695 = vmatpush1.bf16.msra.mxu0 0
    %1696 = vmatprep.subr.bf16.mxu0 0
    %1697 = vmatpush1.bf16.msra.mxu0 0
    %1698 = vmatprep.subr.bf16.mxu0 0
    %1699 = vmatpush1.bf16.msra.mxu0 0
    %1700 = vmatprep.subr.bf16.mxu0 0
    %1701 = vmatpush1.bf16.msra.mxu0 0
    %1702 = vmatprep.subr.bf16.mxu0 0
    %1703 = vmatpush1.bf16.msra.mxu0 0
    %1704 = vmatprep.subr.bf16.mxu0 0
    %1705 = vmatpush1.bf16.msra.mxu0 0
    %1706 = vmatprep.mubr.bf16.mxu0 0
    %1707 = vmatmul.mubr.bf16.gmra.mrb[0].mxu0 %v1632
    %v1708 = vpop.f32.mrb[0].mxu0
    %v1709 = vadd.f32 0.0, %v1708
    %v1710 = vpop.f32.mrb[0].mxu0
    %v1711 = vadd.f32 0.0, %v1710
    %v1712 = vpop.f32.mrb[0].mxu0
    %v1713 = vpop.f32.mrb[0].mxu0
    %1714 = vdwg.mxu0
    %v1715 = vadd.f32 %v1628, %v1668
    %v1716 = vadd.f32 %v1629, %v1670
    %v1717 = vadd.f32 %v1630, %v1709
    %v1718 = vadd.f32 %v1631, %v1711
    %v1719 = vmul.f32 %v1715, 0.5
    %v1720 = vmul.f32 %v1716, 0.5
    %v1721 = vmul.f32 %v1717, 0.5
    %v1722 = vtanh.pop %v1719
    %v1723 = vtanh.pop %v1720
    %v1724 = vtanh.pop %v1721
    %v1725 = vmul.f32 %v1722, 0.5
    %v1726 = vmul.f32 %v1723, 0.5
    %v1727 = vmul.f32 %v1724, 0.5
    %v1728 = vadd.f32 %v1725, 0.5
    %v1729 = vadd.f32 %v1726, 0.5
    %v1730 = vadd.f32 %v1727, 0.5
    %v1731 = vtanh.pop %v1718
    %v1732 = vmul.f32 %v1729, %v1517
    %v1733 = vmul.f32 %v1728, %v1731
    %v1734 = vadd.f32 %v1732, %v1733
    %v1735 = vtanh.pop %v1734
    %v1736 = vmul.f32 %v1730, %v1735
    %s1737 = scalar_lea.vmem [#allocation3], 24
    %v1738 = vld [vmem:[%s1737] sm:$0xff]
    %v1739 = vmul.f32 %v1736, %v1738
    %v1740 = vpack.c.bf16 %v1739, %v1739
    %v1741 = vpack.c.bf16 %v1624, %v1624
    %1742 = vmatprep.subr.bf16.mxu0 %v964
    %1743 = vmatpush1.bf16.msra.mxu0 %v963
    %1744 = vmatprep.subr.bf16.mxu0 %v968
    %1745 = vmatpush1.bf16.msra.mxu0 %v967
    %1746 = vmatprep.subr.bf16.mxu0 %v972
    %1747 = vmatpush1.bf16.msra.mxu0 %v971
    %1748 = vmatprep.subr.bf16.mxu0 %v976
    %1749 = vmatpush1.bf16.msra.mxu0 %v975
    %1750 = vmatprep.subr.bf16.mxu0 %v980
    %1751 = vmatpush1.bf16.msra.mxu0 %v979
    %1752 = vmatprep.subr.bf16.mxu0 %v984
    %1753 = vmatpush1.bf16.msra.mxu0 %v983
    %1754 = vmatprep.subr.bf16.mxu0 %v988
    %1755 = vmatpush1.bf16.msra.mxu0 %v987
    %1756 = vmatprep.subr.bf16.mxu0 %v992
    %1757 = vmatpush1.bf16.msra.mxu0 %v991
    %1758 = vmatprep.subr.bf16.mxu0 %v996
    %1759 = vmatpush1.bf16.msra.mxu0 %v995
    %1760 = vmatprep.subr.bf16.mxu0 %v1000
    %1761 = vmatpush1.bf16.msra.mxu0 %v999
    %1762 = vmatprep.subr.bf16.mxu0 %v1004
    %1763 = vmatpush1.bf16.msra.mxu0 %v1003
    %1764 = vmatprep.subr.bf16.mxu0 %v1008
    %1765 = vmatpush1.bf16.msra.mxu0 %v1007
    %1766 = vmatprep.subr.bf16.mxu0 %v1012
    %1767 = vmatpush1.bf16.msra.mxu0 %v1011
    %1768 = vmatprep.subr.bf16.mxu0 %v1016
    %1769 = vmatpush1.bf16.msra.mxu0 %v1015
    %1770 = vmatprep.subr.bf16.mxu0 %v1020
    %1771 = vmatpush1.bf16.msra.mxu0 %v1019
    %1772 = vmatprep.subr.bf16.mxu0 %v1024
    %1773 = vmatpush1.bf16.msra.mxu0 %v1023
    %1774 = vmatprep.mubr.bf16.mxu0 %v1741
    %1775 = vmatmul.mubr.bf16.gmra.mrb[0].mxu0 %v1740
    %v1776 = vpop.f32.mrb[0].mxu0
    %v1777 = vadd.f32 %v754, %v1776
    %v1778 = vpop.f32.mrb[0].mxu0
    %v1779 = vadd.f32 %v758, %v1778
    %v1780 = vpop.f32.mrb[0].mxu0
    %v1781 = vpop.f32.mrb[0].mxu0
    %1782 = vdwg.mxu0
    %1783 = vmatprep.subr.bf16.mxu0 %v966
    %1784 = vmatpush1.bf16.msra.mxu0 %v965
    %1785 = vmatprep.subr.bf16.mxu0 %v970
    %1786 = vmatpush1.bf16.msra.mxu0 %v969
    %1787 = vmatprep.subr.bf16.mxu0 %v974
    %1788 = vmatpush1.bf16.msra.mxu0 %v973
    %1789 = vmatprep.subr.bf16.mxu0 %v978
    %1790 = vmatpush1.bf16.msra.mxu0 %v977
    %1791 = vmatprep.subr.bf16.mxu0 %v982
    %1792 = vmatpush1.bf16.msra.mxu0 %v981
    %1793 = vmatprep.subr.bf16.mxu0 %v986
    %1794 = vmatpush1.bf16.msra.mxu0 %v985
    %1795 = vmatprep.subr.bf16.mxu0 %v990
    %1796 = vmatpush1.bf16.msra.mxu0 %v989
    %1797 = vmatprep.subr.bf16.mxu0 %v994
    %1798 = vmatpush1.bf16.msra.mxu0 %v993
    %1799 = vmatprep.subr.bf16.mxu0 %v998
    %1800 = vmatpush1.bf16.msra.mxu0 %v997
    %1801 = vmatprep.subr.bf16.mxu0 %v1002
    %1802 = vmatpush1.bf16.msra.mxu0 %v1001
    %1803 = vmatprep.subr.bf16.mxu0 %v1006
    %1804 = vmatpush1.bf16.msra.mxu0 %v1005
    %1805 = vmatprep.subr.bf16.mxu0 %v1010
    %1806 = vmatpush1.bf16.msra.mxu0 %v1009
    %1807 = vmatprep.subr.bf16.mxu0 %v1014
    %1808 = vmatpush1.bf16.msra.mxu0 %v1013
    %1809 = vmatprep.subr.bf16.mxu0 %v1018
    %1810 = vmatpush1.bf16.msra.mxu0 %v1017
    %1811 = vmatprep.subr.bf16.mxu0 %v1022
    %1812 = vmatpush1.bf16.msra.mxu0 %v1021
    %1813 = vmatprep.subr.bf16.mxu0 %v1026
    %1814 = vmatpush1.bf16.msra.mxu0 %v1025
    %1815 = vmatprep.mubr.bf16.mxu0 %v1741
    %1816 = vmatmul.mubr.bf16.gmra.mrb[0].mxu0 %v1740
    %v1817 = vpop.f32.mrb[0].mxu0
    %v1818 = vadd.f32 %v762, %v1817
    %v1819 = vpop.f32.mrb[0].mxu0
    %v1820 = vadd.f32 %v766, %v1819
    %v1821 = vpop.f32.mrb[0].mxu0
    %v1822 = vpop.f32.mrb[0].mxu0
    %1823 = vdwg.mxu0
    %v1824 = vmul.f32 %v1777, 0.5
    %v1825 = vmul.f32 %v1779, 0.5
    %v1826 = vmul.f32 %v1818, 0.5
    %v1827 = vtanh.pop %v1824
    %v1828 = vtanh.pop %v1825
    %v1829 = vtanh.pop %v1826
    %v1830 = vmul.f32 %v1827, 0.5
    %v1831 = vmul.f32 %v1828, 0.5
    %v1832 = vmul.f32 %v1829, 0.5
    %v1833 = vadd.f32 %v1830, 0.5
    %v1834 = vadd.f32 %v1831, 0.5
    %v1835 = vadd.f32 %v1832, 0.5
    %v1836 = vtanh.pop %v1820
    %v1837 = vmul.f32 %v1834, %v1622
    %v1838 = vmul.f32 %v1833, %v1836
    %v1839 = vadd.f32 %v1837, %v1838
    %v1840 = vtanh.pop %v1839
    %v1841 = vmul.f32 %v1835, %v1840
    %s1842 = smul.u32 4, 4
    %s1843 = smul.addr %s1842, 8
    %s1844 = scalar_lea.vmem [#allocation2], %s1843
    %v1845 = vld [vmem:[%s1844] sm:$0xff]
    %v1846 = vld [vmem:[%s1844 + $0x8] sm:$0xff]
    %v1847 = vld [vmem:[%s1844 + $0x10] sm:$0xff]
    %v1848 = vld [vmem:[%s1844 + $0x18] sm:$0xff]
    %v1849 = vpack.c.bf16 %v1736, %v1736
    %1850 = vmatprep.subr.bf16.mxu0 %v515
    %1851 = vmatpush1.bf16.msra.mxu0 %v514
    %1852 = vmatprep.subr.bf16.mxu0 %v519
    %1853 = vmatpush1.bf16.msra.mxu0 %v518
    %1854 = vmatprep.subr.bf16.mxu0 %v523
    %1855 = vmatpush1.bf16.msra.mxu0 %v522
    %1856 = vmatprep.subr.bf16.mxu0 %v527
    %1857 = vmatpush1.bf16.msra.mxu0 %v526
    %1858 = vmatprep.subr.bf16.mxu0 %v531
    %1859 = vmatpush1.bf16.msra.mxu0 %v530
    %1860 = vmatprep.subr.bf16.mxu0 %v535
    %1861 = vmatpush1.bf16.msra.mxu0 %v534
    %1862 = vmatprep.subr.bf16.mxu0 %v539
    %1863 = vmatpush1.bf16.msra.mxu0 %v538
    %1864 = vmatprep.subr.bf16.mxu0 %v543
    %1865 = vmatpush1.bf16.msra.mxu0 %v542
    %1866 = vmatprep.subr.bf16.mxu0 0
    %1867 = vmatpush1.bf16.msra.mxu0 0
    %1868 = vmatprep.subr.bf16.mxu0 0
    %1869 = vmatpush1.bf16.msra.mxu0 0
    %1870 = vmatprep.subr.bf16.mxu0 0
    %1871 = vmatpush1.bf16.msra.mxu0 0
    %1872 = vmatprep.subr.bf16.mxu0 0
    %1873 = vmatpush1.bf16.msra.mxu0 0
    %1874 = vmatprep.subr.bf16.mxu0 0
    %1875 = vmatpush1.bf16.msra.mxu0 0
    %1876 = vmatprep.subr.bf16.mxu0 0
    %1877 = vmatpush1.bf16.msra.mxu0 0
    %1878 = vmatprep.subr.bf16.mxu0 0
    %1879 = vmatpush1.bf16.msra.mxu0 0
    %1880 = vmatprep.subr.bf16.mxu0 0
    %1881 = vmatpush1.bf16.msra.mxu0 0
    %1882 = vmatprep.mubr.bf16.mxu0 0
    %1883 = vmatmul.mubr.bf16.gmra.mrb[0].mxu0 %v1849
    %v1884 = vpop.f32.mrb[0].mxu0
    %v1885 = vadd.f32 0.0, %v1884
    %v1886 = vpop.f32.mrb[0].mxu0
    %v1887 = vadd.f32 0.0, %v1886
    %v1888 = vpop.f32.mrb[0].mxu0
    %v1889 = vpop.f32.mrb[0].mxu0
    %1890 = vdwg.mxu0
    %1891 = vmatprep.subr.bf16.mxu0 %v517
    %1892 = vmatpush1.bf16.msra.mxu0 %v516
    %1893 = vmatprep.subr.bf16.mxu0 %v521
    %1894 = vmatpush1.bf16.msra.mxu0 %v520
    %1895 = vmatprep.subr.bf16.mxu0 %v525
    %1896 = vmatpush1.bf16.msra.mxu0 %v524
    %1897 = vmatprep.subr.bf16.mxu0 %v529
    %1898 = vmatpush1.bf16.msra.mxu0 %v528
    %1899 = vmatprep.subr.bf16.mxu0 %v533
    %1900 = vmatpush1.bf16.msra.mxu0 %v532
    %1901 = vmatprep.subr.bf16.mxu0 %v537
    %1902 = vmatpush1.bf16.msra.mxu0 %v536
    %1903 = vmatprep.subr.bf16.mxu0 %v541
    %1904 = vmatpush1.bf16.msra.mxu0 %v540
    %1905 = vmatprep.subr.bf16.mxu0 %v545
    %1906 = vmatpush1.bf16.msra.mxu0 %v544
    %1907 = vmatprep.subr.bf16.mxu0 0
    %1908 = vmatpush1.bf16.msra.mxu0 0
    %1909 = vmatprep.subr.bf16.mxu0 0
    %1910 = vmatpush1.bf16.msra.mxu0 0
    %1911 = vmatprep.subr.bf16.mxu0 0
    %1912 = vmatpush1.bf16.msra.mxu0 0
    %1913 = vmatprep.subr.bf16.mxu0 0
    %1914 = vmatpush1.bf16.msra.mxu0 0
    %1915 = vmatprep.subr.bf16.mxu0 0
    %1916 = vmatpush1.bf16.msra.mxu0 0
    %1917 = vmatprep.subr.bf16.mxu0 0
    %1918 = vmatpush1.bf16.msra.mxu0 0
    %1919 = vmatprep.subr.bf16.mxu0 0
    %1920 = vmatpush1.bf16.msra.mxu0 0
    %1921 = vmatprep.subr.bf16.mxu0 0
    %1922 = vmatpush1.bf16.msra.mxu0 0
    %1923 = vmatprep.mubr.bf16.mxu0 0
    %1924 = vmatmul.mubr.bf16.gmra.mrb[0].mxu0 %v1849
    %v1925 = vpop.f32.mrb[0].mxu0
    %v1926 = vadd.f32 0.0, %v1925
    %v1927 = vpop.f32.mrb[0].mxu0
    %v1928 = vadd.f32 0.0, %v1927
    %v1929 = vpop.f32.mrb[0].mxu0
    %v1930 = vpop.f32.mrb[0].mxu0
    %1931 = vdwg.mxu0
    %v1932 = vadd.f32 %v1845, %v1885
    %v1933 = vadd.f32 %v1846, %v1887
    %v1934 = vadd.f32 %v1847, %v1926
    %v1935 = vadd.f32 %v1848, %v1928
    %v1936 = vmul.f32 %v1932, 0.5
    %v1937 = vmul.f32 %v1933, 0.5
    %v1938 = vmul.f32 %v1934, 0.5
    %v1939 = vtanh.pop %v1936
    %v1940 = vtanh.pop %v1937
    %v1941 = vtanh.pop %v1938
    %v1942 = vmul.f32 %v1939, 0.5
    %v1943 = vmul.f32 %v1940, 0.5
    %v1944 = vmul.f32 %v1941, 0.5
    %v1945 = vadd.f32 %v1942, 0.5
    %v1946 = vadd.f32 %v1943, 0.5
    %v1947 = vadd.f32 %v1944, 0.5
    %v1948 = vtanh.pop %v1935
    %v1949 = vmul.f32 %v1946, %v1734
    %v1950 = vmul.f32 %v1945, %v1948
    %v1951 = vadd.f32 %v1949, %v1950
    %v1952 = vtanh.pop %v1951
    %v1953 = vmul.f32 %v1947, %v1952
    %s1954 = scalar_lea.vmem [#allocation3], 32
    %v1955 = vld [vmem:[%s1954] sm:$0xff]
    %v1956 = vmul.f32 %v1953, %v1955
    %v1957 = vpack.c.bf16 %v1956, %v1956
    %v1958 = vpack.c.bf16 %v1841, %v1841
    %1959 = vmatprep.subr.bf16.mxu0 %v964
    %1960 = vmatpush1.bf16.msra.mxu0 %v963
    %1961 = vmatprep.subr.bf16.mxu0 %v968
    %1962 = vmatpush1.bf16.msra.mxu0 %v967
    %1963 = vmatprep.subr.bf16.mxu0 %v972
    %1964 = vmatpush1.bf16.msra.mxu0 %v971
    %1965 = vmatprep.subr.bf16.mxu0 %v976
    %1966 = vmatpush1.bf16.msra.mxu0 %v975
    %1967 = vmatprep.subr.bf16.mxu0 %v980
    %1968 = vmatpush1.bf16.msra.mxu0 %v979
    %1969 = vmatprep.subr.bf16.mxu0 %v984
    %1970 = vmatpush1.bf16.msra.mxu0 %v983
    %1971 = vmatprep.subr.bf16.mxu0 %v988
    %1972 = vmatpush1.bf16.msra.mxu0 %v987
    %1973 = vmatprep.subr.bf16.mxu0 %v992
    %1974 = vmatpush1.bf16.msra.mxu0 %v991
    %1975 = vmatprep.subr.bf16.mxu0 %v996
    %1976 = vmatpush1.bf16.msra.mxu0 %v995
    %1977 = vmatprep.subr.bf16.mxu0 %v1000
    %1978 = vmatpush1.bf16.msra.mxu0 %v999
    %1979 = vmatprep.subr.bf16.mxu0 %v1004
    %1980 = vmatpush1.bf16.msra.mxu0 %v1003
    %1981 = vmatprep.subr.bf16.mxu0 %v1008
    %1982 = vmatpush1.bf16.msra.mxu0 %v1007
    %1983 = vmatprep.subr.bf16.mxu0 %v1012
    %1984 = vmatpush1.bf16.msra.mxu0 %v1011
    %1985 = vmatprep.subr.bf16.mxu0 %v1016
    %1986 = vmatpush1.bf16.msra.mxu0 %v1015
    %1987 = vmatprep.subr.bf16.mxu0 %v1020
    %1988 = vmatpush1.bf16.msra.mxu0 %v1019
    %1989 = vmatprep.subr.bf16.mxu0 %v1024
    %1990 = vmatpush1.bf16.msra.mxu0 %v1023
    %1991 = vmatprep.mubr.bf16.mxu0 %v1958
    %1992 = vmatmul.mubr.bf16.gmra.mrb[0].mxu0 %v1957
    %v1993 = vpop.f32.mrb[0].mxu0
    %v1994 = vadd.f32 %v754, %v1993
    %v1995 = vpop.f32.mrb[0].mxu0
    %v1996 = vadd.f32 %v758, %v1995
    %v1997 = vpop.f32.mrb[0].mxu0
    %v1998 = vpop.f32.mrb[0].mxu0
    %1999 = vdwg.mxu0
    %2000 = vmatprep.subr.bf16.mxu0 %v966
    %2001 = vmatpush1.bf16.msra.mxu0 %v965
    %2002 = vmatprep.subr.bf16.mxu0 %v970
    %2003 = vmatpush1.bf16.msra.mxu0 %v969
    %2004 = vmatprep.subr.bf16.mxu0 %v974
    %2005 = vmatpush1.bf16.msra.mxu0 %v973
    %2006 = vmatprep.subr.bf16.mxu0 %v978
    %2007 = vmatpush1.bf16.msra.mxu0 %v977
    %2008 = vmatprep.subr.bf16.mxu0 %v982
    %2009 = vmatpush1.bf16.msra.mxu0 %v981
    %2010 = vmatprep.subr.bf16.mxu0 %v986
    %2011 = vmatpush1.bf16.msra.mxu0 %v985
    %2012 = vmatprep.subr.bf16.mxu0 %v990
    %2013 = vmatpush1.bf16.msra.mxu0 %v989
    %2014 = vmatprep.subr.bf16.mxu0 %v994
    %2015 = vmatpush1.bf16.msra.mxu0 %v993
    %2016 = vmatprep.subr.bf16.mxu0 %v998
    %2017 = vmatpush1.bf16.msra.mxu0 %v997
    %2018 = vmatprep.subr.bf16.mxu0 %v1002
    %2019 = vmatpush1.bf16.msra.mxu0 %v1001
    %2020 = vmatprep.subr.bf16.mxu0 %v1006
    %2021 = vmatpush1.bf16.msra.mxu0 %v1005
    %2022 = vmatprep.subr.bf16.mxu0 %v1010
    %2023 = vmatpush1.bf16.msra.mxu0 %v1009
    %2024 = vmatprep.subr.bf16.mxu0 %v1014
    %2025 = vmatpush1.bf16.msra.mxu0 %v1013
    %2026 = vmatprep.subr.bf16.mxu0 %v1018
    %2027 = vmatpush1.bf16.msra.mxu0 %v1017
    %2028 = vmatprep.subr.bf16.mxu0 %v1022
    %2029 = vmatpush1.bf16.msra.mxu0 %v1021
    %2030 = vmatprep.subr.bf16.mxu0 %v1026
    %2031 = vmatpush1.bf16.msra.mxu0 %v1025
    %2032 = vmatprep.mubr.bf16.mxu0 %v1958
    %2033 = vmatmul.mubr.bf16.gmra.mrb[0].mxu0 %v1957
    %v2034 = vpop.f32.mrb[0].mxu0
    %v2035 = vadd.f32 %v762, %v2034
    %v2036 = vpop.f32.mrb[0].mxu0
    %v2037 = vadd.f32 %v766, %v2036
    %v2038 = vpop.f32.mrb[0].mxu0
    %v2039 = vpop.f32.mrb[0].mxu0
    %2040 = vdwg.mxu0
    %v2041 = vmul.f32 %v1994, 0.5
    %v2042 = vmul.f32 %v1996, 0.5
    %v2043 = vmul.f32 %v2035, 0.5
    %v2044 = vtanh.pop %v2041
    %v2045 = vtanh.pop %v2042
    %v2046 = vtanh.pop %v2043
    %v2047 = vmul.f32 %v2044, 0.5
    %v2048 = vmul.f32 %v2045, 0.5
    %v2049 = vmul.f32 %v2046, 0.5
    %v2050 = vadd.f32 %v2047, 0.5
    %v2051 = vadd.f32 %v2048, 0.5
    %v2052 = vadd.f32 %v2049, 0.5
    %v2053 = vtanh.pop %v2037
    %v2054 = vmul.f32 %v2051, %v1839
    %v2055 = vmul.f32 %v2050, %v2053
    %v2056 = vadd.f32 %v2054, %v2055
    %v2057 = vtanh.pop %v2056
    %v2058 = vmul.f32 %v2052, %v2057
    %s2059 = smul.u32 5, 4
    %s2060 = smul.addr %s2059, 8
    %s2061 = scalar_lea.vmem [#allocation2], %s2060
    %v2062 = vld [vmem:[%s2061] sm:$0xff]
    %v2063 = vld [vmem:[%s2061 + $0x8] sm:$0xff]
    %v2064 = vld [vmem:[%s2061 + $0x10] sm:$0xff]
    %v2065 = vld [vmem:[%s2061 + $0x18] sm:$0xff]
    %v2066 = vpack.c.bf16 %v1953, %v1953
    %2067 = vmatprep.subr.bf16.mxu0 %v515
    %2068 = vmatpush1.bf16.msra.mxu0 %v514
    %2069 = vmatprep.subr.bf16.mxu0 %v519
    %2070 = vmatpush1.bf16.msra.mxu0 %v518
    %2071 = vmatprep.subr.bf16.mxu0 %v523
    %2072 = vmatpush1.bf16.msra.mxu0 %v522
    %2073 = vmatprep.subr.bf16.mxu0 %v527
    %2074 = vmatpush1.bf16.msra.mxu0 %v526
    %2075 = vmatprep.subr.bf16.mxu0 %v531
    %2076 = vmatpush1.bf16.msra.mxu0 %v530
    %2077 = vmatprep.subr.bf16.mxu0 %v535
    %2078 = vmatpush1.bf16.msra.mxu0 %v534
    %2079 = vmatprep.subr.bf16.mxu0 %v539
    %2080 = vmatpush1.bf16.msra.mxu0 %v538
    %2081 = vmatprep.subr.bf16.mxu0 %v543
    %2082 = vmatpush1.bf16.msra.mxu0 %v542
    %2083 = vmatprep.subr.bf16.mxu0 0
    %2084 = vmatpush1.bf16.msra.mxu0 0
    %2085 = vmatprep.subr.bf16.mxu0 0
    %2086 = vmatpush1.bf16.msra.mxu0 0
    %2087 = vmatprep.subr.bf16.mxu0 0
    %2088 = vmatpush1.bf16.msra.mxu0 0
    %2089 = vmatprep.subr.bf16.mxu0 0
    %2090 = vmatpush1.bf16.msra.mxu0 0
    %2091 = vmatprep.subr.bf16.mxu0 0
    %2092 = vmatpush1.bf16.msra.mxu0 0
    %2093 = vmatprep.subr.bf16.mxu0 0
    %2094 = vmatpush1.bf16.msra.mxu0 0
    %2095 = vmatprep.subr.bf16.mxu0 0
    %2096 = vmatpush1.bf16.msra.mxu0 0
    %2097 = vmatprep.subr.bf16.mxu0 0
    %2098 = vmatpush1.bf16.msra.mxu0 0
    %2099 = vmatprep.mubr.bf16.mxu0 0
    %2100 = vmatmul.mubr.bf16.gmra.mrb[0].mxu0 %v2066
    %v2101 = vpop.f32.mrb[0].mxu0
    %v2102 = vadd.f32 0.0, %v2101
    %v2103 = vpop.f32.mrb[0].mxu0
    %v2104 = vadd.f32 0.0, %v2103
    %v2105 = vpop.f32.mrb[0].mxu0
    %v2106 = vpop.f32.mrb[0].mxu0
    %2107 = vdwg.mxu0
    %2108 = vmatprep.subr.bf16.mxu0 %v517
    %2109 = vmatpush1.bf16.msra.mxu0 %v516
    %2110 = vmatprep.subr.bf16.mxu0 %v521
    %2111 = vmatpush1.bf16.msra.mxu0 %v520
    %2112 = vmatprep.subr.bf16.mxu0 %v525
    %2113 = vmatpush1.bf16.msra.mxu0 %v524
    %2114 = vmatprep.subr.bf16.mxu0 %v529
    %2115 = vmatpush1.bf16.msra.mxu0 %v528
    %2116 = vmatprep.subr.bf16.mxu0 %v533
    %2117 = vmatpush1.bf16.msra.mxu0 %v532
    %2118 = vmatprep.subr.bf16.mxu0 %v537
    %2119 = vmatpush1.bf16.msra.mxu0 %v536
    %2120 = vmatprep.subr.bf16.mxu0 %v541
    %2121 = vmatpush1.bf16.msra.mxu0 %v540
    %2122 = vmatprep.subr.bf16.mxu0 %v545
    %2123 = vmatpush1.bf16.msra.mxu0 %v544
    %2124 = vmatprep.subr.bf16.mxu0 0
    %2125 = vmatpush1.bf16.msra.mxu0 0
    %2126 = vmatprep.subr.bf16.mxu0 0
    %2127 = vmatpush1.bf16.msra.mxu0 0
    %2128 = vmatprep.subr.bf16.mxu0 0
    %2129 = vmatpush1.bf16.msra.mxu0 0
    %2130 = vmatprep.subr.bf16.mxu0 0
    %2131 = vmatpush1.bf16.msra.mxu0 0
    %2132 = vmatprep.subr.bf16.mxu0 0
    %2133 = vmatpush1.bf16.msra.mxu0 0
    %2134 = vmatprep.subr.bf16.mxu0 0
    %2135 = vmatpush1.bf16.msra.mxu0 0
    %2136 = vmatprep.subr.bf16.mxu0 0
    %2137 = vmatpush1.bf16.msra.mxu0 0
    %2138 = vmatprep.subr.bf16.mxu0 0
    %2139 = vmatpush1.bf16.msra.mxu0 0
    %2140 = vmatprep.mubr.bf16.mxu0 0
    %2141 = vmatmul.mubr.bf16.gmra.mrb[0].mxu0 %v2066
    %v2142 = vpop.f32.mrb[0].mxu0
    %v2143 = vadd.f32 0.0, %v2142
    %v2144 = vpop.f32.mrb[0].mxu0
    %v2145 = vadd.f32 0.0, %v2144
    %v2146 = vpop.f32.mrb[0].mxu0
    %v2147 = vpop.f32.mrb[0].mxu0
    %2148 = vdwg.mxu0
    %v2149 = vadd.f32 %v2062, %v2102
    %v2150 = vadd.f32 %v2063, %v2104
    %v2151 = vadd.f32 %v2064, %v2143
    %v2152 = vadd.f32 %v2065, %v2145
    %v2153 = vmul.f32 %v2149, 0.5
    %v2154 = vmul.f32 %v2150, 0.5
    %v2155 = vmul.f32 %v2151, 0.5
    %v2156 = vtanh.pop %v2153
    %v2157 = vtanh.pop %v2154
    %v2158 = vtanh.pop %v2155
    %v2159 = vmul.f32 %v2156, 0.5
    %v2160 = vmul.f32 %v2157, 0.5
    %v2161 = vmul.f32 %v2158, 0.5
    %v2162 = vadd.f32 %v2159, 0.5
    %v2163 = vadd.f32 %v2160, 0.5
    %v2164 = vadd.f32 %v2161, 0.5
    %v2165 = vtanh.pop %v2152
    %v2166 = vmul.f32 %v2163, %v1951
    %v2167 = vmul.f32 %v2162, %v2165
    %v2168 = vadd.f32 %v2166, %v2167
    %v2169 = vtanh.pop %v2168
    %v2170 = vmul.f32 %v2164, %v2169
    %s2171 = scalar_lea.vmem [#allocation3], 40
    %v2172 = vld [vmem:[%s2171] sm:$0xff]
    %v2173 = vmul.f32 %v2170, %v2172
    %v2174 = vpack.c.bf16 %v2173, %v2173
    %v2175 = vpack.c.bf16 %v2058, %v2058
    %2176 = vmatprep.subr.bf16.mxu0 %v964
    %2177 = vmatpush1.bf16.msra.mxu0 %v963
    %2178 = vmatprep.subr.bf16.mxu0 %v968
    %2179 = vmatpush1.bf16.msra.mxu0 %v967
    %2180 = vmatprep.subr.bf16.mxu0 %v972
    %2181 = vmatpush1.bf16.msra.mxu0 %v971
    %2182 = vmatprep.subr.bf16.mxu0 %v976
    %2183 = vmatpush1.bf16.msra.mxu0 %v975
    %2184 = vmatprep.subr.bf16.mxu0 %v980
    %2185 = vmatpush1.bf16.msra.mxu0 %v979
    %2186 = vmatprep.subr.bf16.mxu0 %v984
    %2187 = vmatpush1.bf16.msra.mxu0 %v983
    %2188 = vmatprep.subr.bf16.mxu0 %v988
    %2189 = vmatpush1.bf16.msra.mxu0 %v987
    %2190 = vmatprep.subr.bf16.mxu0 %v992
    %2191 = vmatpush1.bf16.msra.mxu0 %v991
    %2192 = vmatprep.subr.bf16.mxu0 %v996
    %2193 = vmatpush1.bf16.msra.mxu0 %v995
    %2194 = vmatprep.subr.bf16.mxu0 %v1000
    %2195 = vmatpush1.bf16.msra.mxu0 %v999
    %2196 = vmatprep.subr.bf16.mxu0 %v1004
    %2197 = vmatpush1.bf16.msra.mxu0 %v1003
    %2198 = vmatprep.subr.bf16.mxu0 %v1008
    %2199 = vmatpush1.bf16.msra.mxu0 %v1007
    %2200 = vmatprep.subr.bf16.mxu0 %v1012
    %2201 = vmatpush1.bf16.msra.mxu0 %v1011
    %2202 = vmatprep.subr.bf16.mxu0 %v1016
    %2203 = vmatpush1.bf16.msra.mxu0 %v1015
    %2204 = vmatprep.subr.bf16.mxu0 %v1020
    %2205 = vmatpush1.bf16.msra.mxu0 %v1019
    %2206 = vmatprep.subr.bf16.mxu0 %v1024
    %2207 = vmatpush1.bf16.msra.mxu0 %v1023
    %2208 = vmatprep.mubr.bf16.mxu0 %v2175
    %2209 = vmatmul.mubr.bf16.gmra.mrb[0].mxu0 %v2174
    %v2210 = vpop.f32.mrb[0].mxu0
    %v2211 = vadd.f32 %v754, %v2210
    %v2212 = vpop.f32.mrb[0].mxu0
    %v2213 = vadd.f32 %v758, %v2212
    %v2214 = vpop.f32.mrb[0].mxu0
    %v2215 = vpop.f32.mrb[0].mxu0
    %2216 = vdwg.mxu0
    %2217 = vmatprep.subr.bf16.mxu0 %v966
    %2218 = vmatpush1.bf16.msra.mxu0 %v965
    %2219 = vmatprep.subr.bf16.mxu0 %v970
    %2220 = vmatpush1.bf16.msra.mxu0 %v969
    %2221 = vmatprep.subr.bf16.mxu0 %v974
    %2222 = vmatpush1.bf16.msra.mxu0 %v973
    %2223 = vmatprep.subr.bf16.mxu0 %v978
    %2224 = vmatpush1.bf16.msra.mxu0 %v977
    %2225 = vmatprep.subr.bf16.mxu0 %v982
    %2226 = vmatpush1.bf16.msra.mxu0 %v981
    %2227 = vmatprep.subr.bf16.mxu0 %v986
    %2228 = vmatpush1.bf16.msra.mxu0 %v985
    %2229 = vmatprep.subr.bf16.mxu0 %v990
    %2230 = vmatpush1.bf16.msra.mxu0 %v989
    %2231 = vmatprep.subr.bf16.mxu0 %v994
    %2232 = vmatpush1.bf16.msra.mxu0 %v993
    %2233 = vmatprep.subr.bf16.mxu0 %v998
    %2234 = vmatpush1.bf16.msra.mxu0 %v997
    %2235 = vmatprep.subr.bf16.mxu0 %v1002
    %2236 = vmatpush1.bf16.msra.mxu0 %v1001
    %2237 = vmatprep.subr.bf16.mxu0 %v1006
    %2238 = vmatpush1.bf16.msra.mxu0 %v1005
    %2239 = vmatprep.subr.bf16.mxu0 %v1010
    %2240 = vmatpush1.bf16.msra.mxu0 %v1009
    %2241 = vmatprep.subr.bf16.mxu0 %v1014
    %2242 = vmatpush1.bf16.msra.mxu0 %v1013
    %2243 = vmatprep.subr.bf16.mxu0 %v1018
    %2244 = vmatpush1.bf16.msra.mxu0 %v1017
    %2245 = vmatprep.subr.bf16.mxu0 %v1022
    %2246 = vmatpush1.bf16.msra.mxu0 %v1021
    %2247 = vmatprep.subr.bf16.mxu0 %v1026
    %2248 = vmatpush1.bf16.msra.mxu0 %v1025
    %2249 = vmatprep.mubr.bf16.mxu0 %v2175
    %2250 = vmatmul.mubr.bf16.gmra.mrb[0].mxu0 %v2174
    %v2251 = vpop.f32.mrb[0].mxu0
    %v2252 = vadd.f32 %v762, %v2251
    %v2253 = vpop.f32.mrb[0].mxu0
    %v2254 = vadd.f32 %v766, %v2253
    %v2255 = vpop.f32.mrb[0].mxu0
    %v2256 = vpop.f32.mrb[0].mxu0
    %2257 = vdwg.mxu0
    %v2258 = vmul.f32 %v2211, 0.5
    %v2259 = vmul.f32 %v2213, 0.5
    %v2260 = vmul.f32 %v2252, 0.5
    %v2261 = vtanh.pop %v2258
    %v2262 = vtanh.pop %v2259
    %v2263 = vtanh.pop %v2260
    %v2264 = vmul.f32 %v2261, 0.5
    %v2265 = vmul.f32 %v2262, 0.5
    %v2266 = vmul.f32 %v2263, 0.5
    %v2267 = vadd.f32 %v2264, 0.5
    %v2268 = vadd.f32 %v2265, 0.5
    %v2269 = vadd.f32 %v2266, 0.5
    %v2270 = vtanh.pop %v2254
    %v2271 = vmul.f32 %v2268, %v2056
    %v2272 = vmul.f32 %v2267, %v2270
    %v2273 = vadd.f32 %v2271, %v2272
    %v2274 = vtanh.pop %v2273
    %v2275 = vmul.f32 %v2269, %v2274
    %s2276 = smul.u32 6, 4
    %s2277 = smul.addr %s2276, 8
    %s2278 = scalar_lea.vmem [#allocation2], %s2277
    %v2279 = vld [vmem:[%s2278] sm:$0xff]
    %v2280 = vld [vmem:[%s2278 + $0x8] sm:$0xff]
    %v2281 = vld [vmem:[%s2278 + $0x10] sm:$0xff]
    %v2282 = vld [vmem:[%s2278 + $0x18] sm:$0xff]
    %v2283 = vpack.c.bf16 %v2170, %v2170
    %2284 = vmatprep.subr.bf16.mxu0 %v515
    %2285 = vmatpush1.bf16.msra.mxu0 %v514
    %2286 = vmatprep.subr.bf16.mxu0 %v519
    %2287 = vmatpush1.bf16.msra.mxu0 %v518
    %2288 = vmatprep.subr.bf16.mxu0 %v523
    %2289 = vmatpush1.bf16.msra.mxu0 %v522
    %2290 = vmatprep.subr.bf16.mxu0 %v527
    %2291 = vmatpush1.bf16.msra.mxu0 %v526
    %2292 = vmatprep.subr.bf16.mxu0 %v531
    %2293 = vmatpush1.bf16.msra.mxu0 %v530
    %2294 = vmatprep.subr.bf16.mxu0 %v535
    %2295 = vmatpush1.bf16.msra.mxu0 %v534
    %2296 = vmatprep.subr.bf16.mxu0 %v539
    %2297 = vmatpush1.bf16.msra.mxu0 %v538
    %2298 = vmatprep.subr.bf16.mxu0 %v543
    %2299 = vmatpush1.bf16.msra.mxu0 %v542
    %2300 = vmatprep.subr.bf16.mxu0 0
    %2301 = vmatpush1.bf16.msra.mxu0 0
    %2302 = vmatprep.subr.bf16.mxu0 0
    %2303 = vmatpush1.bf16.msra.mxu0 0
    %2304 = vmatprep.subr.bf16.mxu0 0
    %2305 = vmatpush1.bf16.msra.mxu0 0
    %2306 = vmatprep.subr.bf16.mxu0 0
    %2307 = vmatpush1.bf16.msra.mxu0 0
    %2308 = vmatprep.subr.bf16.mxu0 0
    %2309 = vmatpush1.bf16.msra.mxu0 0
    %2310 = vmatprep.subr.bf16.mxu0 0
    %2311 = vmatpush1.bf16.msra.mxu0 0
    %2312 = vmatprep.subr.bf16.mxu0 0
    %2313 = vmatpush1.bf16.msra.mxu0 0
    %2314 = vmatprep.subr.bf16.mxu0 0
    %2315 = vmatpush1.bf16.msra.mxu0 0
    %2316 = vmatprep.mubr.bf16.mxu0 0
    %2317 = vmatmul.mubr.bf16.gmra.mrb[0].mxu0 %v2283
    %v2318 = vpop.f32.mrb[0].mxu0
    %v2319 = vadd.f32 0.0, %v2318
    %v2320 = vpop.f32.mrb[0].mxu0
    %v2321 = vadd.f32 0.0, %v2320
    %v2322 = vpop.f32.mrb[0].mxu0
    %v2323 = vpop.f32.mrb[0].mxu0
    %2324 = vdwg.mxu0
    %2325 = vmatprep.subr.bf16.mxu0 %v517
    %2326 = vmatpush1.bf16.msra.mxu0 %v516
    %2327 = vmatprep.subr.bf16.mxu0 %v521
    %2328 = vmatpush1.bf16.msra.mxu0 %v520
    %2329 = vmatprep.subr.bf16.mxu0 %v525
    %2330 = vmatpush1.bf16.msra.mxu0 %v524
    %2331 = vmatprep.subr.bf16.mxu0 %v529
    %2332 = vmatpush1.bf16.msra.mxu0 %v528
    %2333 = vmatprep.subr.bf16.mxu0 %v533
    %2334 = vmatpush1.bf16.msra.mxu0 %v532
    %2335 = vmatprep.subr.bf16.mxu0 %v537
    %2336 = vmatpush1.bf16.msra.mxu0 %v536
    %2337 = vmatprep.subr.bf16.mxu0 %v541
    %2338 = vmatpush1.bf16.msra.mxu0 %v540
    %2339 = vmatprep.subr.bf16.mxu0 %v545
    %2340 = vmatpush1.bf16.msra.mxu0 %v544
    %2341 = vmatprep.subr.bf16.mxu0 0
    %2342 = vmatpush1.bf16.msra.mxu0 0
    %2343 = vmatprep.subr.bf16.mxu0 0
    %2344 = vmatpush1.bf16.msra.mxu0 0
    %2345 = vmatprep.subr.bf16.mxu0 0
    %2346 = vmatpush1.bf16.msra.mxu0 0
    %2347 = vmatprep.subr.bf16.mxu0 0
    %2348 = vmatpush1.bf16.msra.mxu0 0
    %2349 = vmatprep.subr.bf16.mxu0 0
    %2350 = vmatpush1.bf16.msra.mxu0 0
    %2351 = vmatprep.subr.bf16.mxu0 0
    %2352 = vmatpush1.bf16.msra.mxu0 0
    %2353 = vmatprep.subr.bf16.mxu0 0
    %2354 = vmatpush1.bf16.msra.mxu0 0
    %2355 = vmatprep.subr.bf16.mxu0 0
    %2356 = vmatpush1.bf16.msra.mxu0 0
    %2357 = vmatprep.mubr.bf16.mxu0 0
    %2358 = vmatmul.mubr.bf16.gmra.mrb[0].mxu0 %v2283
    %v2359 = vpop.f32.mrb[0].mxu0
    %v2360 = vadd.f32 0.0, %v2359
    %v2361 = vpop.f32.mrb[0].mxu0
    %v2362 = vadd.f32 0.0, %v2361
    %v2363 = vpop.f32.mrb[0].mxu0
    %v2364 = vpop.f32.mrb[0].mxu0
    %2365 = vdwg.mxu0
    %v2366 = vadd.f32 %v2279, %v2319
    %v2367 = vadd.f32 %v2280, %v2321
    %v2368 = vadd.f32 %v2281, %v2360
    %v2369 = vadd.f32 %v2282, %v2362
    %v2370 = vmul.f32 %v2366, 0.5
    %v2371 = vmul.f32 %v2367, 0.5
    %v2372 = vmul.f32 %v2368, 0.5
    %v2373 = vtanh.pop %v2370
    %v2374 = vtanh.pop %v2371
    %v2375 = vtanh.pop %v2372
    %v2376 = vmul.f32 %v2373, 0.5
    %v2377 = vmul.f32 %v2374, 0.5
    %v2378 = vmul.f32 %v2375, 0.5
    %v2379 = vadd.f32 %v2376, 0.5
    %v2380 = vadd.f32 %v2377, 0.5
    %v2381 = vadd.f32 %v2378, 0.5
    %v2382 = vtanh.pop %v2369
    %v2383 = vmul.f32 %v2380, %v2168
    %v2384 = vmul.f32 %v2379, %v2382
    %v2385 = vadd.f32 %v2383, %v2384
    %v2386 = vtanh.pop %v2385
    %v2387 = vmul.f32 %v2381, %v2386
    %s2388 = scalar_lea.vmem [#allocation3], 48
    %v2389 = vld [vmem:[%s2388] sm:$0xff]
    %v2390 = vmul.f32 %v2387, %v2389
    %v2391 = vpack.c.bf16 %v2390, %v2390
    %v2392 = vpack.c.bf16 %v2275, %v2275
    %2393 = vmatprep.subr.bf16.mxu0 %v964
    %2394 = vmatpush1.bf16.msra.mxu0 %v963
    %2395 = vmatprep.subr.bf16.mxu0 %v968
    %2396 = vmatpush1.bf16.msra.mxu0 %v967
    %2397 = vmatprep.subr.bf16.mxu0 %v972
    %2398 = vmatpush1.bf16.msra.mxu0 %v971
    %2399 = vmatprep.subr.bf16.mxu0 %v976
    %2400 = vmatpush1.bf16.msra.mxu0 %v975
    %2401 = vmatprep.subr.bf16.mxu0 %v980
    %2402 = vmatpush1.bf16.msra.mxu0 %v979
    %2403 = vmatprep.subr.bf16.mxu0 %v984
    %2404 = vmatpush1.bf16.msra.mxu0 %v983
    %2405 = vmatprep.subr.bf16.mxu0 %v988
    %2406 = vmatpush1.bf16.msra.mxu0 %v987
    %2407 = vmatprep.subr.bf16.mxu0 %v992
    %2408 = vmatpush1.bf16.msra.mxu0 %v991
    %2409 = vmatprep.subr.bf16.mxu0 %v996
    %2410 = vmatpush1.bf16.msra.mxu0 %v995
    %2411 = vmatprep.subr.bf16.mxu0 %v1000
    %2412 = vmatpush1.bf16.msra.mxu0 %v999
    %2413 = vmatprep.subr.bf16.mxu0 %v1004
    %2414 = vmatpush1.bf16.msra.mxu0 %v1003
    %2415 = vmatprep.subr.bf16.mxu0 %v1008
    %2416 = vmatpush1.bf16.msra.mxu0 %v1007
    %2417 = vmatprep.subr.bf16.mxu0 %v1012
    %2418 = vmatpush1.bf16.msra.mxu0 %v1011
    %2419 = vmatprep.subr.bf16.mxu0 %v1016
    %2420 = vmatpush1.bf16.msra.mxu0 %v1015
    %2421 = vmatprep.subr.bf16.mxu0 %v1020
    %2422 = vmatpush1.bf16.msra.mxu0 %v1019
    %2423 = vmatprep.subr.bf16.mxu0 %v1024
    %2424 = vmatpush1.bf16.msra.mxu0 %v1023
    %2425 = vmatprep.mubr.bf16.mxu0 %v2392
    %2426 = vmatmul.mubr.bf16.gmra.mrb[0].mxu0 %v2391
    %v2427 = vpop.f32.mrb[0].mxu0
    %v2428 = vadd.f32 %v754, %v2427
    %v2429 = vpop.f32.mrb[0].mxu0
    %v2430 = vadd.f32 %v758, %v2429
    %v2431 = vpop.f32.mrb[0].mxu0
    %v2432 = vpop.f32.mrb[0].mxu0
    %2433 = vdwg.mxu0
    %2434 = vmatprep.subr.bf16.mxu0 %v966
    %2435 = vmatpush1.bf16.msra.mxu0 %v965
    %2436 = vmatprep.subr.bf16.mxu0 %v970
    %2437 = vmatpush1.bf16.msra.mxu0 %v969
    %2438 = vmatprep.subr.bf16.mxu0 %v974
    %2439 = vmatpush1.bf16.msra.mxu0 %v973
    %2440 = vmatprep.subr.bf16.mxu0 %v978
    %2441 = vmatpush1.bf16.msra.mxu0 %v977
    %2442 = vmatprep.subr.bf16.mxu0 %v982
    %2443 = vmatpush1.bf16.msra.mxu0 %v981
    %2444 = vmatprep.subr.bf16.mxu0 %v986
    %2445 = vmatpush1.bf16.msra.mxu0 %v985
    %2446 = vmatprep.subr.bf16.mxu0 %v990
    %2447 = vmatpush1.bf16.msra.mxu0 %v989
    %2448 = vmatprep.subr.bf16.mxu0 %v994
    %2449 = vmatpush1.bf16.msra.mxu0 %v993
    %2450 = vmatprep.subr.bf16.mxu0 %v998
    %2451 = vmatpush1.bf16.msra.mxu0 %v997
    %2452 = vmatprep.subr.bf16.mxu0 %v1002
    %2453 = vmatpush1.bf16.msra.mxu0 %v1001
    %2454 = vmatprep.subr.bf16.mxu0 %v1006
    %2455 = vmatpush1.bf16.msra.mxu0 %v1005
    %2456 = vmatprep.subr.bf16.mxu0 %v1010
    %2457 = vmatpush1.bf16.msra.mxu0 %v1009
    %2458 = vmatprep.subr.bf16.mxu0 %v1014
    %2459 = vmatpush1.bf16.msra.mxu0 %v1013
    %2460 = vmatprep.subr.bf16.mxu0 %v1018
    %2461 = vmatpush1.bf16.msra.mxu0 %v1017
    %2462 = vmatprep.subr.bf16.mxu0 %v1022
    %2463 = vmatpush1.bf16.msra.mxu0 %v1021
    %2464 = vmatprep.subr.bf16.mxu0 %v1026
    %2465 = vmatpush1.bf16.msra.mxu0 %v1025
    %2466 = vmatprep.mubr.bf16.mxu0 %v2392
    %2467 = vmatmul.mubr.bf16.gmra.mrb[0].mxu0 %v2391
    %v2468 = vpop.f32.mrb[0].mxu0
    %v2469 = vadd.f32 %v762, %v2468
    %v2470 = vpop.f32.mrb[0].mxu0
    %v2471 = vadd.f32 %v766, %v2470
    %v2472 = vpop.f32.mrb[0].mxu0
    %v2473 = vpop.f32.mrb[0].mxu0
    %2474 = vdwg.mxu0
    %v2475 = vmul.f32 %v2428, 0.5
    %v2476 = vmul.f32 %v2430, 0.5
    %v2477 = vmul.f32 %v2469, 0.5
    %v2478 = vtanh.pop %v2475
    %v2479 = vtanh.pop %v2476
    %v2480 = vtanh.pop %v2477
    %v2481 = vmul.f32 %v2478, 0.5
    %v2482 = vmul.f32 %v2479, 0.5
    %v2483 = vmul.f32 %v2480, 0.5
    %v2484 = vadd.f32 %v2481, 0.5
    %v2485 = vadd.f32 %v2482, 0.5
    %v2486 = vadd.f32 %v2483, 0.5
    %v2487 = vtanh.pop %v2471
    %v2488 = vmul.f32 %v2485, %v2273
    %v2489 = vmul.f32 %v2484, %v2487
    %v2490 = vadd.f32 %v2488, %v2489
    %v2491 = vtanh.pop %v2490
    %v2492 = vmul.f32 %v2486, %v2491
    %s2493 = smul.u32 7, 4
    %s2494 = smul.addr %s2493, 8
    %s2495 = scalar_lea.vmem [#allocation2], %s2494
    %v2496 = vld [vmem:[%s2495] sm:$0xff]
    %v2497 = vld [vmem:[%s2495 + $0x8] sm:$0xff]
    %v2498 = vld [vmem:[%s2495 + $0x10] sm:$0xff]
    %v2499 = vld [vmem:[%s2495 + $0x18] sm:$0xff]
    %v2500 = vpack.c.bf16 %v2387, %v2387
    %2501 = vmatprep.subr.bf16.mxu0 %v515
    %2502 = vmatpush1.bf16.msra.mxu0 %v514
    %2503 = vmatprep.subr.bf16.mxu0 %v519
    %2504 = vmatpush1.bf16.msra.mxu0 %v518
    %2505 = vmatprep.subr.bf16.mxu0 %v523
    %2506 = vmatpush1.bf16.msra.mxu0 %v522
    %2507 = vmatprep.subr.bf16.mxu0 %v527
    %2508 = vmatpush1.bf16.msra.mxu0 %v526
    %2509 = vmatprep.subr.bf16.mxu0 %v531
    %2510 = vmatpush1.bf16.msra.mxu0 %v530
    %2511 = vmatprep.subr.bf16.mxu0 %v535
    %2512 = vmatpush1.bf16.msra.mxu0 %v534
    %2513 = vmatprep.subr.bf16.mxu0 %v539
    %2514 = vmatpush1.bf16.msra.mxu0 %v538
    %2515 = vmatprep.subr.bf16.mxu0 %v543
    %2516 = vmatpush1.bf16.msra.mxu0 %v542
    %2517 = vmatprep.subr.bf16.mxu0 0
    %2518 = vmatpush1.bf16.msra.mxu0 0
    %2519 = vmatprep.subr.bf16.mxu0 0
    %2520 = vmatpush1.bf16.msra.mxu0 0
    %2521 = vmatprep.subr.bf16.mxu0 0
    %2522 = vmatpush1.bf16.msra.mxu0 0
    %2523 = vmatprep.subr.bf16.mxu0 0
    %2524 = vmatpush1.bf16.msra.mxu0 0
    %2525 = vmatprep.subr.bf16.mxu0 0
    %2526 = vmatpush1.bf16.msra.mxu0 0
    %2527 = vmatprep.subr.bf16.mxu0 0
    %2528 = vmatpush1.bf16.msra.mxu0 0
    %2529 = vmatprep.subr.bf16.mxu0 0
    %2530 = vmatpush1.bf16.msra.mxu0 0
    %2531 = vmatprep.subr.bf16.mxu0 0
    %2532 = vmatpush1.bf16.msra.mxu0 0
    %2533 = vmatprep.mubr.bf16.mxu0 0
    %2534 = vmatmul.mubr.bf16.gmra.mrb[0].mxu0 %v2500
    %v2535 = vpop.f32.mrb[0].mxu0
    %v2536 = vadd.f32 0.0, %v2535
    %v2537 = vpop.f32.mrb[0].mxu0
    %v2538 = vadd.f32 0.0, %v2537
    %v2539 = vpop.f32.mrb[0].mxu0
    %v2540 = vpop.f32.mrb[0].mxu0
    %2541 = vdwg.mxu0
    %2542 = vmatprep.subr.bf16.mxu0 %v517
    %2543 = vmatpush1.bf16.msra.mxu0 %v516
    %2544 = vmatprep.subr.bf16.mxu0 %v521
    %2545 = vmatpush1.bf16.msra.mxu0 %v520
    %2546 = vmatprep.subr.bf16.mxu0 %v525
    %2547 = vmatpush1.bf16.msra.mxu0 %v524
    %2548 = vmatprep.subr.bf16.mxu0 %v529
    %2549 = vmatpush1.bf16.msra.mxu0 %v528
    %2550 = vmatprep.subr.bf16.mxu0 %v533
    %2551 = vmatpush1.bf16.msra.mxu0 %v532
    %2552 = vmatprep.subr.bf16.mxu0 %v537
    %2553 = vmatpush1.bf16.msra.mxu0 %v536
    %2554 = vmatprep.subr.bf16.mxu0 %v541
    %2555 = vmatpush1.bf16.msra.mxu0 %v540
    %2556 = vmatprep.subr.bf16.mxu0 %v545
    %2557 = vmatpush1.bf16.msra.mxu0 %v544
    %2558 = vmatprep.subr.bf16.mxu0 0
    %2559 = vmatpush1.bf16.msra.mxu0 0
    %2560 = vmatprep.subr.bf16.mxu0 0
    %2561 = vmatpush1.bf16.msra.mxu0 0
    %2562 = vmatprep.subr.bf16.mxu0 0
    %2563 = vmatpush1.bf16.msra.mxu0 0
    %2564 = vmatprep.subr.bf16.mxu0 0
    %2565 = vmatpush1.bf16.msra.mxu0 0
    %2566 = vmatprep.subr.bf16.mxu0 0
    %2567 = vmatpush1.bf16.msra.mxu0 0
    %2568 = vmatprep.subr.bf16.mxu0 0
    %2569 = vmatpush1.bf16.msra.mxu0 0
    %2570 = vmatprep.subr.bf16.mxu0 0
    %2571 = vmatpush1.bf16.msra.mxu0 0
    %2572 = vmatprep.subr.bf16.mxu0 0
    %2573 = vmatpush1.bf16.msra.mxu0 0
    %2574 = vmatprep.mubr.bf16.mxu0 0
    %2575 = vmatmul.mubr.bf16.gmra.mrb[0].mxu0 %v2500
    %v2576 = vpop.f32.mrb[0].mxu0
    %v2577 = vadd.f32 0.0, %v2576
    %v2578 = vpop.f32.mrb[0].mxu0
    %v2579 = vadd.f32 0.0, %v2578
    %v2580 = vpop.f32.mrb[0].mxu0
    %v2581 = vpop.f32.mrb[0].mxu0
    %2582 = vdwg.mxu0
    %v2583 = vadd.f32 %v2496, %v2536
    %v2584 = vadd.f32 %v2497, %v2538
    %v2585 = vadd.f32 %v2498, %v2577
    %v2586 = vadd.f32 %v2499, %v2579
    %v2587 = vmul.f32 %v2583, 0.5
    %v2588 = vmul.f32 %v2584, 0.5
    %v2589 = vmul.f32 %v2585, 0.5
    %v2590 = vtanh.pop %v2587
    %v2591 = vtanh.pop %v2588
    %v2592 = vtanh.pop %v2589
    %v2593 = vmul.f32 %v2590, 0.5
    %v2594 = vmul.f32 %v2591, 0.5
    %v2595 = vmul.f32 %v2592, 0.5
    %v2596 = vadd.f32 %v2593, 0.5
    %v2597 = vadd.f32 %v2594, 0.5
    %v2598 = vadd.f32 %v2595, 0.5
    %v2599 = vtanh.pop %v2586
    %v2600 = vmul.f32 %v2597, %v2385
    %v2601 = vmul.f32 %v2596, %v2599
    %v2602 = vadd.f32 %v2600, %v2601
    %v2603 = vtanh.pop %v2602
    %v2604 = vmul.f32 %v2598, %v2603
    %s2605 = scalar_lea.vmem [#allocation3], 56
    %v2606 = vld [vmem:[%s2605] sm:$0xff]
    %v2607 = vmul.f32 %v2604, %v2606
    %v2608 = vpack.c.bf16 %v2607, %v2607
    %v2609 = vpack.c.bf16 %v2492, %v2492
    %2610 = vmatprep.subr.bf16.mxu0 %v964
    %2611 = vmatpush1.bf16.msra.mxu0 %v963
    %2612 = vmatprep.subr.bf16.mxu0 %v968
    %2613 = vmatpush1.bf16.msra.mxu0 %v967
    %2614 = vmatprep.subr.bf16.mxu0 %v972
    %2615 = vmatpush1.bf16.msra.mxu0 %v971
    %2616 = vmatprep.subr.bf16.mxu0 %v976
    %2617 = vmatpush1.bf16.msra.mxu0 %v975
    %2618 = vmatprep.subr.bf16.mxu0 %v980
    %2619 = vmatpush1.bf16.msra.mxu0 %v979
    %2620 = vmatprep.subr.bf16.mxu0 %v984
    %2621 = vmatpush1.bf16.msra.mxu0 %v983
    %2622 = vmatprep.subr.bf16.mxu0 %v988
    %2623 = vmatpush1.bf16.msra.mxu0 %v987
    %2624 = vmatprep.subr.bf16.mxu0 %v992
    %2625 = vmatpush1.bf16.msra.mxu0 %v991
    %2626 = vmatprep.subr.bf16.mxu0 %v996
    %2627 = vmatpush1.bf16.msra.mxu0 %v995
    %2628 = vmatprep.subr.bf16.mxu0 %v1000
    %2629 = vmatpush1.bf16.msra.mxu0 %v999
    %2630 = vmatprep.subr.bf16.mxu0 %v1004
    %2631 = vmatpush1.bf16.msra.mxu0 %v1003
    %2632 = vmatprep.subr.bf16.mxu0 %v1008
    %2633 = vmatpush1.bf16.msra.mxu0 %v1007
    %2634 = vmatprep.subr.bf16.mxu0 %v1012
    %2635 = vmatpush1.bf16.msra.mxu0 %v1011
    %2636 = vmatprep.subr.bf16.mxu0 %v1016
    %2637 = vmatpush1.bf16.msra.mxu0 %v1015
    %2638 = vmatprep.subr.bf16.mxu0 %v1020
    %2639 = vmatpush1.bf16.msra.mxu0 %v1019
    %2640 = vmatprep.subr.bf16.mxu0 %v1024
    %2641 = vmatpush1.bf16.msra.mxu0 %v1023
    %2642 = vmatprep.mubr.bf16.mxu0 %v2609
    %2643 = vmatmul.mubr.bf16.gmra.mrb[0].mxu0 %v2608
    %v2644 = vpop.f32.mrb[0].mxu0
    %v2645 = vadd.f32 %v754, %v2644
    %v2646 = vpop.f32.mrb[0].mxu0
    %v2647 = vadd.f32 %v758, %v2646
    %v2648 = vpop.f32.mrb[0].mxu0
    %v2649 = vpop.f32.mrb[0].mxu0
    %2650 = vdwg.mxu0
    %2651 = vmatprep.subr.bf16.mxu0 %v966
    %2652 = vmatpush1.bf16.msra.mxu0 %v965
    %2653 = vmatprep.subr.bf16.mxu0 %v970
    %2654 = vmatpush1.bf16.msra.mxu0 %v969
    %2655 = vmatprep.subr.bf16.mxu0 %v974
    %2656 = vmatpush1.bf16.msra.mxu0 %v973
    %2657 = vmatprep.subr.bf16.mxu0 %v978
    %2658 = vmatpush1.bf16.msra.mxu0 %v977
    %2659 = vmatprep.subr.bf16.mxu0 %v982
    %2660 = vmatpush1.bf16.msra.mxu0 %v981
    %2661 = vmatprep.subr.bf16.mxu0 %v986
    %2662 = vmatpush1.bf16.msra.mxu0 %v985
    %2663 = vmatprep.subr.bf16.mxu0 %v990
    %2664 = vmatpush1.bf16.msra.mxu0 %v989
    %2665 = vmatprep.subr.bf16.mxu0 %v994
    %2666 = vmatpush1.bf16.msra.mxu0 %v993
    %2667 = vmatprep.subr.bf16.mxu0 %v998
    %2668 = vmatpush1.bf16.msra.mxu0 %v997
    %2669 = vmatprep.subr.bf16.mxu0 %v1002
    %2670 = vmatpush1.bf16.msra.mxu0 %v1001
    %2671 = vmatprep.subr.bf16.mxu0 %v1006
    %2672 = vmatpush1.bf16.msra.mxu0 %v1005
    %2673 = vmatprep.subr.bf16.mxu0 %v1010
    %2674 = vmatpush1.bf16.msra.mxu0 %v1009
    %2675 = vmatprep.subr.bf16.mxu0 %v1014
    %2676 = vmatpush1.bf16.msra.mxu0 %v1013
    %2677 = vmatprep.subr.bf16.mxu0 %v1018
    %2678 = vmatpush1.bf16.msra.mxu0 %v1017
    %2679 = vmatprep.subr.bf16.mxu0 %v1022
    %2680 = vmatpush1.bf16.msra.mxu0 %v1021
    %2681 = vmatprep.subr.bf16.mxu0 %v1026
    %2682 = vmatpush1.bf16.msra.mxu0 %v1025
    %2683 = vmatprep.mubr.bf16.mxu0 %v2609
    %2684 = vmatmul.mubr.bf16.gmra.mrb[0].mxu0 %v2608
    %v2685 = vpop.f32.mrb[0].mxu0
    %v2686 = vadd.f32 %v762, %v2685
    %v2687 = vpop.f32.mrb[0].mxu0
    %v2688 = vadd.f32 %v766, %v2687
    %v2689 = vpop.f32.mrb[0].mxu0
    %v2690 = vpop.f32.mrb[0].mxu0
    %2691 = vdwg.mxu0
    %v2692 = vmul.f32 %v2645, 0.5
    %v2693 = vmul.f32 %v2647, 0.5
    %v2694 = vmul.f32 %v2686, 0.5
    %v2695 = vtanh.pop %v2692
    %v2696 = vtanh.pop %v2693
    %v2697 = vtanh.pop %v2694
    %v2698 = vmul.f32 %v2695, 0.5
    %v2699 = vmul.f32 %v2696, 0.5
    %v2700 = vmul.f32 %v2697, 0.5
    %v2701 = vadd.f32 %v2698, 0.5
    %v2702 = vadd.f32 %v2699, 0.5
    %v2703 = vadd.f32 %v2700, 0.5
    %v2704 = vtanh.pop %v2688
    %v2705 = vmul.f32 %v2702, %v2490
    %v2706 = vmul.f32 %v2701, %v2704
    %v2707 = vadd.f32 %v2705, %v2706
    %v2708 = vtanh.pop %v2707
    %v2709 = vmul.f32 %v2703, %v2708
    %v2710 = vpack.c.bf16 %v2709, %v2709
    %v2711 = vld [vmem:[%s7] sm:$0xf]
    %v2712 = vld [vmem:[%s7 + $0x4] sm:$0xf]
    %v2713 = vld [vmem:[%s7 + $0x8] sm:$0xf]
    %v2714 = vld [vmem:[%s7 + $0xc] sm:$0xf]
    %v2715 = vld [vmem:[%s7 + $0x10] sm:$0xf]
    %v2716 = vld [vmem:[%s7 + $0x14] sm:$0xf]
    %v2717 = vld [vmem:[%s7 + $0x18] sm:$0xf]
    %v2718 = vld [vmem:[%s7 + $0x1c] sm:$0xf]
    %v2719 = vld [vmem:[%s7 + $0x20] sm:$0xf]
    %v2720 = vld [vmem:[%s7 + $0x24] sm:$0xf]
    %v2721 = vld [vmem:[%s7 + $0x28] sm:$0xf]
    %v2722 = vld [vmem:[%s7 + $0x2c] sm:$0xf]
    %v2723 = vld [vmem:[%s7 + $0x30] sm:$0xf]
    %v2724 = vld [vmem:[%s7 + $0x34] sm:$0xf]
    %v2725 = vld [vmem:[%s7 + $0x38] sm:$0xf]
    %v2726 = vld [vmem:[%s7 + $0x3c] sm:$0xf]
    %v2727 = vld [vmem:[#allocation5] sm:$0x1]
    %v2729 = vlaneseq
    %v2730 = vshrl.u32 %v2729, 7
    %v2731 = vsub.s32 0, %v2730
    %v2732 = vrot.slane %v2727, %v2731
    %v2750 = vunpack.c.l.b16 %v2711
    %v2751 = vunpack.c.l.b16 %v2712
    %v2752 = vunpack.c.l.b16 %v2713
    %v2753 = vunpack.c.l.b16 %v2714
    %v2754 = vunpack.c.l.b16 %v2715
    %v2755 = vunpack.c.l.b16 %v2716
    %v2756 = vunpack.c.l.b16 %v2717
    %v2757 = vunpack.c.l.b16 %v2718
    %v2758 = vunpack.c.l.b16 %v2719
    %v2759 = vunpack.c.l.b16 %v2720
    %v2760 = vunpack.c.l.b16 %v2721
    %v2761 = vunpack.c.l.b16 %v2722
    %v2762 = vunpack.c.l.b16 %v2723
    %v2763 = vunpack.c.l.b16 %v2724
    %v2764 = vunpack.c.l.b16 %v2725
    %v2765 = vunpack.c.l.b16 %v2726
    %v2766 = vpack.c.b16 %v2751, %v2750
    %v2767 = vpack.c.b16 %v2753, %v2752
    %v2768 = vpack.c.b16 %v2755, %v2754
    %v2769 = vpack.c.b16 %v2757, %v2756
    %v2770 = vpack.c.b16 %v2759, %v2758
    %v2771 = vpack.c.b16 %v2761, %v2760
    %v2772 = vpack.c.b16 %v2763, %v2762
    %v2773 = vpack.c.b16 %v2765, %v2764
    %2782 = vmatprep.subr.bf16.mxu0 0
    %2783 = vmatpush1.bf16.msra.mxu0 %v2766
    %2784 = vmatprep.subr.bf16.mxu0 0
    %2785 = vmatpush1.bf16.msra.mxu0 %v2767
    %2786 = vmatprep.subr.bf16.mxu0 0
    %2787 = vmatpush1.bf16.msra.mxu0 %v2768
    %2788 = vmatprep.subr.bf16.mxu0 0
    %2789 = vmatpush1.bf16.msra.mxu0 %v2769
    %2790 = vmatprep.subr.bf16.mxu0 0
    %2791 = vmatpush1.bf16.msra.mxu0 %v2770
    %2792 = vmatprep.subr.bf16.mxu0 0
    %2793 = vmatpush1.bf16.msra.mxu0 %v2771
    %2794 = vmatprep.subr.bf16.mxu0 0
    %2795 = vmatpush1.bf16.msra.mxu0 %v2772
    %2796 = vmatprep.subr.bf16.mxu0 0
    %2797 = vmatpush1.bf16.msra.mxu0 %v2773
    %2798 = vmatprep.subr.bf16.mxu0 0
    %2799 = vmatpush1.bf16.msra.mxu0 0
    %2800 = vmatprep.subr.bf16.mxu0 0
    %2801 = vmatpush1.bf16.msra.mxu0 0
    %2802 = vmatprep.subr.bf16.mxu0 0
    %2803 = vmatpush1.bf16.msra.mxu0 0
    %2804 = vmatprep.subr.bf16.mxu0 0
    %2805 = vmatpush1.bf16.msra.mxu0 0
    %2806 = vmatprep.subr.bf16.mxu0 0
    %2807 = vmatpush1.bf16.msra.mxu0 0
    %2808 = vmatprep.subr.bf16.mxu0 0
    %2809 = vmatpush1.bf16.msra.mxu0 0
    %2810 = vmatprep.subr.bf16.mxu0 0
    %2811 = vmatpush1.bf16.msra.mxu0 0
    %2812 = vmatprep.subr.bf16.mxu0 0
    %2813 = vmatpush1.bf16.msra.mxu0 0
    %2814 = vmatprep.mubr.bf16.mxu0 0
    %2815 = vmatmul.mubr.bf16.gmra.mrb[0].mxu0 %v2710
    %v2816 = vpop.f32.mrb[0].mxu0
    %v2817 = vadd.f32 %v2732, %v2816
    %v2818 = vpop.f32.mrb[0].mxu0
    %v2819 = vpop.f32.mrb[0].mxu0
    %v2820 = vpop.f32.mrb[0].mxu0
    %2821 = vdwg.mxu0
    %vm2822 = vcmask 7168
    %2823 = vst.msk [vmem:[%s9] sm:$0xff] %vm2822, %v2817
    // Predicated region
    $region46: #{lstm_model_forward.1} parent=1 // pred_check
      _
    $region47: #{lstm_model_forward.1} parent=1 // pred_check_branch
      %2825 = sbr.rel (0) target = $region49
    $region48: #{lstm_model_forward.1} parent=1 // pred_region
      _
    $region49: #{lstm_model_forward.1} parent=1 // pred_fallthru
      _
    // Predicated region
    $region50: #{lstm_model_forward.1} parent=1 // pred_check
      _
    $region51: #{lstm_model_forward.1} parent=1 // pred_check_branch
      %2827 = sbr.rel (0) target = $region53
    $region52: #{lstm_model_forward.1} parent=1 // pred_region
      _
    $region53: #{lstm_model_forward.1} parent=1 // pred_fallthru
      _
    %2828 = vsyncpa [#allocation7], 1
    %2829 = vsyncpa [#allocation9], 1

</llo_original>
